<compile_context>
chip_gen: v7x
topology: tpu7x:2x2x1
jax: 0.10.0
libtpu: 0.0.40
codegen_flags: <defaults>
</compile_context>

<pallas_src>
import functools

import jax
import jax.numpy as jnp
from jax import lax
from jax.experimental import pallas as pl
from jax.experimental.pallas import tpu as pltpu


IMAGENET_MEAN = jnp.array([0.485, 0.456, 0.406], jnp.float32)
IMAGENET_STD = jnp.array([0.229, 0.224, 0.225], jnp.float32)


def _round_up(x, m):
    return (x + m - 1) // m * m


# ----------------------------- Pallas kernels ------------------------------

def _l1_and_normalize_kernel(inp_ref, tgt_ref, mean_ref, istd_ref,
                             nin_ref, ntgt_ref, l1_ref):
    """Per-tile: accumulate sum|inp-tgt| and write ImageNet-normalized inputs/targets."""
    x = inp_ref[...]
    t = tgt_ref[...]
    mean = mean_ref[...]
    istd = istd_ref[...]

    nin_ref[...] = (((x + 1.0) * 0.5 - mean) * istd).astype(nin_ref.dtype)
    ntgt_ref[...] = (((t + 1.0) * 0.5 - mean) * istd).astype(ntgt_ref.dtype)

    part = jnp.sum(jnp.abs(x - t), keepdims=True)          # (1, 1)

    @pl.when(pl.program_id(0) == 0)
    def _():
        l1_ref[...] = jnp.zeros_like(l1_ref)

    l1_ref[...] += part


def _conv_mm_bias_relu_kernel(a_ref, w_ref, b_ref, o_ref):
    """Fused im2col-matmul + bias + ReLU epilogue (bf16 in, f32 MXU accumulate)."""
    acc = jnp.dot(a_ref[...], w_ref[...], preferred_element_type=jnp.float32)
    o_ref[...] = jnp.maximum(acc + b_ref[...], 0.0).astype(o_ref.dtype)


def _conv_mm_relu_featdist_kernel(af_ref, ar_ref, w_ref, b_ref, acc_ref, *, use_l1):
    """Final VGG layer for both streams + ReLU + perceptual distance reduction, fully fused.

    Feature maps never leave VMEM; only a (1,1) running sum is written.
    """
    w = w_ref[...]
    b = b_ref[...]
    f = jnp.maximum(jnp.dot(af_ref[...], w, preferred_element_type=jnp.float32) + b, 0.0)
    r = jnp.maximum(jnp.dot(ar_ref[...], w, preferred_element_type=jnp.float32) + b, 0.0)
    d = f - r
    if use_l1:
        part = jnp.sum(jnp.abs(d), keepdims=True)           # (1, 1)
    else:
        part = jnp.sum(d * d, keepdims=True)                 # (1, 1)

    @pl.when(pl.program_id(0) == 0)
    def _():
        acc_ref[...] = jnp.zeros_like(acc_ref)

    acc_ref[...] += part


# --------------------------- Pallas-call wrappers ---------------------------

def l1_and_normalize(inp_nhwc, tgt_nhwc, tm=256):
    """Returns (normalized_inputs bf16, normalized_targets bf16, sum|inp-tgt| f32)."""
    n, h, w, c = inp_nhwc.shape
    m = n * h * w
    tm = min(tm, _round_up(m, 8))
    mp = _round_up(m, tm)

    x = inp_nhwc.reshape(m, c)
    t = tgt_nhwc.reshape(m, c)
    if mp != m:  # zero rows contribute 0 to the L1 sum; normalized pad rows are sliced away.
        x = jnp.pad(x, ((0, mp - m), (0, 0)))
        t = jnp.pad(t, ((0, mp - m), (0, 0)))

    mean2 = IMAGENET_MEAN.reshape(1, c)
    istd2 = (1.0 / IMAGENET_STD).reshape(1, c)

    nin, ntgt, l1s = pl.pallas_call(
        _l1_and_normalize_kernel,
        out_shape=(jax.ShapeDtypeStruct((mp, c), jnp.bfloat16),
                   jax.ShapeDtypeStruct((mp, c), jnp.bfloat16),
                   jax.ShapeDtypeStruct((1, 1), jnp.float32)),
        grid=(mp // tm,),
        in_specs=[pl.BlockSpec((tm, c), lambda i: (i, 0)),
                  pl.BlockSpec((tm, c), lambda i: (i, 0)),
                  pl.BlockSpec((1, c), lambda i: (0, 0)),
                  pl.BlockSpec((1, c), lambda i: (0, 0))],
        out_specs=(pl.BlockSpec((tm, c), lambda i: (i, 0)),
                   pl.BlockSpec((tm, c), lambda i: (i, 0)),
                   pl.BlockSpec((1, 1), lambda i: (0, 0))),
        compiler_params=pltpu.CompilerParams(dimension_semantics=("arbitrary",)),
    )(x, t, mean2, istd2)

    nin = nin[:m].reshape(n, h, w, c)
    ntgt = ntgt[:m].reshape(n, h, w, c)
    return nin, ntgt, l1s[0, 0]


def _im2col_3x3_p1(x):
    # x: (N, H, W, C) -> (N*H*W, 9*C), column order (kh, kw, ci); stride 1, pad 1.
    n, h, w, c = x.shape
    xp = jnp.pad(x, ((0, 0), (1, 1), (1, 1), (0, 0)))
    cols = [xp[:, kh:kh + h, kw:kw + w, :] for kh in range(3) for kw in range(3)]
    patches = jnp.stack(cols, axis=3)                       # (N, H, W, 9, C)
    return patches.reshape(n * h * w, 9 * c)


def _weight_matrix(w):
    # PyTorch Conv2d layout (Cout, Cin, 3, 3) -> (9*Cin, Cout), row order (kh, kw, ci).
    cout, cin = w.shape[0], w.shape[1]
    return jnp.transpose(w, (2, 3, 1, 0)).reshape(9 * cin, cout).astype(jnp.bfloat16)


def conv3x3_bias_relu(x_nhwc, w, b, tm=512):
    """3x3 / stride1 / pad1 conv + bias + ReLU via tiled Pallas matmul (bf16 in, bf16 out)."""
    n, h, wd, cin = x_nhwc.shape
    cout = w.shape[0]

    a = _im2col_3x3_p1(x_nhwc.astype(jnp.bfloat16))
    m, k = a.shape
    tm = min(tm, _round_up(m, 8))
    mp = _round_up(m, tm)
    if mp != m:
        a = jnp.pad(a, ((0, mp - m), (0, 0)))

    wm = _weight_matrix(w)
    b2 = b.reshape(1, cout).astype(jnp.float32)

    y = pl.pallas_call(
        _conv_mm_bias_relu_kernel,
        out_shape=jax.ShapeDtypeStruct((mp, cout), jnp.bfloat16),
        grid=(mp // tm,),
        in_specs=[pl.BlockSpec((tm, k), lambda i: (i, 0)),
                  pl.BlockSpec((k, cout), lambda i: (0, 0)),
                  pl.BlockSpec((1, cout), lambda i: (0, 0))],
        out_specs=pl.BlockSpec((tm, cout), lambda i: (i, 0)),
        compiler_params=pltpu.CompilerParams(dimension_semantics=("parallel",)),
    )(a, wm, b2)

    return y[:m].reshape(n, h, wd, cout)


def conv3x3_relu_feature_distance(xf_nhwc, xr_nhwc, w, b, use_l1, tm=256):
    """Final conv+ReLU for fake & real streams fused with the mean-|diff| / mean-diff^2 reduction."""
    n, h, wd, cin = xf_nhwc.shape
    cout = w.shape[0]

    af = _im2col_3x3_p1(xf_nhwc.astype(jnp.bfloat16))
    ar = _im2col_3x3_p1(xr_nhwc.astype(jnp.bfloat16))
    m, k = af.shape
    tm = min(tm, _round_up(m, 8))
    mp = _round_up(m, tm)
    if mp != m:  # zero rows: relu(b) - relu(b) == 0, so padding contributes nothing.
        af = jnp.pad(af, ((0, mp - m), (0, 0)))
        ar = jnp.pad(ar, ((0, mp - m), (0, 0)))

    wm = _weight_matrix(w)
    b2 = b.reshape(1, cout).astype(jnp.float32)

    s = pl.pallas_call(
        functools.partial(_conv_mm_relu_featdist_kernel, use_l1=use_l1),
        out_shape=jax.ShapeDtypeStruct((1, 1), jnp.float32),
        grid=(mp // tm,),
        in_specs=[pl.BlockSpec((tm, k), lambda i: (i, 0)),
                  pl.BlockSpec((tm, k), lambda i: (i, 0)),
                  pl.BlockSpec((k, cout), lambda i: (0, 0)),
                  pl.BlockSpec((1, cout), lambda i: (0, 0))],
        out_specs=pl.BlockSpec((1, 1), lambda i: (0, 0)),
        compiler_params=pltpu.CompilerParams(dimension_semantics=("arbitrary",)),
    )(af, ar, wm, b2)

    return s[0, 0] / float(n * cout * h * wd)


# ------------------------------ module forward -------------------------------

def l1_plus_perceptual_forward(params, inputs, targets, *,
                               lambda_L1, lambda_perceptual, percep_is_l1):
    n = inputs.shape[0]

    x = jnp.transpose(inputs, (0, 2, 3, 1)).astype(jnp.float32)   # NCHW -> NHWC
    t = jnp.transpose(targets, (0, 2, 3, 1)).astype(jnp.float32)

    # Fused: L1 sum + ImageNet normalization of both streams (one HBM pass each).
    nin, ntgt, l1_sum = l1_and_normalize(x, t)
    loss_l1 = (l1_sum / float(inputs.size)) * lambda_L1

    # VGG layer 1 (conv+ReLU), fake & real batched through one launch.
    both = jnp.concatenate([nin, ntgt], axis=0)                   # (2N, H, W, 3)
    feat1 = conv3x3_bias_relu(both, params['w1'], params['b1'])   # (2N, H, W, 64)

    # VGG layer 2 (conv+ReLU) + perceptual distance, fully fused (no feature writeback).
    perc_mean = conv3x3_relu_feature_distance(
        feat1[:n], feat1[n:], params['w2'], params['b2'], use_l1=(percep_is_l1 == 1))
    loss_perceptual = perc_mean * lambda_perceptual

    loss = loss_l1 + loss_perceptual
    return loss, loss_l1, loss_perceptual


class L1PlusPerceptualLoss:
    """JAX/Pallas port of SelectionGAN's L1_plus_perceptualLoss (perceptual_layers=3)."""

    def __init__(self, lambda_L1, lambda_perceptual, perceptual_layers, gpu_ids,
                 percep_is_l1, key=None):
        assert perceptual_layers == 3, "only vgg19.features[0:4] (two conv+ReLU) is implemented"
        del gpu_ids  # DataParallel placement has no single-device equivalent.
        self.lambda_L1 = float(lambda_L1)
        self.lambda_perceptual = float(lambda_perceptual)
        self.percep_is_l1 = int(percep_is_l1)

        key = jax.random.PRNGKey(0) if key is None else key
        k1, k2, k3, k4 = jax.random.split(key, 4)
        self.params = {
            'w1': jnp.sqrt(2.0 / (3 * 9)) * jax.random.normal(k1, (64, 3, 3, 3), jnp.float32),
            'b1': 0.01 * jax.random.normal(k2, (64,), jnp.float32),
            'w2': jnp.sqrt(2.0 / (64 * 9)) * jax.random.normal(k3, (64, 64, 3, 3), jnp.float32),
            'b2': 0.01 * jax.random.normal(k4, (64,), jnp.float32),
        }
        self._fwd = jax.jit(functools.partial(
            l1_plus_perceptual_forward,
            lambda_L1=self.lambda_L1,
            lambda_perceptual=self.lambda_perceptual,
            percep_is_l1=self.percep_is_l1))

    def __call__(self, inputs, targets):
        if self.lambda_L1 == 0 and self.lambda_perceptual == 0:
            z = jnp.zeros((1,), jnp.float32)
            return z, z, z
        return self._fwd(self.params, inputs, targets)


# ------------------------------ pure-JAX reference ---------------------------

def _reference(params, inputs, targets, lambda_L1, lambda_perceptual, percep_is_l1):
    l1 = jnp.mean(jnp.abs(inputs - targets)) * lambda_L1
    mean = IMAGENET_MEAN.reshape(1, 3, 1, 1)
    std = IMAGENET_STD.reshape(1, 3, 1, 1)

    def norm(x):
        return ((x + 1.0) / 2.0 - mean) / std

    def vgg(x):
        y = lax.conv_general_dilated(x, params['w1'], (1, 1), ((1, 1), (1, 1)),
                                     dimension_numbers=('NCHW', 'OIHW', 'NCHW'))
        y = jax.nn.relu(y + params['b1'].reshape(1, -1, 1, 1))
        y = lax.conv_general_dilated(y, params['w2'], (1, 1), ((1, 1), (1, 1)),
                                     dimension_numbers=('NCHW', 'OIHW', 'NCHW'))
        return jax.nn.relu(y + params['b2'].reshape(1, -1, 1, 1))

    ff, fr = vgg(norm(inputs)), vgg(norm(targets))
    d = ff - fr
    lp = (jnp.mean(jnp.abs(d)) if percep_is_l1 == 1 else jnp.mean(d * d)) * lambda_perceptual
    return l1 + lp, l1, lp


# ----------------------------------- main ------------------------------------

if __name__ == "__main__":
    key = jax.random.PRNGKey(0)
    kp, ki, kt = jax.random.split(key, 3)

    N, C, H, W = 2, 3, 16, 16
    inputs = jax.random.uniform(ki, (N, C, H, W), jnp.float32, -1.0, 1.0)
    targets = jax.random.uniform(kt, (N, C, H, W), jnp.float32, -1.0, 1.0)

    crit = L1PlusPerceptualLoss(lambda_L1=10.0, lambda_perceptual=10.0,
                                perceptual_layers=3, gpu_ids=[0], percep_is_l1=0, key=kp)

    loss, loss_l1, loss_p = crit(inputs, targets)
    jax.block_until_ready((loss, loss_l1, loss_p))

    ref_loss, ref_l1, ref_p = _reference(crit.params, inputs, targets,
                                         crit.lambda_L1, crit.lambda_perceptual,
                                         crit.percep_is_l1)

    assert bool(jnp.isfinite(loss)) and bool(jnp.isfinite(loss_l1)) and bool(jnp.isfinite(loss_p))
    assert bool(jnp.allclose(loss_l1, ref_l1, rtol=1e-4, atol=1e-6)), (loss_l1, ref_l1)
    assert bool(jnp.allclose(loss_p, ref_p, rtol=1e-1, atol=1e-4)), (loss_p, ref_p)
    assert bool(jnp.allclose(loss, ref_loss, rtol=1e-1, atol=1e-4)), (loss, ref_loss)

    print("KERNEL_OK")
</pallas_src>

<mosaic_0001>
module attributes {stable_mosaic.version = 11 : i64} {
  func.func @_l1_and_normalize_kernel(%arg0: i32, %arg1: memref<256x3xf32, #tpu.memory_space<vmem>>, %arg2: memref<256x3xf32, #tpu.memory_space<vmem>>, %arg3: memref<1x3xf32, #tpu.memory_space<vmem>>, %arg4: memref<1x3xf32, #tpu.memory_space<vmem>>, %arg5: memref<256x3xbf16, #tpu.memory_space<vmem>>, %arg6: memref<256x3xbf16, #tpu.memory_space<vmem>>, %arg7: memref<1x1xf32, #tpu.memory_space<vmem>>) attributes {dimension_semantics = [#tpu.dimension_semantics<arbitrary>], iteration_bounds = array<i64: 2>, scalar_prefetch = 0 : i64, scratch_operands = 0 : i64, tpu.core_type = #tpu.core_type<tc>, window_params = [{transform_indices = @transform_0, window_bounds = array<i64: 256, 3>}, {transform_indices = @transform_1, window_bounds = array<i64: 256, 3>}, {pipeline_mode = #tpu.pipeline_mode<synchronous>, transform_indices = @transform_2, window_bounds = array<i64: 1, 3>}, {pipeline_mode = #tpu.pipeline_mode<synchronous>, transform_indices = @transform_3, window_bounds = array<i64: 1, 3>}, {transform_indices = @transform_4, window_bounds = array<i64: 256, 3>}, {transform_indices = @transform_5, window_bounds = array<i64: 256, 3>}, {pipeline_mode = #tpu.pipeline_mode<synchronous>, transform_indices = @transform_6, window_bounds = array<i64: 1, 1>}]} {
    %c0 = arith.constant 0 : index
    %c0_0 = arith.constant 0 : index
    %0 = vector.load %arg1[%c0, %c0_0] : memref<256x3xf32, #tpu.memory_space<vmem>>, vector<256x3xf32>
    %c0_1 = arith.constant 0 : index
    %c0_2 = arith.constant 0 : index
    %1 = vector.load %arg2[%c0_1, %c0_2] : memref<256x3xf32, #tpu.memory_space<vmem>>, vector<256x3xf32>
    %c0_3 = arith.constant 0 : index
    %c0_4 = arith.constant 0 : index
    %2 = vector.load %arg3[%c0_3, %c0_4] : memref<1x3xf32, #tpu.memory_space<vmem>>, vector<1x3xf32>
    %c0_5 = arith.constant 0 : index
    %c0_6 = arith.constant 0 : index
    %3 = vector.load %arg4[%c0_5, %c0_6] : memref<1x3xf32, #tpu.memory_space<vmem>>, vector<1x3xf32>
    %cst = arith.constant 1.000000e+00 : f32
    %4 = vector.broadcast %cst : f32 to vector<256x3xf32>
    %5 = arith.addf %0, %4 : vector<256x3xf32>
    %cst_7 = arith.constant 5.000000e-01 : f32
    %6 = vector.broadcast %cst_7 : f32 to vector<256x3xf32>
    %7 = arith.mulf %5, %6 : vector<256x3xf32>
    %8 = vector.broadcast %2 : vector<1x3xf32> to vector<256x3xf32>
    %9 = arith.subf %7, %8 : vector<256x3xf32>
    %10 = vector.broadcast %3 : vector<1x3xf32> to vector<256x3xf32>
    %11 = arith.mulf %9, %10 : vector<256x3xf32>
    %12 = arith.truncf %11 : vector<256x3xf32> to vector<256x3xbf16>
    %c0_8 = arith.constant 0 : index
    %c0_9 = arith.constant 0 : index
    %13 = vector.load %arg5[%c0_8, %c0_9] : memref<256x3xbf16, #tpu.memory_space<vmem>>, vector<256x3xbf16>
    tpu.vector_store %arg5[%c0_8, %c0_9], %12 {strides = array<i32>} : memref<256x3xbf16, #tpu.memory_space<vmem>>, vector<256x3xbf16>,
    %cst_10 = arith.constant 1.000000e+00 : f32
    %14 = vector.broadcast %cst_10 : f32 to vector<256x3xf32>
    %15 = arith.addf %1, %14 : vector<256x3xf32>
    %cst_11 = arith.constant 5.000000e-01 : f32
    %16 = vector.broadcast %cst_11 : f32 to vector<256x3xf32>
    %17 = arith.mulf %15, %16 : vector<256x3xf32>
    %18 = vector.broadcast %2 : vector<1x3xf32> to vector<256x3xf32>
    %19 = arith.subf %17, %18 : vector<256x3xf32>
    %20 = vector.broadcast %3 : vector<1x3xf32> to vector<256x3xf32>
    %21 = arith.mulf %19, %20 : vector<256x3xf32>
    %22 = arith.truncf %21 : vector<256x3xf32> to vector<256x3xbf16>
    %c0_12 = arith.constant 0 : index
    %c0_13 = arith.constant 0 : index
    %23 = vector.load %arg6[%c0_12, %c0_13] : memref<256x3xbf16, #tpu.memory_space<vmem>>, vector<256x3xbf16>
    tpu.vector_store %arg6[%c0_12, %c0_13], %22 {strides = array<i32>} : memref<256x3xbf16, #tpu.memory_space<vmem>>, vector<256x3xbf16>,
    %24 = arith.subf %0, %1 : vector<256x3xf32>
    %25 = math.absf %24 : vector<256x3xf32>
    %26 = vector.shape_cast %25 : vector<256x3xf32> to vector<1x256x3xf32>
    %cst_14 = arith.constant dense<0.000000e+00> : vector<1xf32>
    %27 = vector.multi_reduction <add>, %26, %cst_14 [1, 2] : vector<1x256x3xf32> to vector<1xf32>
    %28 = vector.shape_cast %27 : vector<1xf32> to vector<1x1x1xf32>
    %29 = vector.extract %28[0, 0, 0] : f32 from vector<1x1x1xf32>
    %30 = vector.broadcast %29 : f32 to vector<1x1xf32>
    %c0_i32 = arith.constant 0 : i32
    %31 = arith.cmpi eq, %arg0, %c0_i32 : i32
    %32 = arith.extui %31 : i1 to i32
    %c0_i32_15 = arith.constant 0 : i32
    %33 = arith.cmpi ne, %32, %c0_i32_15 : i32
    scf.if %33 {
      %cst_20 = arith.constant 0.000000e+00 : f32
      %37 = vector.broadcast %cst_20 : f32 to vector<1x1xf32>
      %c0_21 = arith.constant 0 : index
      %c0_22 = arith.constant 0 : index
      %38 = vector.load %arg7[%c0_21, %c0_22] : memref<1x1xf32, #tpu.memory_space<vmem>>, vector<1x1xf32>
      tpu.vector_store %arg7[%c0_21, %c0_22], %37 {strides = array<i32>} : memref<1x1xf32, #tpu.memory_space<vmem>>, vector<1x1xf32>,
    } else {
    }
    %c0_16 = arith.constant 0 : index
    %c0_17 = arith.constant 0 : index
    %34 = vector.load %arg7[%c0_16, %c0_17] : memref<1x1xf32, #tpu.memory_space<vmem>>, vector<1x1xf32>
    %35 = arith.addf %34, %30 : vector<1x1xf32>
    %c0_18 = arith.constant 0 : index
    %c0_19 = arith.constant 0 : index
    %36 = vector.load %arg7[%c0_18, %c0_19] : memref<1x1xf32, #tpu.memory_space<vmem>>, vector<1x1xf32>
    tpu.vector_store %arg7[%c0_18, %c0_19], %35 {strides = array<i32>} : memref<1x1xf32, #tpu.memory_space<vmem>>, vector<1x1xf32>,
    return
  }
  func.func @transform_0(%arg0: i32) -> (i32, i32) {
    %c0_i32 = arith.constant 0 : i32
    %c0_i32_0 = arith.constant 0 : i32
    return %arg0, %c0_i32 : i32, i32
  }
  func.func @transform_1(%arg0: i32) -> (i32, i32) {
    %c0_i32 = arith.constant 0 : i32
    %c0_i32_0 = arith.constant 0 : i32
    return %arg0, %c0_i32 : i32, i32
  }
  func.func @transform_2(%arg0: i32) -> (i32, i32) {
    %c0_i32 = arith.constant 0 : i32
    %c0_i32_0 = arith.constant 0 : i32
    %c0_i32_1 = arith.constant 0 : i32
    return %c0_i32, %c0_i32_0 : i32, i32
  }
  func.func @transform_3(%arg0: i32) -> (i32, i32) {
    %c0_i32 = arith.constant 0 : i32
    %c0_i32_0 = arith.constant 0 : i32
    %c0_i32_1 = arith.constant 0 : i32
    return %c0_i32, %c0_i32_0 : i32, i32
  }
  func.func @transform_4(%arg0: i32) -> (i32, i32) {
    %c0_i32 = arith.constant 0 : i32
    %c0_i32_0 = arith.constant 0 : i32
    return %arg0, %c0_i32 : i32, i32
  }
  func.func @transform_5(%arg0: i32) -> (i32, i32) {
    %c0_i32 = arith.constant 0 : i32
    %c0_i32_0 = arith.constant 0 : i32
    return %arg0, %c0_i32 : i32, i32
  }
  func.func @transform_6(%arg0: i32) -> (i32, i32) {
    %c0_i32 = arith.constant 0 : i32
    %c0_i32_0 = arith.constant 0 : i32
    %c0_i32_1 = arith.constant 0 : i32
    return %c0_i32, %c0_i32_0 : i32, i32
  }
}

module attributes {stable_mosaic.version = 11 : i64} {
  func.func @_conv_mm_bias_relu_kernel(%arg0: i32, %arg1: memref<512x27xbf16, #tpu.memory_space<vmem>>, %arg2: memref<27x64xbf16, #tpu.memory_space<vmem>>, %arg3: memref<1x64xf32, #tpu.memory_space<vmem>>, %arg4: memref<512x64xbf16, #tpu.memory_space<vmem>>) attributes {dimension_semantics = [#tpu.dimension_semantics<parallel>], iteration_bounds = array<i64: 2>, scalar_prefetch = 0 : i64, scratch_operands = 0 : i64, tpu.core_type = #tpu.core_type<tc>, window_params = [{transform_indices = @transform_0, window_bounds = array<i64: 512, 27>}, {pipeline_mode = #tpu.pipeline_mode<synchronous>, transform_indices = @transform_1, window_bounds = array<i64: 27, 64>}, {pipeline_mode = #tpu.pipeline_mode<synchronous>, transform_indices = @transform_2, window_bounds = array<i64: 1, 64>}, {transform_indices = @transform_3, window_bounds = array<i64: 512, 64>}]} {
    %c0 = arith.constant 0 : index
    %c0_0 = arith.constant 0 : index
    %0 = vector.load %arg1[%c0, %c0_0] : memref<512x27xbf16, #tpu.memory_space<vmem>>, vector<512x27xbf16>
    %c0_1 = arith.constant 0 : index
    %c0_2 = arith.constant 0 : index
    %1 = vector.load %arg2[%c0_1, %c0_2] : memref<27x64xbf16, #tpu.memory_space<vmem>>, vector<27x64xbf16>
    %cst = arith.constant dense<0.000000e+00> : vector<512x64xf32>
    %2 = tpu.matmul %0, %1, %cst {dimension_numbers = #tpu.dot_dimension_numbers<[1], [0], [0], [1], [0, 0, 1, 1], [], []>} : vector<512x27xbf16>, vector<27x64xbf16>, vector<512x64xf32> -> vector<512x64xf32>
    %c0_3 = arith.constant 0 : index
    %c0_4 = arith.constant 0 : index
    %3 = vector.load %arg3[%c0_3, %c0_4] : memref<1x64xf32, #tpu.memory_space<vmem>>, vector<1x64xf32>
    %4 = vector.broadcast %3 : vector<1x64xf32> to vector<512x64xf32>
    %5 = arith.addf %2, %4 : vector<512x64xf32>
    %cst_5 = arith.constant 0.000000e+00 : f32
    %6 = vector.broadcast %cst_5 : f32 to vector<512x64xf32>
    %7 = arith.maximumf %5, %6 : vector<512x64xf32>
    %8 = arith.truncf %7 : vector<512x64xf32> to vector<512x64xbf16>
    %c0_6 = arith.constant 0 : index
    %c0_7 = arith.constant 0 : index
    %9 = vector.load %arg4[%c0_6, %c0_7] : memref<512x64xbf16, #tpu.memory_space<vmem>>, vector<512x64xbf16>
    tpu.vector_store %arg4[%c0_6, %c0_7], %8 {strides = array<i32>} : memref<512x64xbf16, #tpu.memory_space<vmem>>, vector<512x64xbf16>,
    return
  }
  func.func @transform_0(%arg0: i32) -> (i32, i32) {
    %c0_i32 = arith.constant 0 : i32
    %c0_i32_0 = arith.constant 0 : i32
    return %arg0, %c0_i32 : i32, i32
  }
  func.func @transform_1(%arg0: i32) -> (i32, i32) {
    %c0_i32 = arith.constant 0 : i32
    %c0_i32_0 = arith.constant 0 : i32
    %c0_i32_1 = arith.constant 0 : i32
    return %c0_i32, %c0_i32_0 : i32, i32
  }
  func.func @transform_2(%arg0: i32) -> (i32, i32) {
    %c0_i32 = arith.constant 0 : i32
    %c0_i32_0 = arith.constant 0 : i32
    %c0_i32_1 = arith.constant 0 : i32
    return %c0_i32, %c0_i32_0 : i32, i32
  }
  func.func @transform_3(%arg0: i32) -> (i32, i32) {
    %c0_i32 = arith.constant 0 : i32
    %c0_i32_0 = arith.constant 0 : i32
    return %arg0, %c0_i32 : i32, i32
  }
}

module attributes {stable_mosaic.version = 11 : i64} {
  func.func @_conv_mm_relu_featdist_kernel(%arg0: i32, %arg1: memref<256x576xbf16, #tpu.memory_space<vmem>>, %arg2: memref<256x576xbf16, #tpu.memory_space<vmem>>, %arg3: memref<576x64xbf16, #tpu.memory_space<vmem>>, %arg4: memref<1x64xf32, #tpu.memory_space<vmem>>, %arg5: memref<1x1xf32, #tpu.memory_space<vmem>>) attributes {dimension_semantics = [#tpu.dimension_semantics<arbitrary>], iteration_bounds = array<i64: 2>, scalar_prefetch = 0 : i64, scratch_operands = 0 : i64, tpu.core_type = #tpu.core_type<tc>, window_params = [{transform_indices = @transform_0, window_bounds = array<i64: 256, 576>}, {transform_indices = @transform_1, window_bounds = array<i64: 256, 576>}, {pipeline_mode = #tpu.pipeline_mode<synchronous>, transform_indices = @transform_2, window_bounds = array<i64: 576, 64>}, {pipeline_mode = #tpu.pipeline_mode<synchronous>, transform_indices = @transform_3, window_bounds = array<i64: 1, 64>}, {pipeline_mode = #tpu.pipeline_mode<synchronous>, transform_indices = @transform_4, window_bounds = array<i64: 1, 1>}]} {
    %c0 = arith.constant 0 : index
    %c0_0 = arith.constant 0 : index
    %0 = vector.load %arg3[%c0, %c0_0] : memref<576x64xbf16, #tpu.memory_space<vmem>>, vector<576x64xbf16>
    %c0_1 = arith.constant 0 : index
    %c0_2 = arith.constant 0 : index
    %1 = vector.load %arg4[%c0_1, %c0_2] : memref<1x64xf32, #tpu.memory_space<vmem>>, vector<1x64xf32>
    %c0_3 = arith.constant 0 : index
    %c0_4 = arith.constant 0 : index
    %2 = vector.load %arg1[%c0_3, %c0_4] : memref<256x576xbf16, #tpu.memory_space<vmem>>, vector<256x576xbf16>
    %cst = arith.constant dense<0.000000e+00> : vector<256x64xf32>
    %3 = tpu.matmul %2, %0, %cst {dimension_numbers = #tpu.dot_dimension_numbers<[1], [0], [0], [1], [0, 0, 1, 1], [], []>} : vector<256x576xbf16>, vector<576x64xbf16>, vector<256x64xf32> -> vector<256x64xf32>
    %4 = vector.broadcast %1 : vector<1x64xf32> to vector<256x64xf32>
    %5 = arith.addf %3, %4 : vector<256x64xf32>
    %cst_5 = arith.constant 0.000000e+00 : f32
    %6 = vector.broadcast %cst_5 : f32 to vector<256x64xf32>
    %7 = arith.maximumf %5, %6 : vector<256x64xf32>
    %c0_6 = arith.constant 0 : index
    %c0_7 = arith.constant 0 : index
    %8 = vector.load %arg2[%c0_6, %c0_7] : memref<256x576xbf16, #tpu.memory_space<vmem>>, vector<256x576xbf16>
    %cst_8 = arith.constant dense<0.000000e+00> : vector<256x64xf32>
    %9 = tpu.matmul %8, %0, %cst_8 {dimension_numbers = #tpu.dot_dimension_numbers<[1], [0], [0], [1], [0, 0, 1, 1], [], []>} : vector<256x576xbf16>, vector<576x64xbf16>, vector<256x64xf32> -> vector<256x64xf32>
    %10 = vector.broadcast %1 : vector<1x64xf32> to vector<256x64xf32>
    %11 = arith.addf %9, %10 : vector<256x64xf32>
    %cst_9 = arith.constant 0.000000e+00 : f32
    %12 = vector.broadcast %cst_9 : f32 to vector<256x64xf32>
    %13 = arith.maximumf %11, %12 : vector<256x64xf32>
    %14 = arith.subf %7, %13 : vector<256x64xf32>
    %15 = arith.mulf %14, %14 : vector<256x64xf32>
    %16 = vector.shape_cast %15 : vector<256x64xf32> to vector<1x256x64xf32>
    %cst_10 = arith.constant dense<0.000000e+00> : vector<1xf32>
    %17 = vector.multi_reduction <add>, %16, %cst_10 [1, 2] : vector<1x256x64xf32> to vector<1xf32>
    %18 = vector.shape_cast %17 : vector<1xf32> to vector<1x1x1xf32>
    %19 = vector.extract %18[0, 0, 0] : f32 from vector<1x1x1xf32>
    %20 = vector.broadcast %19 : f32 to vector<1x1xf32>
    %c0_i32 = arith.constant 0 : i32
    %21 = arith.cmpi eq, %arg0, %c0_i32 : i32
    %22 = arith.extui %21 : i1 to i32
    %c0_i32_11 = arith.constant 0 : i32
    %23 = arith.cmpi ne, %22, %c0_i32_11 : i32
    scf.if %23 {
      %cst_16 = arith.constant 0.000000e+00 : f32
      %27 = vector.broadcast %cst_16 : f32 to vector<1x1xf32>
      %c0_17 = arith.constant 0 : index
      %c0_18 = arith.constant 0 : index
      %28 = vector.load %arg5[%c0_17, %c0_18] : memref<1x1xf32, #tpu.memory_space<vmem>>, vector<1x1xf32>
      tpu.vector_store %arg5[%c0_17, %c0_18], %27 {strides = array<i32>} : memref<1x1xf32, #tpu.memory_space<vmem>>, vector<1x1xf32>,
    } else {
    }
    %c0_12 = arith.constant 0 : index
    %c0_13 = arith.constant 0 : index
    %24 = vector.load %arg5[%c0_12, %c0_13] : memref<1x1xf32, #tpu.memory_space<vmem>>, vector<1x1xf32>
    %25 = arith.addf %24, %20 : vector<1x1xf32>
    %c0_14 = arith.constant 0 : index
    %c0_15 = arith.constant 0 : index
    %26 = vector.load %arg5[%c0_14, %c0_15] : memref<1x1xf32, #tpu.memory_space<vmem>>, vector<1x1xf32>
    tpu.vector_store %arg5[%c0_14, %c0_15], %25 {strides = array<i32>} : memref<1x1xf32, #tpu.memory_space<vmem>>, vector<1x1xf32>,
    return
  }
  func.func @transform_0(%arg0: i32) -> (i32, i32) {
    %c0_i32 = arith.constant 0 : i32
    %c0_i32_0 = arith.constant 0 : i32
    return %arg0, %c0_i32 : i32, i32
  }
  func.func @transform_1(%arg0: i32) -> (i32, i32) {
    %c0_i32 = arith.constant 0 : i32
    %c0_i32_0 = arith.constant 0 : i32
    return %arg0, %c0_i32 : i32, i32
  }
  func.func @transform_2(%arg0: i32) -> (i32, i32) {
    %c0_i32 = arith.constant 0 : i32
    %c0_i32_0 = arith.constant 0 : i32
    %c0_i32_1 = arith.constant 0 : i32
    return %c0_i32, %c0_i32_0 : i32, i32
  }
  func.func @transform_3(%arg0: i32) -> (i32, i32) {
    %c0_i32 = arith.constant 0 : i32
    %c0_i32_0 = arith.constant 0 : i32
    %c0_i32_1 = arith.constant 0 : i32
    return %c0_i32, %c0_i32_0 : i32, i32
  }
  func.func @transform_4(%arg0: i32) -> (i32, i32) {
    %c0_i32 = arith.constant 0 : i32
    %c0_i32_0 = arith.constant 0 : i32
    %c0_i32_1 = arith.constant 0 : i32
    return %c0_i32, %c0_i32_0 : i32, i32
  }
}

</mosaic_0001>

<llo_original>
// kernel: l1_plus_perceptual_forward.3
$region0: #{l1_plus_perceptual_forward.3}
  #allocation0 [shape = 'u32[]', space=smem, size = 0x4, offset = 0x4, fixed_abs, tag = 'smem constant byte address 0x4 - core index']
  #allocation1 [shape = 'u32[144,128]{1,0:T(1,128)}', space=vmem, size = 0x12000, scoped, tag = 'internal scratch']
  %s0 = inlined_call_operand.vmem [shape: f32[512,3], index: 0, kind: input, shape index: {}]
  %s1 = inlined_call_operand.vmem [shape: f32[512,3], index: 1, kind: input, shape index: {}]
  %s2 = inlined_call_operand.hbm [shape: f32[1,3], index: 2, kind: input, shape index: {}]
  %s3 = inlined_call_operand.hbm [shape: f32[1,3], index: 3, kind: input, shape index: {}]
  %s4 = inlined_call_operand.vmem [shape: bf16[512,3], index: 4, kind: output, shape index: {0}]
  %s5 = inlined_call_operand.vmem [shape: bf16[512,3], index: 5, kind: output, shape index: {1}]
  %s6 = inlined_call_operand.hbm [shape: f32[1,1], index: 6, kind: output, shape index: {2}]
  %7 = xla_tuple %s4, %s5, %s6
  %s8 = sld [smem:[#allocation0]]
  $region77: #{l1_plus_perceptual_forward.3} parent=0
    _
  %s10 = ssub.s32 1, %s8
  %s11 = scalar_select 0, %s10, %s8
  $region1: #{l1_plus_perceptual_forward.3} parent=0
    #allocation2 [shape = 'u8[512]{0}', space=vmem, size = 0x400, scoped, tag = 'input window, operand 2, single buffered']
    #allocation3 [shape = 's32[2]{0}', space=sflag, size = 0x8, scoped, tag = 'scoped memory for l1_plus_perceptual_forward.3']
    #allocation4 [shape = 's32[2]{0}', space=sflag, size = 0x8, scoped, tag = 'scoped memory for l1_plus_perceptual_forward.3']
    #allocation5 [shape = 'u8[512]{0}', space=vmem, size = 0x400, scoped, tag = 'input window, operand 3, single buffered']
    #allocation6 [shape = 's32[1]{0}', space=sflag, size = 0x4, scoped, tag = 'scoped memory for l1_plus_perceptual_forward.3']
    #allocation7 [shape = 'u8[512]{0}', space=vmem, size = 0x400, scoped, tag = 'output window, operand 2, single buffered']
    %12 = vsyncpa [#allocation3], 0
    %13 = vsyncpa [#allocation6], 0
    %14 = vsyncpa [#allocation4], 0
    loop: start=0, step=1, limit=4
    $region2: #{l1_plus_perceptual_forward.3} parent=1 // loop_pre_header
      _
    $region3: #{l1_plus_perceptual_forward.3} parent=1 // loop_header
      %s16 = sphi 0, %s20
      %p17 = scmp.ge.s32.totalorder %s16, 4
      %s26 = sphi 0, %s28
      %s29 = sphi 0, %s26
      %s30 = sphi 0, %s29
      %s46 = sphi 0, %s30
      %s52 = sphi 0, %s54
      %s55 = sphi 0, %s52
      %s56 = sphi 0, %s55
      %s72 = sphi 0, %s56
      %s76 = sphi 0, %s76
      %s78 = sphi 0, %s76
      %s79 = sphi 0, %s78
      %s93 = sphi 0, %s79
      %s97 = sphi 0, %s97
      %s99 = sphi 0, %s97
      %s100 = sphi 0, %s99
      %s114 = sphi 0, %s100
      %s120 = sphi 0, %s122
      %s123 = sphi 0, %s120
      %s124 = sphi 0, %s123
      %s140 = sphi 0, %s124
      %s146 = sphi 0, %s148
      %s149 = sphi 0, %s146
      %s150 = sphi 0, %s149
      %s166 = sphi 0, %s150
      %s170 = sphi 0, %s170
      %s172 = sphi 0, %s170
      %s173 = sphi 0, %s172
      %s187 = sphi 0, %s173
    $region4: #{l1_plus_perceptual_forward.3} parent=1 // loop_header_branch
      %19 = sbr.rel (%p17) target = $region8
    $region5: #{l1_plus_perceptual_forward.3} parent=1 // loop_body
      %s21 = ssub.s32 %s16, 1
      %s22 = ssub.s32 %s16, 2
      %s23 = sadd.s32 %s16, 1
      %s24 = ssub.s32 %s16, %s23
      %p25 = scmp.eq.s32.totalorder %s24, 0
      %s27 = sadd.s32 %s26, 1
      %s28 = scalar_select %p25, %s26, %s27
      %p31 = pneg %p25
      %p32 = scmp.eq.s32.totalorder %s16, 1
      %p33 = por %p31, %p32
      %p34 = scmp.ne.s32.totalorder %s26, %s29
      %p35 = scmp.eq.s32.totalorder %s16, 0
      %p36 = por %p34, %p35
      %p37 = scmp.ne.s32.totalorder %s26, %s29
      %p38 = scmp.eq.s32.totalorder %s21, 1
      %p39 = por %p37, %p38
      %p40 = scmp.ne.s32.totalorder %s29, %s30
      %p41 = scmp.eq.s32.totalorder %s21, 0
      %p42 = por %p40, %p41
      %p43 = scmp.ne.s32.totalorder %s29, %s30
      %p44 = scmp.eq.s32.totalorder %s22, 1
      %p45 = por %p43, %p44
      %p47 = scmp.ne.s32.totalorder %s30, %s46
      %p48 = scmp.eq.s32.totalorder %s22, 0
      %p49 = por %p47, %p48
      %s50 = ssub.s32 %s16, %s23
      %p51 = scmp.eq.s32.totalorder %s50, 0
      %s53 = sadd.s32 %s52, 1
      %s54 = scalar_select %p51, %s52, %s53
      %p57 = pneg %p51
      %p58 = scmp.eq.s32.totalorder %s16, 1
      %p59 = por %p57, %p58
      %p60 = scmp.ne.s32.totalorder %s52, %s55
      %p61 = scmp.eq.s32.totalorder %s16, 0
      %p62 = por %p60, %p61
      %p63 = scmp.ne.s32.totalorder %s52, %s55
      %p64 = scmp.eq.s32.totalorder %s21, 1
      %p65 = por %p63, %p64
      %p66 = scmp.ne.s32.totalorder %s55, %s56
      %p67 = scmp.eq.s32.totalorder %s21, 0
      %p68 = por %p66, %p67
      %p69 = scmp.ne.s32.totalorder %s55, %s56
      %p70 = scmp.eq.s32.totalorder %s22, 1
      %p71 = por %p69, %p70
      %p73 = scmp.ne.s32.totalorder %s56, %s72
      %p74 = scmp.eq.s32.totalorder %s22, 0
      %p75 = por %p73, %p74
      %s77 = sadd.s32 %s76, 1
      %p80 = scmp.eq.s32.totalorder %s16, 1
      %p81 = scmp.ne.s32.totalorder %s76, %s78
      %p82 = scmp.eq.s32.totalorder %s16, 0
      %p83 = por %p81, %p82
      %p84 = scmp.ne.s32.totalorder %s76, %s78
      %p85 = scmp.eq.s32.totalorder %s21, 1
      %p86 = por %p84, %p85
      %p87 = scmp.ne.s32.totalorder %s78, %s79
      %p88 = scmp.eq.s32.totalorder %s21, 0
      %p89 = por %p87, %p88
      %p90 = scmp.ne.s32.totalorder %s78, %s79
      %p91 = scmp.eq.s32.totalorder %s22, 1
      %p92 = por %p90, %p91
      %p94 = scmp.ne.s32.totalorder %s79, %s93
      %p95 = scmp.eq.s32.totalorder %s22, 0
      %p96 = por %p94, %p95
      %s98 = sadd.s32 %s97, 1
      %p101 = scmp.eq.s32.totalorder %s16, 1
      %p102 = scmp.ne.s32.totalorder %s97, %s99
      %p103 = scmp.eq.s32.totalorder %s16, 0
      %p104 = por %p102, %p103
      %p105 = scmp.ne.s32.totalorder %s97, %s99
      %p106 = scmp.eq.s32.totalorder %s21, 1
      %p107 = por %p105, %p106
      %p108 = scmp.ne.s32.totalorder %s99, %s100
      %p109 = scmp.eq.s32.totalorder %s21, 0
      %p110 = por %p108, %p109
      %p111 = scmp.ne.s32.totalorder %s99, %s100
      %p112 = scmp.eq.s32.totalorder %s22, 1
      %p113 = por %p111, %p112
      %p115 = scmp.ne.s32.totalorder %s100, %s114
      %p116 = scmp.eq.s32.totalorder %s22, 0
      %p117 = por %p115, %p116
      %s118 = ssub.s32 %s16, %s23
      %p119 = scmp.eq.s32.totalorder %s118, 0
      %s121 = sadd.s32 %s120, 1
      %s122 = scalar_select %p119, %s120, %s121
      %p125 = pneg %p119
      %p126 = scmp.eq.s32.totalorder %s16, 1
      %p127 = por %p125, %p126
      %p128 = scmp.ne.s32.totalorder %s120, %s123
      %p129 = scmp.eq.s32.totalorder %s16, 0
      %p130 = por %p128, %p129
      %p131 = scmp.ne.s32.totalorder %s120, %s123
      %p132 = scmp.eq.s32.totalorder %s21, 1
      %p133 = por %p131, %p132
      %p134 = scmp.ne.s32.totalorder %s123, %s124
      %p135 = scmp.eq.s32.totalorder %s21, 0
      %p136 = por %p134, %p135
      %p137 = scmp.ne.s32.totalorder %s123, %s124
      %p138 = scmp.eq.s32.totalorder %s22, 1
      %p139 = por %p137, %p138
      %p141 = scmp.ne.s32.totalorder %s124, %s140
      %p142 = scmp.eq.s32.totalorder %s22, 0
      %p143 = por %p141, %p142
      %s144 = ssub.s32 %s16, %s23
      %p145 = scmp.eq.s32.totalorder %s144, 0
      %s147 = sadd.s32 %s146, 1
      %s148 = scalar_select %p145, %s146, %s147
      %p151 = pneg %p145
      %p152 = scmp.eq.s32.totalorder %s16, 1
      %p153 = por %p151, %p152
      %p154 = scmp.ne.s32.totalorder %s146, %s149
      %p155 = scmp.eq.s32.totalorder %s16, 0
      %p156 = por %p154, %p155
      %p157 = scmp.ne.s32.totalorder %s146, %s149
      %p158 = scmp.eq.s32.totalorder %s21, 1
      %p159 = por %p157, %p158
      %p160 = scmp.ne.s32.totalorder %s149, %s150
      %p161 = scmp.eq.s32.totalorder %s21, 0
      %p162 = por %p160, %p161
      %p163 = scmp.ne.s32.totalorder %s149, %s150
      %p164 = scmp.eq.s32.totalorder %s22, 1
      %p165 = por %p163, %p164
      %p167 = scmp.ne.s32.totalorder %s150, %s166
      %p168 = scmp.eq.s32.totalorder %s22, 0
      %p169 = por %p167, %p168
      %s171 = sadd.s32 %s170, 1
      %p174 = scmp.eq.s32.totalorder %s16, 1
      %p175 = scmp.ne.s32.totalorder %s170, %s172
      %p176 = scmp.eq.s32.totalorder %s16, 0
      %p177 = por %p175, %p176
      %p178 = scmp.ne.s32.totalorder %s170, %s172
      %p179 = scmp.eq.s32.totalorder %s21, 1
      %p180 = por %p178, %p179
      %p181 = scmp.ne.s32.totalorder %s172, %s173
      %p182 = scmp.eq.s32.totalorder %s21, 0
      %p183 = por %p181, %p182
      %p184 = scmp.ne.s32.totalorder %s172, %s173
      %p185 = scmp.eq.s32.totalorder %s22, 1
      %p186 = por %p184, %p185
      %p188 = scmp.ne.s32.totalorder %s173, %s187
      %p189 = scmp.eq.s32.totalorder %s22, 0
      %p190 = por %p188, %p189
      %p191 = scmp.le.s32.totalorder 1, %s16
      %p192 = scmp.lt.s32.totalorder %s16, 3
      %p193 = pnand %p191, %p192
      %p194 = pneg %p193
      // Predicated region
      $region9: #{l1_plus_perceptual_forward.3} parent=5 // pred_check
        _
      $region10: #{l1_plus_perceptual_forward.3} parent=5 // pred_check_branch
        %196 = sbr.rel (%p193) target = $region12
      $region11: #{l1_plus_perceptual_forward.3} parent=5 // pred_region
        %s197 = ssub.s32 %s16, 1
        // Predicated region
        $region13: #{l1_plus_perceptual_forward.3} parent=11 // pred_check
          %p198 = pneg %p89
        $region14: #{l1_plus_perceptual_forward.3} parent=11 // pred_check_branch
          %200 = sbr.rel (%p198) target = $region16
        $region15: #{l1_plus_perceptual_forward.3} parent=11 // pred_region
          %s202 = ssub.s32 16, 16
          %203 = vsyncadd [#allocation3], %s202
          %s205 = sshll.u32 [#allocation2], 4
          %s206 = int_to_ptr.vmem [resolvable:$true] %s205
          %208 = dma.hbm_to_vmem [thread:$0]  %s2, 16, %s206, [#allocation3]
        $region16: #{l1_plus_perceptual_forward.3} parent=11 // pred_fallthru
          _
        // Predicated region
        $region17: #{l1_plus_perceptual_forward.3} parent=11 // pred_check
          %p209 = pneg %p110
        $region18: #{l1_plus_perceptual_forward.3} parent=11 // pred_check_branch
          %211 = sbr.rel (%p209) target = $region20
        $region19: #{l1_plus_perceptual_forward.3} parent=11 // pred_region
          %s213 = ssub.s32 16, 16
          %214 = vsyncadd [#allocation6], %s213
          %s216 = sshll.u32 [#allocation5], 4
          %s217 = int_to_ptr.vmem [resolvable:$true] %s216
          %219 = dma.hbm_to_vmem [thread:$0]  %s3, 16, %s217, [#allocation6]
        $region20: #{l1_plus_perceptual_forward.3} parent=11 // pred_fallthru
          _
      $region12: #{l1_plus_perceptual_forward.3} parent=5 // pred_fallthru
        _
      %p220 = scmp.lt.s32.totalorder %s16, 2
      // Predicated region
      $region21: #{l1_plus_perceptual_forward.3} parent=5 // pred_check
        %p221 = pneg %p220
      $region22: #{l1_plus_perceptual_forward.3} parent=5 // pred_check_branch
        %223 = sbr.rel (%p221) target = $region24
      $region23: #{l1_plus_perceptual_forward.3} parent=5 // pred_region
        // Predicated region
        $region25: #{l1_plus_perceptual_forward.3} parent=23 // pred_check
          %p224 = pneg %p36
        $region26: #{l1_plus_perceptual_forward.3} parent=23 // pred_check_branch
          %226 = sbr.rel (%p224) target = $region28
        $region27: #{l1_plus_perceptual_forward.3} parent=23 // pred_region
          %s227 = smul.u32 32, %s16
          %p228 = scmp.lt.s32.totalorder %s227, 63
          %s229 = scalar_select %p228, %s227, 63
          %s230 = smul.addr %s229, 8
          %s231 = scalar_lea.vmem %s0, %s230
          %s232 = smul.u32 32, %s16
        $region28: #{l1_plus_perceptual_forward.3} parent=23 // pred_fallthru
          _
        // Predicated region
        $region29: #{l1_plus_perceptual_forward.3} parent=23 // pred_check
          %p233 = pneg %p62
        $region30: #{l1_plus_perceptual_forward.3} parent=23 // pred_check_branch
          %235 = sbr.rel (%p233) target = $region32
        $region31: #{l1_plus_perceptual_forward.3} parent=23 // pred_region
          %s236 = smul.u32 32, %s16
          %p237 = scmp.lt.s32.totalorder %s236, 63
          %s238 = scalar_select %p237, %s236, 63
          %s239 = smul.addr %s238, 8
          %s240 = scalar_lea.vmem %s1, %s239
          %s241 = smul.u32 32, %s16
        $region32: #{l1_plus_perceptual_forward.3} parent=23 // pred_fallthru
          _
      $region24: #{l1_plus_perceptual_forward.3} parent=5 // pred_fallthru
        _
      %p242 = scmp.le.s32.totalorder 1, %s16
      %p243 = scmp.lt.s32.totalorder %s16, 3
      %p244 = pnand %p242, %p243
      %p245 = pneg %p244
      // Predicated region
      $region33: #{l1_plus_perceptual_forward.3} parent=5 // pred_check
        _
      $region34: #{l1_plus_perceptual_forward.3} parent=5 // pred_check_branch
        %247 = sbr.rel (%p244) target = $region36
      $region35: #{l1_plus_perceptual_forward.3} parent=5 // pred_region
        %s248 = ssub.s32 %s16, 1
        // Predicated region
        $region37: #{l1_plus_perceptual_forward.3} parent=35 // pred_check
          %p249 = pneg %p89
        $region38: #{l1_plus_perceptual_forward.3} parent=35 // pred_check_branch
          %251 = sbr.rel (%p249) target = $region40
        $region39: #{l1_plus_perceptual_forward.3} parent=35 // pred_region
          %252 = dma.done [#allocation3], 16
        $region40: #{l1_plus_perceptual_forward.3} parent=35 // pred_fallthru
          _
        // Predicated region
        $region41: #{l1_plus_perceptual_forward.3} parent=35 // pred_check
          %p253 = pneg %p110
        $region42: #{l1_plus_perceptual_forward.3} parent=35 // pred_check_branch
          %255 = sbr.rel (%p253) target = $region44
        $region43: #{l1_plus_perceptual_forward.3} parent=35 // pred_region
          %256 = dma.done [#allocation6], 16
        $region44: #{l1_plus_perceptual_forward.3} parent=35 // pred_fallthru
          _
        %s257 = smul.u32 32, %s21
        %p258 = scmp.lt.s32.totalorder %s257, 63
        %s259 = scalar_select %p258, %s257, 63
        %s260 = smul.addr %s259, 8
        %s261 = scalar_lea.vmem %s0, %s260
        %p262 = pneg %p42
        %p263 = pneg %p39
        %s264 = smul.u32 32, %s21
        %p265 = scmp.lt.s32.totalorder %s264, 63
        %s266 = scalar_select %p265, %s264, 63
        %s267 = smul.addr %s266, 8
        %s268 = scalar_lea.vmem %s1, %s267
        %p269 = pneg %p68
        %p270 = pneg %p65
        %p271 = pneg %p89
        %p272 = pneg %p86
        %p273 = pneg %p110
        %p274 = pneg %p107
        %p275 = pneg %p136
        %p276 = pneg %p133
        %s277 = smul.u32 32, %s21
        %p278 = scmp.lt.s32.totalorder %s277, 63
        %s279 = scalar_select %p278, %s277, 63
        %s280 = smul.addr %s279, 4
        %s281 = scalar_lea.vmem %s4, %s280
        %p282 = pneg %p162
        %p283 = pneg %p159
        %s284 = smul.u32 32, %s21
        %p285 = scmp.lt.s32.totalorder %s284, 63
        %s286 = scalar_select %p285, %s284, 63
        %s287 = smul.addr %s286, 4
        %s288 = scalar_lea.vmem %s5, %s287
        %p289 = pneg %p183
        %p290 = pneg %p180
        %s291 = smul.u32 32, %s21
        %p292 = scmp.lt.s32.totalorder %s291, 63
        %s293 = scalar_select %p292, %s291, 63
        %s294 = smul.addr %s293, 8
        %s295 = scalar_lea.vmem %s0, %s294
        %s296 = smul.u32 32, %s21
        %s297 = smul.u32 32, %s21
        %p298 = scmp.lt.s32.totalorder %s297, 63
        %s299 = scalar_select %p298, %s297, 63
        %s300 = smul.addr %s299, 8
        %s301 = scalar_lea.vmem %s1, %s300
        %s302 = smul.u32 32, %s21
        %s303 = smul.u32 32, %s21
        %p304 = scmp.lt.s32.totalorder %s303, 63
        %s305 = scalar_select %p304, %s303, 63
        %s306 = smul.addr %s305, 4
        %s307 = scalar_lea.vmem %s4, %s306
        %s308 = smul.u32 32, %s21
        %s309 = smul.u32 32, %s21
        %p310 = scmp.lt.s32.totalorder %s309, 63
        %s311 = scalar_select %p310, %s309, 63
        %s312 = smul.addr %s311, 4
        %s313 = scalar_lea.vmem %s5, %s312
        %s314 = smul.u32 32, %s21
        %v315 = vld [vmem:[%s295] sm:$0xff]
        %v316 = vld [vmem:[%s295 + $0x8] sm:$0xff]
        %v317 = vld [vmem:[%s295 + $0x10] sm:$0xff]
        %v318 = vld [vmem:[%s295 + $0x18] sm:$0xff]
        %v319 = vld [vmem:[%s295 + $0x20] sm:$0xff]
        %v320 = vld [vmem:[%s295 + $0x28] sm:$0xff]
        %v321 = vld [vmem:[%s295 + $0x30] sm:$0xff]
        %v322 = vld [vmem:[%s295 + $0x38] sm:$0xff]
        %v323 = vld [vmem:[%s295 + $0x40] sm:$0xff]
        %v324 = vld [vmem:[%s295 + $0x48] sm:$0xff]
        %v325 = vld [vmem:[%s295 + $0x50] sm:$0xff]
        %v326 = vld [vmem:[%s295 + $0x58] sm:$0xff]
        %v327 = vld [vmem:[%s295 + $0x60] sm:$0xff]
        %v328 = vld [vmem:[%s295 + $0x68] sm:$0xff]
        %v329 = vld [vmem:[%s295 + $0x70] sm:$0xff]
        %v330 = vld [vmem:[%s295 + $0x78] sm:$0xff]
        %v331 = vld [vmem:[%s295 + $0x80] sm:$0xff]
        %v332 = vld [vmem:[%s295 + $0x88] sm:$0xff]
        %v333 = vld [vmem:[%s295 + $0x90] sm:$0xff]
        %v334 = vld [vmem:[%s295 + $0x98] sm:$0xff]
        %v335 = vld [vmem:[%s295 + $0xa0] sm:$0xff]
        %v336 = vld [vmem:[%s295 + $0xa8] sm:$0xff]
        %v337 = vld [vmem:[%s295 + $0xb0] sm:$0xff]
        %v338 = vld [vmem:[%s295 + $0xb8] sm:$0xff]
        %v339 = vld [vmem:[%s295 + $0xc0] sm:$0xff]
        %v340 = vld [vmem:[%s295 + $0xc8] sm:$0xff]
        %v341 = vld [vmem:[%s295 + $0xd0] sm:$0xff]
        %v342 = vld [vmem:[%s295 + $0xd8] sm:$0xff]
        %v343 = vld [vmem:[%s295 + $0xe0] sm:$0xff]
        %v344 = vld [vmem:[%s295 + $0xe8] sm:$0xff]
        %v345 = vld [vmem:[%s295 + $0xf0] sm:$0xff]
        %v346 = vld [vmem:[%s295 + $0xf8] sm:$0xff]
        %v347 = vld [vmem:[%s301] sm:$0xff]
        %v348 = vld [vmem:[%s301 + $0x8] sm:$0xff]
        %v349 = vld [vmem:[%s301 + $0x10] sm:$0xff]
        %v350 = vld [vmem:[%s301 + $0x18] sm:$0xff]
        %v351 = vld [vmem:[%s301 + $0x20] sm:$0xff]
        %v352 = vld [vmem:[%s301 + $0x28] sm:$0xff]
        %v353 = vld [vmem:[%s301 + $0x30] sm:$0xff]
        %v354 = vld [vmem:[%s301 + $0x38] sm:$0xff]
        %v355 = vld [vmem:[%s301 + $0x40] sm:$0xff]
        %v356 = vld [vmem:[%s301 + $0x48] sm:$0xff]
        %v357 = vld [vmem:[%s301 + $0x50] sm:$0xff]
        %v358 = vld [vmem:[%s301 + $0x58] sm:$0xff]
        %v359 = vld [vmem:[%s301 + $0x60] sm:$0xff]
        %v360 = vld [vmem:[%s301 + $0x68] sm:$0xff]
        %v361 = vld [vmem:[%s301 + $0x70] sm:$0xff]
        %v362 = vld [vmem:[%s301 + $0x78] sm:$0xff]
        %v363 = vld [vmem:[%s301 + $0x80] sm:$0xff]
        %v364 = vld [vmem:[%s301 + $0x88] sm:$0xff]
        %v365 = vld [vmem:[%s301 + $0x90] sm:$0xff]
        %v366 = vld [vmem:[%s301 + $0x98] sm:$0xff]
        %v367 = vld [vmem:[%s301 + $0xa0] sm:$0xff]
        %v368 = vld [vmem:[%s301 + $0xa8] sm:$0xff]
        %v369 = vld [vmem:[%s301 + $0xb0] sm:$0xff]
        %v370 = vld [vmem:[%s301 + $0xb8] sm:$0xff]
        %v371 = vld [vmem:[%s301 + $0xc0] sm:$0xff]
        %v372 = vld [vmem:[%s301 + $0xc8] sm:$0xff]
        %v373 = vld [vmem:[%s301 + $0xd0] sm:$0xff]
        %v374 = vld [vmem:[%s301 + $0xd8] sm:$0xff]
        %v375 = vld [vmem:[%s301 + $0xe0] sm:$0xff]
        %v376 = vld [vmem:[%s301 + $0xe8] sm:$0xff]
        %v377 = vld [vmem:[%s301 + $0xf0] sm:$0xff]
        %v378 = vld [vmem:[%s301 + $0xf8] sm:$0xff]
        %v379 = vld [vmem:[#allocation2] sm:$0x1]
        %v380 = vld [vmem:[#allocation5] sm:$0x1]
        %v381 = vadd.f32 %v315, 1.0
        %v382 = vadd.f32 %v316, 1.0
        %v383 = vadd.f32 %v317, 1.0
        %v384 = vadd.f32 %v318, 1.0
        %v385 = vadd.f32 %v319, 1.0
        %v386 = vadd.f32 %v320, 1.0
        %v387 = vadd.f32 %v321, 1.0
        %v388 = vadd.f32 %v322, 1.0
        %v389 = vadd.f32 %v323, 1.0
        %v390 = vadd.f32 %v324, 1.0
        %v391 = vadd.f32 %v325, 1.0
        %v392 = vadd.f32 %v326, 1.0
        %v393 = vadd.f32 %v327, 1.0
        %v394 = vadd.f32 %v328, 1.0
        %v395 = vadd.f32 %v329, 1.0
        %v396 = vadd.f32 %v330, 1.0
        %v397 = vadd.f32 %v331, 1.0
        %v398 = vadd.f32 %v332, 1.0
        %v399 = vadd.f32 %v333, 1.0
        %v400 = vadd.f32 %v334, 1.0
        %v401 = vadd.f32 %v335, 1.0
        %v402 = vadd.f32 %v336, 1.0
        %v403 = vadd.f32 %v337, 1.0
        %v404 = vadd.f32 %v338, 1.0
        %v405 = vadd.f32 %v339, 1.0
        %v406 = vadd.f32 %v340, 1.0
        %v407 = vadd.f32 %v341, 1.0
        %v408 = vadd.f32 %v342, 1.0
        %v409 = vadd.f32 %v343, 1.0
        %v410 = vadd.f32 %v344, 1.0
        %v411 = vadd.f32 %v345, 1.0
        %v412 = vadd.f32 %v346, 1.0
        %v413 = vmul.f32 %v381, 0.5
        %v414 = vmul.f32 %v382, 0.5
        %v415 = vmul.f32 %v383, 0.5
        %v416 = vmul.f32 %v384, 0.5
        %v417 = vmul.f32 %v385, 0.5
        %v418 = vmul.f32 %v386, 0.5
        %v419 = vmul.f32 %v387, 0.5
        %v420 = vmul.f32 %v388, 0.5
        %v421 = vmul.f32 %v389, 0.5
        %v422 = vmul.f32 %v390, 0.5
        %v423 = vmul.f32 %v391, 0.5
        %v424 = vmul.f32 %v392, 0.5
        %v425 = vmul.f32 %v393, 0.5
        %v426 = vmul.f32 %v394, 0.5
        %v427 = vmul.f32 %v395, 0.5
        %v428 = vmul.f32 %v396, 0.5
        %v429 = vmul.f32 %v397, 0.5
        %v430 = vmul.f32 %v398, 0.5
        %v431 = vmul.f32 %v399, 0.5
        %v432 = vmul.f32 %v400, 0.5
        %v433 = vmul.f32 %v401, 0.5
        %v434 = vmul.f32 %v402, 0.5
        %v435 = vmul.f32 %v403, 0.5
        %v436 = vmul.f32 %v404, 0.5
        %v437 = vmul.f32 %v405, 0.5
        %v438 = vmul.f32 %v406, 0.5
        %v439 = vmul.f32 %v407, 0.5
        %v440 = vmul.f32 %v408, 0.5
        %v441 = vmul.f32 %v409, 0.5
        %v442 = vmul.f32 %v410, 0.5
        %v443 = vmul.f32 %v411, 0.5
        %v444 = vmul.f32 %v412, 0.5
        %v446 = vlaneseq
        %v447 = vshrl.u32 %v446, 7
        %v448 = vsub.s32 0, %v447
        %v449 = vrot.slane %v379, %v448
        %v451 = vsub.f32 %v413, %v449
        %v452 = vsub.f32 %v414, %v449
        %v453 = vsub.f32 %v415, %v449
        %v454 = vsub.f32 %v416, %v449
        %v455 = vsub.f32 %v417, %v449
        %v456 = vsub.f32 %v418, %v449
        %v457 = vsub.f32 %v419, %v449
        %v458 = vsub.f32 %v420, %v449
        %v459 = vsub.f32 %v421, %v449
        %v460 = vsub.f32 %v422, %v449
        %v461 = vsub.f32 %v423, %v449
        %v462 = vsub.f32 %v424, %v449
        %v463 = vsub.f32 %v425, %v449
        %v464 = vsub.f32 %v426, %v449
        %v465 = vsub.f32 %v427, %v449
        %v466 = vsub.f32 %v428, %v449
        %v467 = vsub.f32 %v429, %v449
        %v468 = vsub.f32 %v430, %v449
        %v469 = vsub.f32 %v431, %v449
        %v470 = vsub.f32 %v432, %v449
        %v471 = vsub.f32 %v433, %v449
        %v472 = vsub.f32 %v434, %v449
        %v473 = vsub.f32 %v435, %v449
        %v474 = vsub.f32 %v436, %v449
        %v475 = vsub.f32 %v437, %v449
        %v476 = vsub.f32 %v438, %v449
        %v477 = vsub.f32 %v439, %v449
        %v478 = vsub.f32 %v440, %v449
        %v479 = vsub.f32 %v441, %v449
        %v480 = vsub.f32 %v442, %v449
        %v481 = vsub.f32 %v443, %v449
        %v482 = vsub.f32 %v444, %v449
        %v484 = vlaneseq
        %v485 = vshrl.u32 %v484, 7
        %v486 = vsub.s32 0, %v485
        %v487 = vrot.slane %v380, %v486
        %v489 = vmul.f32 %v451, %v487
        %v490 = vmul.f32 %v452, %v487
        %v491 = vmul.f32 %v453, %v487
        %v492 = vmul.f32 %v454, %v487
        %v493 = vmul.f32 %v455, %v487
        %v494 = vmul.f32 %v456, %v487
        %v495 = vmul.f32 %v457, %v487
        %v496 = vmul.f32 %v458, %v487
        %v497 = vmul.f32 %v459, %v487
        %v498 = vmul.f32 %v460, %v487
        %v499 = vmul.f32 %v461, %v487
        %v500 = vmul.f32 %v462, %v487
        %v501 = vmul.f32 %v463, %v487
        %v502 = vmul.f32 %v464, %v487
        %v503 = vmul.f32 %v465, %v487
        %v504 = vmul.f32 %v466, %v487
        %v505 = vmul.f32 %v467, %v487
        %v506 = vmul.f32 %v468, %v487
        %v507 = vmul.f32 %v469, %v487
        %v508 = vmul.f32 %v470, %v487
        %v509 = vmul.f32 %v471, %v487
        %v510 = vmul.f32 %v472, %v487
        %v511 = vmul.f32 %v473, %v487
        %v512 = vmul.f32 %v474, %v487
        %v513 = vmul.f32 %v475, %v487
        %v514 = vmul.f32 %v476, %v487
        %v515 = vmul.f32 %v477, %v487
        %v516 = vmul.f32 %v478, %v487
        %v517 = vmul.f32 %v479, %v487
        %v518 = vmul.f32 %v480, %v487
        %v519 = vmul.f32 %v481, %v487
        %v520 = vmul.f32 %v482, %v487
        %v521 = vpack.c.bf16 %v490, %v489
        %v522 = vpack.c.bf16 %v492, %v491
        %v523 = vpack.c.bf16 %v494, %v493
        %v524 = vpack.c.bf16 %v496, %v495
        %v525 = vpack.c.bf16 %v498, %v497
        %v526 = vpack.c.bf16 %v500, %v499
        %v527 = vpack.c.bf16 %v502, %v501
        %v528 = vpack.c.bf16 %v504, %v503
        %v529 = vpack.c.bf16 %v506, %v505
        %v530 = vpack.c.bf16 %v508, %v507
        %v531 = vpack.c.bf16 %v510, %v509
        %v532 = vpack.c.bf16 %v512, %v511
        %v533 = vpack.c.bf16 %v514, %v513
        %v534 = vpack.c.bf16 %v516, %v515
        %v535 = vpack.c.bf16 %v518, %v517
        %v536 = vpack.c.bf16 %v520, %v519
        %v553 = vunpack.c.l.b16 %v521
        %v554 = vunpack.c.h.b16 %v521
        %v555 = vunpack.c.l.b16 %v522
        %v556 = vunpack.c.h.b16 %v522
        %v557 = vunpack.c.l.b16 %v523
        %v558 = vunpack.c.h.b16 %v523
        %v559 = vunpack.c.l.b16 %v524
        %v560 = vunpack.c.h.b16 %v524
        %v561 = vunpack.c.l.b16 %v525
        %v562 = vunpack.c.h.b16 %v525
        %v563 = vunpack.c.l.b16 %v526
        %v564 = vunpack.c.h.b16 %v526
        %v565 = vunpack.c.l.b16 %v527
        %v566 = vunpack.c.h.b16 %v527
        %v567 = vunpack.c.l.b16 %v528
        %v568 = vunpack.c.h.b16 %v528
        %v569 = vunpack.c.l.b16 %v529
        %v570 = vunpack.c.h.b16 %v529
        %v571 = vunpack.c.l.b16 %v530
        %v572 = vunpack.c.h.b16 %v530
        %v573 = vunpack.c.l.b16 %v531
        %v574 = vunpack.c.h.b16 %v531
        %v575 = vunpack.c.l.b16 %v532
        %v576 = vunpack.c.h.b16 %v532
        %v577 = vunpack.c.l.b16 %v533
        %v578 = vunpack.c.h.b16 %v533
        %v579 = vunpack.c.l.b16 %v534
        %v580 = vunpack.c.h.b16 %v534
        %v581 = vunpack.c.l.b16 %v535
        %v582 = vunpack.c.h.b16 %v535
        %v583 = vunpack.c.l.b16 %v536
        %v584 = vunpack.c.h.b16 %v536
        %v585 = vpack.c.b16 %v553, %v553
        %v586 = vpack.c.b16 %v554, %v554
        %v587 = vpack.c.b16 %v555, %v555
        %v588 = vpack.c.b16 %v556, %v556
        %v589 = vpack.c.b16 %v557, %v557
        %v590 = vpack.c.b16 %v558, %v558
        %v591 = vpack.c.b16 %v559, %v559
        %v592 = vpack.c.b16 %v560, %v560
        %v593 = vpack.c.b16 %v561, %v561
        %v594 = vpack.c.b16 %v562, %v562
        %v595 = vpack.c.b16 %v563, %v563
        %v596 = vpack.c.b16 %v564, %v564
        %v597 = vpack.c.b16 %v565, %v565
        %v598 = vpack.c.b16 %v566, %v566
        %v599 = vpack.c.b16 %v567, %v567
        %v600 = vpack.c.b16 %v568, %v568
        %v601 = vpack.c.b16 %v569, %v569
        %v602 = vpack.c.b16 %v570, %v570
        %v603 = vpack.c.b16 %v571, %v571
        %v604 = vpack.c.b16 %v572, %v572
        %v605 = vpack.c.b16 %v573, %v573
        %v606 = vpack.c.b16 %v574, %v574
        %v607 = vpack.c.b16 %v575, %v575
        %v608 = vpack.c.b16 %v576, %v576
        %v609 = vpack.c.b16 %v577, %v577
        %v610 = vpack.c.b16 %v578, %v578
        %v611 = vpack.c.b16 %v579, %v579
        %v612 = vpack.c.b16 %v580, %v580
        %v613 = vpack.c.b16 %v581, %v581
        %v614 = vpack.c.b16 %v582, %v582
        %v615 = vpack.c.b16 %v583, %v583
        %v616 = vpack.c.b16 %v584, %v584
        %vm649 = vcmask 19456
        %650 = vst.msk [vmem:[%s307] sm:$0xf] %vm649, %v585
        %651 = vst.msk [vmem:[%s307 + $0x4] sm:$0xf] %vm649, %v586
        %652 = vst.msk [vmem:[%s307 + $0x8] sm:$0xf] %vm649, %v587
        %653 = vst.msk [vmem:[%s307 + $0xc] sm:$0xf] %vm649, %v588
        %654 = vst.msk [vmem:[%s307 + $0x10] sm:$0xf] %vm649, %v589
        %655 = vst.msk [vmem:[%s307 + $0x14] sm:$0xf] %vm649, %v590
        %656 = vst.msk [vmem:[%s307 + $0x18] sm:$0xf] %vm649, %v591
        %657 = vst.msk [vmem:[%s307 + $0x1c] sm:$0xf] %vm649, %v592
        %658 = vst.msk [vmem:[%s307 + $0x20] sm:$0xf] %vm649, %v593
        %659 = vst.msk [vmem:[%s307 + $0x24] sm:$0xf] %vm649, %v594
        %660 = vst.msk [vmem:[%s307 + $0x28] sm:$0xf] %vm649, %v595
        %661 = vst.msk [vmem:[%s307 + $0x2c] sm:$0xf] %vm649, %v596
        %662 = vst.msk [vmem:[%s307 + $0x30] sm:$0xf] %vm649, %v597
        %663 = vst.msk [vmem:[%s307 + $0x34] sm:$0xf] %vm649, %v598
        %664 = vst.msk [vmem:[%s307 + $0x38] sm:$0xf] %vm649, %v599
        %665 = vst.msk [vmem:[%s307 + $0x3c] sm:$0xf] %vm649, %v600
        %666 = vst.msk [vmem:[%s307 + $0x40] sm:$0xf] %vm649, %v601
        %667 = vst.msk [vmem:[%s307 + $0x44] sm:$0xf] %vm649, %v602
        %668 = vst.msk [vmem:[%s307 + $0x48] sm:$0xf] %vm649, %v603
        %669 = vst.msk [vmem:[%s307 + $0x4c] sm:$0xf] %vm649, %v604
        %670 = vst.msk [vmem:[%s307 + $0x50] sm:$0xf] %vm649, %v605
        %671 = vst.msk [vmem:[%s307 + $0x54] sm:$0xf] %vm649, %v606
        %672 = vst.msk [vmem:[%s307 + $0x58] sm:$0xf] %vm649, %v607
        %673 = vst.msk [vmem:[%s307 + $0x5c] sm:$0xf] %vm649, %v608
        %674 = vst.msk [vmem:[%s307 + $0x60] sm:$0xf] %vm649, %v609
        %675 = vst.msk [vmem:[%s307 + $0x64] sm:$0xf] %vm649, %v610
        %676 = vst.msk [vmem:[%s307 + $0x68] sm:$0xf] %vm649, %v611
        %677 = vst.msk [vmem:[%s307 + $0x6c] sm:$0xf] %vm649, %v612
        %678 = vst.msk [vmem:[%s307 + $0x70] sm:$0xf] %vm649, %v613
        %679 = vst.msk [vmem:[%s307 + $0x74] sm:$0xf] %vm649, %v614
        %680 = vst.msk [vmem:[%s307 + $0x78] sm:$0xf] %vm649, %v615
        %681 = vst.msk [vmem:[%s307 + $0x7c] sm:$0xf] %vm649, %v616
        %v682 = vadd.f32 %v347, 1.0
        %v683 = vadd.f32 %v348, 1.0
        %v684 = vadd.f32 %v349, 1.0
        %v685 = vadd.f32 %v350, 1.0
        %v686 = vadd.f32 %v351, 1.0
        %v687 = vadd.f32 %v352, 1.0
        %v688 = vadd.f32 %v353, 1.0
        %v689 = vadd.f32 %v354, 1.0
        %v690 = vadd.f32 %v355, 1.0
        %v691 = vadd.f32 %v356, 1.0
        %v692 = vadd.f32 %v357, 1.0
        %v693 = vadd.f32 %v358, 1.0
        %v694 = vadd.f32 %v359, 1.0
        %v695 = vadd.f32 %v360, 1.0
        %v696 = vadd.f32 %v361, 1.0
        %v697 = vadd.f32 %v362, 1.0
        %v698 = vadd.f32 %v363, 1.0
        %v699 = vadd.f32 %v364, 1.0
        %v700 = vadd.f32 %v365, 1.0
        %v701 = vadd.f32 %v366, 1.0
        %v702 = vadd.f32 %v367, 1.0
        %v703 = vadd.f32 %v368, 1.0
        %v704 = vadd.f32 %v369, 1.0
        %v705 = vadd.f32 %v370, 1.0
        %v706 = vadd.f32 %v371, 1.0
        %v707 = vadd.f32 %v372, 1.0
        %v708 = vadd.f32 %v373, 1.0
        %v709 = vadd.f32 %v374, 1.0
        %v710 = vadd.f32 %v375, 1.0
        %v711 = vadd.f32 %v376, 1.0
        %v712 = vadd.f32 %v377, 1.0
        %v713 = vadd.f32 %v378, 1.0
        %v714 = vmul.f32 %v682, 0.5
        %v715 = vmul.f32 %v683, 0.5
        %v716 = vmul.f32 %v684, 0.5
        %v717 = vmul.f32 %v685, 0.5
        %v718 = vmul.f32 %v686, 0.5
        %v719 = vmul.f32 %v687, 0.5
        %v720 = vmul.f32 %v688, 0.5
        %v721 = vmul.f32 %v689, 0.5
        %v722 = vmul.f32 %v690, 0.5
        %v723 = vmul.f32 %v691, 0.5
        %v724 = vmul.f32 %v692, 0.5
        %v725 = vmul.f32 %v693, 0.5
        %v726 = vmul.f32 %v694, 0.5
        %v727 = vmul.f32 %v695, 0.5
        %v728 = vmul.f32 %v696, 0.5
        %v729 = vmul.f32 %v697, 0.5
        %v730 = vmul.f32 %v698, 0.5
        %v731 = vmul.f32 %v699, 0.5
        %v732 = vmul.f32 %v700, 0.5
        %v733 = vmul.f32 %v701, 0.5
        %v734 = vmul.f32 %v702, 0.5
        %v735 = vmul.f32 %v703, 0.5
        %v736 = vmul.f32 %v704, 0.5
        %v737 = vmul.f32 %v705, 0.5
        %v738 = vmul.f32 %v706, 0.5
        %v739 = vmul.f32 %v707, 0.5
        %v740 = vmul.f32 %v708, 0.5
        %v741 = vmul.f32 %v709, 0.5
        %v742 = vmul.f32 %v710, 0.5
        %v743 = vmul.f32 %v711, 0.5
        %v744 = vmul.f32 %v712, 0.5
        %v745 = vmul.f32 %v713, 0.5
        %v746 = vsub.f32 %v714, %v449
        %v747 = vsub.f32 %v715, %v449
        %v748 = vsub.f32 %v716, %v449
        %v749 = vsub.f32 %v717, %v449
        %v750 = vsub.f32 %v718, %v449
        %v751 = vsub.f32 %v719, %v449
        %v752 = vsub.f32 %v720, %v449
        %v753 = vsub.f32 %v721, %v449
        %v754 = vsub.f32 %v722, %v449
        %v755 = vsub.f32 %v723, %v449
        %v756 = vsub.f32 %v724, %v449
        %v757 = vsub.f32 %v725, %v449
        %v758 = vsub.f32 %v726, %v449
        %v759 = vsub.f32 %v727, %v449
        %v760 = vsub.f32 %v728, %v449
        %v761 = vsub.f32 %v729, %v449
        %v762 = vsub.f32 %v730, %v449
        %v763 = vsub.f32 %v731, %v449
        %v764 = vsub.f32 %v732, %v449
        %v765 = vsub.f32 %v733, %v449
        %v766 = vsub.f32 %v734, %v449
        %v767 = vsub.f32 %v735, %v449
        %v768 = vsub.f32 %v736, %v449
        %v769 = vsub.f32 %v737, %v449
        %v770 = vsub.f32 %v738, %v449
        %v771 = vsub.f32 %v739, %v449
        %v772 = vsub.f32 %v740, %v449
        %v773 = vsub.f32 %v741, %v449
        %v774 = vsub.f32 %v742, %v449
        %v775 = vsub.f32 %v743, %v449
        %v776 = vsub.f32 %v744, %v449
        %v777 = vsub.f32 %v745, %v449
        %v778 = vmul.f32 %v746, %v487
        %v779 = vmul.f32 %v747, %v487
        %v780 = vmul.f32 %v748, %v487
        %v781 = vmul.f32 %v749, %v487
        %v782 = vmul.f32 %v750, %v487
        %v783 = vmul.f32 %v751, %v487
        %v784 = vmul.f32 %v752, %v487
        %v785 = vmul.f32 %v753, %v487
        %v786 = vmul.f32 %v754, %v487
        %v787 = vmul.f32 %v755, %v487
        %v788 = vmul.f32 %v756, %v487
        %v789 = vmul.f32 %v757, %v487
        %v790 = vmul.f32 %v758, %v487
        %v791 = vmul.f32 %v759, %v487
        %v792 = vmul.f32 %v760, %v487
        %v793 = vmul.f32 %v761, %v487
        %v794 = vmul.f32 %v762, %v487
        %v795 = vmul.f32 %v763, %v487
        %v796 = vmul.f32 %v764, %v487
        %v797 = vmul.f32 %v765, %v487
        %v798 = vmul.f32 %v766, %v487
        %v799 = vmul.f32 %v767, %v487
        %v800 = vmul.f32 %v768, %v487
        %v801 = vmul.f32 %v769, %v487
        %v802 = vmul.f32 %v770, %v487
        %v803 = vmul.f32 %v771, %v487
        %v804 = vmul.f32 %v772, %v487
        %v805 = vmul.f32 %v773, %v487
        %v806 = vmul.f32 %v774, %v487
        %v807 = vmul.f32 %v775, %v487
        %v808 = vmul.f32 %v776, %v487
        %v809 = vmul.f32 %v777, %v487
        %v810 = vpack.c.bf16 %v779, %v778
        %v811 = vpack.c.bf16 %v781, %v780
        %v812 = vpack.c.bf16 %v783, %v782
        %v813 = vpack.c.bf16 %v785, %v784
        %v814 = vpack.c.bf16 %v787, %v786
        %v815 = vpack.c.bf16 %v789, %v788
        %v816 = vpack.c.bf16 %v791, %v790
        %v817 = vpack.c.bf16 %v793, %v792
        %v818 = vpack.c.bf16 %v795, %v794
        %v819 = vpack.c.bf16 %v797, %v796
        %v820 = vpack.c.bf16 %v799, %v798
        %v821 = vpack.c.bf16 %v801, %v800
        %v822 = vpack.c.bf16 %v803, %v802
        %v823 = vpack.c.bf16 %v805, %v804
        %v824 = vpack.c.bf16 %v807, %v806
        %v825 = vpack.c.bf16 %v809, %v808
        %v842 = vunpack.c.l.b16 %v810
        %v843 = vunpack.c.h.b16 %v810
        %v844 = vunpack.c.l.b16 %v811
        %v845 = vunpack.c.h.b16 %v811
        %v846 = vunpack.c.l.b16 %v812
        %v847 = vunpack.c.h.b16 %v812
        %v848 = vunpack.c.l.b16 %v813
        %v849 = vunpack.c.h.b16 %v813
        %v850 = vunpack.c.l.b16 %v814
        %v851 = vunpack.c.h.b16 %v814
        %v852 = vunpack.c.l.b16 %v815
        %v853 = vunpack.c.h.b16 %v815
        %v854 = vunpack.c.l.b16 %v816
        %v855 = vunpack.c.h.b16 %v816
        %v856 = vunpack.c.l.b16 %v817
        %v857 = vunpack.c.h.b16 %v817
        %v858 = vunpack.c.l.b16 %v818
        %v859 = vunpack.c.h.b16 %v818
        %v860 = vunpack.c.l.b16 %v819
        %v861 = vunpack.c.h.b16 %v819
        %v862 = vunpack.c.l.b16 %v820
        %v863 = vunpack.c.h.b16 %v820
        %v864 = vunpack.c.l.b16 %v821
        %v865 = vunpack.c.h.b16 %v821
        %v866 = vunpack.c.l.b16 %v822
        %v867 = vunpack.c.h.b16 %v822
        %v868 = vunpack.c.l.b16 %v823
        %v869 = vunpack.c.h.b16 %v823
        %v870 = vunpack.c.l.b16 %v824
        %v871 = vunpack.c.h.b16 %v824
        %v872 = vunpack.c.l.b16 %v825
        %v873 = vunpack.c.h.b16 %v825
        %v874 = vpack.c.b16 %v842, %v842
        %v875 = vpack.c.b16 %v843, %v843
        %v876 = vpack.c.b16 %v844, %v844
        %v877 = vpack.c.b16 %v845, %v845
        %v878 = vpack.c.b16 %v846, %v846
        %v879 = vpack.c.b16 %v847, %v847
        %v880 = vpack.c.b16 %v848, %v848
        %v881 = vpack.c.b16 %v849, %v849
        %v882 = vpack.c.b16 %v850, %v850
        %v883 = vpack.c.b16 %v851, %v851
        %v884 = vpack.c.b16 %v852, %v852
        %v885 = vpack.c.b16 %v853, %v853
        %v886 = vpack.c.b16 %v854, %v854
        %v887 = vpack.c.b16 %v855, %v855
        %v888 = vpack.c.b16 %v856, %v856
        %v889 = vpack.c.b16 %v857, %v857
        %v890 = vpack.c.b16 %v858, %v858
        %v891 = vpack.c.b16 %v859, %v859
        %v892 = vpack.c.b16 %v860, %v860
        %v893 = vpack.c.b16 %v861, %v861
        %v894 = vpack.c.b16 %v862, %v862
        %v895 = vpack.c.b16 %v863, %v863
        %v896 = vpack.c.b16 %v864, %v864
        %v897 = vpack.c.b16 %v865, %v865
        %v898 = vpack.c.b16 %v866, %v866
        %v899 = vpack.c.b16 %v867, %v867
        %v900 = vpack.c.b16 %v868, %v868
        %v901 = vpack.c.b16 %v869, %v869
        %v902 = vpack.c.b16 %v870, %v870
        %v903 = vpack.c.b16 %v871, %v871
        %v904 = vpack.c.b16 %v872, %v872
        %v905 = vpack.c.b16 %v873, %v873
        %938 = vst.msk [vmem:[%s313] sm:$0xf] %vm649, %v874
        %939 = vst.msk [vmem:[%s313 + $0x4] sm:$0xf] %vm649, %v875
        %940 = vst.msk [vmem:[%s313 + $0x8] sm:$0xf] %vm649, %v876
        %941 = vst.msk [vmem:[%s313 + $0xc] sm:$0xf] %vm649, %v877
        %942 = vst.msk [vmem:[%s313 + $0x10] sm:$0xf] %vm649, %v878
        %943 = vst.msk [vmem:[%s313 + $0x14] sm:$0xf] %vm649, %v879
        %944 = vst.msk [vmem:[%s313 + $0x18] sm:$0xf] %vm649, %v880
        %945 = vst.msk [vmem:[%s313 + $0x1c] sm:$0xf] %vm649, %v881
        %946 = vst.msk [vmem:[%s313 + $0x20] sm:$0xf] %vm649, %v882
        %947 = vst.msk [vmem:[%s313 + $0x24] sm:$0xf] %vm649, %v883
        %948 = vst.msk [vmem:[%s313 + $0x28] sm:$0xf] %vm649, %v884
        %949 = vst.msk [vmem:[%s313 + $0x2c] sm:$0xf] %vm649, %v885
        %950 = vst.msk [vmem:[%s313 + $0x30] sm:$0xf] %vm649, %v886
        %951 = vst.msk [vmem:[%s313 + $0x34] sm:$0xf] %vm649, %v887
        %952 = vst.msk [vmem:[%s313 + $0x38] sm:$0xf] %vm649, %v888
        %953 = vst.msk [vmem:[%s313 + $0x3c] sm:$0xf] %vm649, %v889
        %954 = vst.msk [vmem:[%s313 + $0x40] sm:$0xf] %vm649, %v890
        %955 = vst.msk [vmem:[%s313 + $0x44] sm:$0xf] %vm649, %v891
        %956 = vst.msk [vmem:[%s313 + $0x48] sm:$0xf] %vm649, %v892
        %957 = vst.msk [vmem:[%s313 + $0x4c] sm:$0xf] %vm649, %v893
        %958 = vst.msk [vmem:[%s313 + $0x50] sm:$0xf] %vm649, %v894
        %959 = vst.msk [vmem:[%s313 + $0x54] sm:$0xf] %vm649, %v895
        %960 = vst.msk [vmem:[%s313 + $0x58] sm:$0xf] %vm649, %v896
        %961 = vst.msk [vmem:[%s313 + $0x5c] sm:$0xf] %vm649, %v897
        %962 = vst.msk [vmem:[%s313 + $0x60] sm:$0xf] %vm649, %v898
        %963 = vst.msk [vmem:[%s313 + $0x64] sm:$0xf] %vm649, %v899
        %964 = vst.msk [vmem:[%s313 + $0x68] sm:$0xf] %vm649, %v900
        %965 = vst.msk [vmem:[%s313 + $0x6c] sm:$0xf] %vm649, %v901
        %966 = vst.msk [vmem:[%s313 + $0x70] sm:$0xf] %vm649, %v902
        %967 = vst.msk [vmem:[%s313 + $0x74] sm:$0xf] %vm649, %v903
        %968 = vst.msk [vmem:[%s313 + $0x78] sm:$0xf] %vm649, %v904
        %969 = vst.msk [vmem:[%s313 + $0x7c] sm:$0xf] %vm649, %v905
        %v970 = vsub.f32 %v315, %v347
        %v971 = vsub.f32 %v316, %v348
        %v972 = vsub.f32 %v317, %v349
        %v973 = vsub.f32 %v318, %v350
        %v974 = vsub.f32 %v319, %v351
        %v975 = vsub.f32 %v320, %v352
        %v976 = vsub.f32 %v321, %v353
        %v977 = vsub.f32 %v322, %v354
        %v978 = vsub.f32 %v323, %v355
        %v979 = vsub.f32 %v324, %v356
        %v980 = vsub.f32 %v325, %v357
        %v981 = vsub.f32 %v326, %v358
        %v982 = vsub.f32 %v327, %v359
        %v983 = vsub.f32 %v328, %v360
        %v984 = vsub.f32 %v329, %v361
        %v985 = vsub.f32 %v330, %v362
        %v986 = vsub.f32 %v331, %v363
        %v987 = vsub.f32 %v332, %v364
        %v988 = vsub.f32 %v333, %v365
        %v989 = vsub.f32 %v334, %v366
        %v990 = vsub.f32 %v335, %v367
        %v991 = vsub.f32 %v336, %v368
        %v992 = vsub.f32 %v337, %v369
        %v993 = vsub.f32 %v338, %v370
        %v994 = vsub.f32 %v339, %v371
        %v995 = vsub.f32 %v340, %v372
        %v996 = vsub.f32 %v341, %v373
        %v997 = vsub.f32 %v342, %v374
        %v998 = vsub.f32 %v343, %v375
        %v999 = vsub.f32 %v344, %v376
        %v1000 = vsub.f32 %v345, %v377
        %v1001 = vsub.f32 %v346, %v378
        %v1002 = vand.u32 2147483647, %v970
        %v1003 = vand.u32 2147483647, %v971
        %v1004 = vand.u32 2147483647, %v972
        %v1005 = vand.u32 2147483647, %v973
        %v1006 = vand.u32 2147483647, %v974
        %v1007 = vand.u32 2147483647, %v975
        %v1008 = vand.u32 2147483647, %v976
        %v1009 = vand.u32 2147483647, %v977
        %v1010 = vand.u32 2147483647, %v978
        %v1011 = vand.u32 2147483647, %v979
        %v1012 = vand.u32 2147483647, %v980
        %v1013 = vand.u32 2147483647, %v981
        %v1014 = vand.u32 2147483647, %v982
        %v1015 = vand.u32 2147483647, %v983
        %v1016 = vand.u32 2147483647, %v984
        %v1017 = vand.u32 2147483647, %v985
        %v1018 = vand.u32 2147483647, %v986
        %v1019 = vand.u32 2147483647, %v987
        %v1020 = vand.u32 2147483647, %v988
        %v1021 = vand.u32 2147483647, %v989
        %v1022 = vand.u32 2147483647, %v990
        %v1023 = vand.u32 2147483647, %v991
        %v1024 = vand.u32 2147483647, %v992
        %v1025 = vand.u32 2147483647, %v993
        %v1026 = vand.u32 2147483647, %v994
        %v1027 = vand.u32 2147483647, %v995
        %v1028 = vand.u32 2147483647, %v996
        %v1029 = vand.u32 2147483647, %v997
        %v1030 = vand.u32 2147483647, %v998
        %v1031 = vand.u32 2147483647, %v999
        %v1032 = vand.u32 2147483647, %v1000
        %v1033 = vand.u32 2147483647, %v1001
        %vm1034 = vcmask 23552
        %v1035 = vsel %vm1034, %v1002, 0.0
        %v1036 = vsel %vm1034, %v1003, 0.0
        %v1037 = vadd.f32 %v1035, %v1036
        %v1038 = vsel %vm1034, %v1004, 0.0
        %v1039 = vadd.f32 %v1037, %v1038
        %v1040 = vsel %vm1034, %v1005, 0.0
        %v1041 = vadd.f32 %v1039, %v1040
        %v1042 = vsel %vm1034, %v1006, 0.0
        %v1043 = vadd.f32 %v1041, %v1042
        %v1044 = vsel %vm1034, %v1007, 0.0
        %v1045 = vadd.f32 %v1043, %v1044
        %v1046 = vsel %vm1034, %v1008, 0.0
        %v1047 = vadd.f32 %v1045, %v1046
        %v1048 = vsel %vm1034, %v1009, 0.0
        %v1049 = vadd.f32 %v1047, %v1048
        %v1050 = vsel %vm1034, %v1010, 0.0
        %v1051 = vadd.f32 %v1049, %v1050
        %v1052 = vsel %vm1034, %v1011, 0.0
        %v1053 = vadd.f32 %v1051, %v1052
        %v1054 = vsel %vm1034, %v1012, 0.0
        %v1055 = vadd.f32 %v1053, %v1054
        %v1056 = vsel %vm1034, %v1013, 0.0
        %v1057 = vadd.f32 %v1055, %v1056
        %v1058 = vsel %vm1034, %v1014, 0.0
        %v1059 = vadd.f32 %v1057, %v1058
        %v1060 = vsel %vm1034, %v1015, 0.0
        %v1061 = vadd.f32 %v1059, %v1060
        %v1062 = vsel %vm1034, %v1016, 0.0
        %v1063 = vadd.f32 %v1061, %v1062
        %v1064 = vsel %vm1034, %v1017, 0.0
        %v1065 = vadd.f32 %v1063, %v1064
        %v1066 = vsel %vm1034, %v1018, 0.0
        %v1067 = vadd.f32 %v1065, %v1066
        %v1068 = vsel %vm1034, %v1019, 0.0
        %v1069 = vadd.f32 %v1067, %v1068
        %v1070 = vsel %vm1034, %v1020, 0.0
        %v1071 = vadd.f32 %v1069, %v1070
        %v1072 = vsel %vm1034, %v1021, 0.0
        %v1073 = vadd.f32 %v1071, %v1072
        %v1074 = vsel %vm1034, %v1022, 0.0
        %v1075 = vadd.f32 %v1073, %v1074
        %v1076 = vsel %vm1034, %v1023, 0.0
        %v1077 = vadd.f32 %v1075, %v1076
        %v1078 = vsel %vm1034, %v1024, 0.0
        %v1079 = vadd.f32 %v1077, %v1078
        %v1080 = vsel %vm1034, %v1025, 0.0
        %v1081 = vadd.f32 %v1079, %v1080
        %v1082 = vsel %vm1034, %v1026, 0.0
        %v1083 = vadd.f32 %v1081, %v1082
        %v1084 = vsel %vm1034, %v1027, 0.0
        %v1085 = vadd.f32 %v1083, %v1084
        %v1086 = vsel %vm1034, %v1028, 0.0
        %v1087 = vadd.f32 %v1085, %v1086
        %v1088 = vsel %vm1034, %v1029, 0.0
        %v1089 = vadd.f32 %v1087, %v1088
        %v1090 = vsel %vm1034, %v1030, 0.0
        %v1091 = vadd.f32 %v1089, %v1090
        %v1092 = vsel %vm1034, %v1031, 0.0
        %v1093 = vadd.f32 %v1091, %v1092
        %v1094 = vsel %vm1034, %v1032, 0.0
        %v1095 = vadd.f32 %v1093, %v1094
        %v1096 = vsel %vm1034, %v1033, 0.0
        %v1097 = vadd.f32 %v1095, %v1096
        %1098 = vadd.xlane.f32.xlu0 %v1097
        %v1099 = vpop.xlane.xlu0 %1098
        %v1100 = vrot.slane %v1099, 4
        %v1101 = vadd.f32 %v1099, %v1100
        %v1102 = vrot.slane %v1101, 2
        %v1103 = vadd.f32 %v1101, %v1102
        %v1104 = vrot.slane %v1103, 1
        %v1105 = vadd.f32 %v1103, %v1104
        %s1106 = vtos %v1105
        %v1107 = vstv %s1106
        %p1108 = scmp.eq.s32.totalorder %s21, 0
        // Predicated region
        $region45: #{l1_plus_perceptual_forward.3} parent=35 // pred_check
          %p1109 = pneg %p1108
        $region46: #{l1_plus_perceptual_forward.3} parent=35 // pred_check_branch
          %1111 = sbr.rel (%p1109) target = $region48
        $region47: #{l1_plus_perceptual_forward.3} parent=35 // pred_region
          %vm1112 = vcmask 0
          %1113 = vst.msk [vmem:[#allocation7] sm:$0x1] %vm1112, 0.0
        $region48: #{l1_plus_perceptual_forward.3} parent=35 // pred_fallthru
          _
        %v1114 = vld [vmem:[#allocation7] sm:$0x1]
        %v1115 = vadd.f32 %v1114, %v1107
        %vm1116 = vcmask 0
        %1117 = vst.msk [vmem:[#allocation7] sm:$0x1] %vm1116, %v1115
        %s1118 = smul.u32 32, %s21
        %p1119 = scmp.lt.s32.totalorder %s1118, 63
        %s1120 = scalar_select %p1119, %s1118, 63
        %s1121 = smul.addr %s1120, 4
        %s1122 = scalar_lea.vmem %s4, %s1121
        %s1123 = smul.u32 32, %s21
        %p1124 = scmp.lt.s32.totalorder %s1123, 63
        %s1125 = scalar_select %p1124, %s1123, 63
        %s1126 = smul.addr %s1125, 4
        %s1127 = scalar_lea.vmem %s5, %s1126
        // Predicated region
        $region49: #{l1_plus_perceptual_forward.3} parent=35 // pred_check
          %p1128 = pneg %p133
        $region50: #{l1_plus_perceptual_forward.3} parent=35 // pred_check_branch
          %1130 = sbr.rel (%p1128) target = $region52
        $region51: #{l1_plus_perceptual_forward.3} parent=35 // pred_region
          %s1131 = smul.u32 32, %s21
        $region52: #{l1_plus_perceptual_forward.3} parent=35 // pred_fallthru
          _
        // Predicated region
        $region53: #{l1_plus_perceptual_forward.3} parent=35 // pred_check
          %p1132 = pneg %p159
        $region54: #{l1_plus_perceptual_forward.3} parent=35 // pred_check_branch
          %1134 = sbr.rel (%p1132) target = $region56
        $region55: #{l1_plus_perceptual_forward.3} parent=35 // pred_region
          %s1135 = smul.u32 32, %s21
        $region56: #{l1_plus_perceptual_forward.3} parent=35 // pred_fallthru
          _
        // Predicated region
        $region57: #{l1_plus_perceptual_forward.3} parent=35 // pred_check
          %p1136 = pneg %p180
        $region58: #{l1_plus_perceptual_forward.3} parent=35 // pred_check_branch
          %1138 = sbr.rel (%p1136) target = $region60
        $region59: #{l1_plus_perceptual_forward.3} parent=35 // pred_region
          %s1140 = ssub.s32 16, 16
          %1141 = vsyncadd [#allocation4], %s1140
          %s1143 = sshll.u32 [#allocation7], 4
          %s1144 = int_to_ptr.vmem [resolvable:$true] %s1143
          %1146 = dma.vmem_to_hbm [thread:$0]  %s1144, 16, %s6, [#allocation4]
        $region60: #{l1_plus_perceptual_forward.3} parent=35 // pred_fallthru
          _
        // Predicated region
        $region61: #{l1_plus_perceptual_forward.3} parent=35 // pred_check
          %p1147 = pneg %p180
        $region62: #{l1_plus_perceptual_forward.3} parent=35 // pred_check_branch
          %1149 = sbr.rel (%p1147) target = $region64
        $region63: #{l1_plus_perceptual_forward.3} parent=35 // pred_region
          %1150 = dma.done [#allocation4], 16
        $region64: #{l1_plus_perceptual_forward.3} parent=35 // pred_fallthru
          _
      $region36: #{l1_plus_perceptual_forward.3} parent=5 // pred_fallthru
        _
      %p1151 = scmp.le.s32.totalorder 2, %s16
      // Predicated region
      $region65: #{l1_plus_perceptual_forward.3} parent=5 // pred_check
        %p1152 = pneg %p1151
      $region66: #{l1_plus_perceptual_forward.3} parent=5 // pred_check_branch
        %1154 = sbr.rel (%p1152) target = $region68
      $region67: #{l1_plus_perceptual_forward.3} parent=5 // pred_region
        %s1155 = ssub.s32 %s16, 2
        // Predicated region
        $region69: #{l1_plus_perceptual_forward.3} parent=67 // pred_check
          %p1156 = pneg %p139
        $region70: #{l1_plus_perceptual_forward.3} parent=67 // pred_check_branch
          %1158 = sbr.rel (%p1156) target = $region72
        $region71: #{l1_plus_perceptual_forward.3} parent=67 // pred_region
          %s1159 = smul.u32 32, %s22
          %p1160 = scmp.lt.s32.totalorder %s1159, 63
          %s1161 = scalar_select %p1160, %s1159, 63
          %s1162 = smul.addr %s1161, 4
          %s1163 = scalar_lea.vmem %s4, %s1162
        $region72: #{l1_plus_perceptual_forward.3} parent=67 // pred_fallthru
          _
        // Predicated region
        $region73: #{l1_plus_perceptual_forward.3} parent=67 // pred_check
          %p1164 = pneg %p165
        $region74: #{l1_plus_perceptual_forward.3} parent=67 // pred_check_branch
          %1166 = sbr.rel (%p1164) target = $region76
        $region75: #{l1_plus_perceptual_forward.3} parent=67 // pred_region
          %s1167 = smul.u32 32, %s22
          %p1168 = scmp.lt.s32.totalorder %s1167, 63
          %s1169 = scalar_select %p1168, %s1167, 63
          %s1170 = smul.addr %s1169, 4
          %s1171 = scalar_lea.vmem %s5, %s1170
        $region76: #{l1_plus_perceptual_forward.3} parent=67 // pred_fallthru
          _
      $region68: #{l1_plus_perceptual_forward.3} parent=5 // pred_fallthru
        _
    $region6: #{l1_plus_perceptual_forward.3} parent=1 // loop_footer
      %s20 = sadd.s32 1, %s16
    $region7: #{l1_plus_perceptual_forward.3} parent=1 // loop_footer_branch
      %15 = sbr.rel target = $region3
    $region8: #{l1_plus_perceptual_forward.3} parent=1 // loop_exit
      _
    %1172 = vsyncpa [#allocation3], 1
    %s1173 = scalar_lea.sflag [#allocation3], 1
    %1174 = vsyncpa %s1173, 1
    %1175 = vsyncpa [#allocation6], 1
    %1176 = vsyncpa [#allocation4], 1
    %s1177 = scalar_lea.sflag [#allocation4], 1
    %1178 = vsyncpa %s1177, 1

// kernel: l1_plus_perceptual_forward.4
$region0: #{l1_plus_perceptual_forward.4}
  #allocation0 [shape = 'u32[]', space=smem, size = 0x4, offset = 0x4, fixed_abs, tag = 'smem constant byte address 0x4 - core index']
  #allocation1 [shape = 'u32[144,128]{1,0:T(1,128)}', space=vmem, size = 0x12000, scoped, tag = 'internal scratch']
  %s0 = inlined_call_operand.vmem [shape: bf16[1024,27], index: 0, kind: input, shape index: {}]
  %s1 = inlined_call_operand.vmem [shape: bf16[27,64], index: 1, kind: input, shape index: {}]
  %s2 = inlined_call_operand.vmem [shape: f32[1,64], index: 2, kind: input, shape index: {}]
  %s3 = inlined_call_operand.vmem [shape: bf16[1024,64], index: 3, kind: output, shape index: {}]
  %s4 = sld [smem:[#allocation0]]
  $region45: #{l1_plus_perceptual_forward.4} parent=0
    _
  %s6 = ssub.s32 1, %s4
  %s7 = scalar_select 0, %s6, %s4
  loop: start=0, step=1, limit=4
  $region2: #{l1_plus_perceptual_forward.4} parent=0 // loop_pre_header
    _
  $region3: #{l1_plus_perceptual_forward.4} parent=0 // loop_header
    %s9 = sphi 0, %s13
    %p10 = scmp.ge.s32.totalorder %s9, 4
    %s19 = sphi 0, %s21
    %s22 = sphi 0, %s19
    %s23 = sphi 0, %s22
    %s39 = sphi 0, %s23
    %s43 = sphi 0, %s43
    %s45 = sphi 0, %s43
    %s46 = sphi 0, %s45
    %s60 = sphi 0, %s46
    %s64 = sphi 0, %s64
    %s66 = sphi 0, %s64
    %s67 = sphi 0, %s66
    %s81 = sphi 0, %s67
    %s87 = sphi 0, %s89
    %s90 = sphi 0, %s87
    %s91 = sphi 0, %s90
    %s107 = sphi 0, %s91
  $region4: #{l1_plus_perceptual_forward.4} parent=0 // loop_header_branch
    %12 = sbr.rel (%p10) target = $region8
  $region5: #{l1_plus_perceptual_forward.4} parent=0 // loop_body
    %s14 = ssub.s32 %s9, 1
    %s15 = ssub.s32 %s9, 2
    %s16 = sadd.s32 %s9, 1
    %s17 = ssub.s32 %s9, %s16
    %p18 = scmp.eq.s32.totalorder %s17, 0
    %s20 = sadd.s32 %s19, 1
    %s21 = scalar_select %p18, %s19, %s20
    %p24 = pneg %p18
    %p25 = scmp.eq.s32.totalorder %s9, 1
    %p26 = por %p24, %p25
    %p27 = scmp.ne.s32.totalorder %s19, %s22
    %p28 = scmp.eq.s32.totalorder %s9, 0
    %p29 = por %p27, %p28
    %p30 = scmp.ne.s32.totalorder %s19, %s22
    %p31 = scmp.eq.s32.totalorder %s14, 1
    %p32 = por %p30, %p31
    %p33 = scmp.ne.s32.totalorder %s22, %s23
    %p34 = scmp.eq.s32.totalorder %s14, 0
    %p35 = por %p33, %p34
    %p36 = scmp.ne.s32.totalorder %s22, %s23
    %p37 = scmp.eq.s32.totalorder %s15, 1
    %p38 = por %p36, %p37
    %p40 = scmp.ne.s32.totalorder %s23, %s39
    %p41 = scmp.eq.s32.totalorder %s15, 0
    %p42 = por %p40, %p41
    %s44 = sadd.s32 %s43, 1
    %p47 = scmp.eq.s32.totalorder %s9, 1
    %p48 = scmp.ne.s32.totalorder %s43, %s45
    %p49 = scmp.eq.s32.totalorder %s9, 0
    %p50 = por %p48, %p49
    %p51 = scmp.ne.s32.totalorder %s43, %s45
    %p52 = scmp.eq.s32.totalorder %s14, 1
    %p53 = por %p51, %p52
    %p54 = scmp.ne.s32.totalorder %s45, %s46
    %p55 = scmp.eq.s32.totalorder %s14, 0
    %p56 = por %p54, %p55
    %p57 = scmp.ne.s32.totalorder %s45, %s46
    %p58 = scmp.eq.s32.totalorder %s15, 1
    %p59 = por %p57, %p58
    %p61 = scmp.ne.s32.totalorder %s46, %s60
    %p62 = scmp.eq.s32.totalorder %s15, 0
    %p63 = por %p61, %p62
    %s65 = sadd.s32 %s64, 1
    %p68 = scmp.eq.s32.totalorder %s9, 1
    %p69 = scmp.ne.s32.totalorder %s64, %s66
    %p70 = scmp.eq.s32.totalorder %s9, 0
    %p71 = por %p69, %p70
    %p72 = scmp.ne.s32.totalorder %s64, %s66
    %p73 = scmp.eq.s32.totalorder %s14, 1
    %p74 = por %p72, %p73
    %p75 = scmp.ne.s32.totalorder %s66, %s67
    %p76 = scmp.eq.s32.totalorder %s14, 0
    %p77 = por %p75, %p76
    %p78 = scmp.ne.s32.totalorder %s66, %s67
    %p79 = scmp.eq.s32.totalorder %s15, 1
    %p80 = por %p78, %p79
    %p82 = scmp.ne.s32.totalorder %s67, %s81
    %p83 = scmp.eq.s32.totalorder %s15, 0
    %p84 = por %p82, %p83
    %s85 = ssub.s32 %s9, %s16
    %p86 = scmp.eq.s32.totalorder %s85, 0
    %s88 = sadd.s32 %s87, 1
    %s89 = scalar_select %p86, %s87, %s88
    %p92 = pneg %p86
    %p93 = scmp.eq.s32.totalorder %s9, 1
    %p94 = por %p92, %p93
    %p95 = scmp.ne.s32.totalorder %s87, %s90
    %p96 = scmp.eq.s32.totalorder %s9, 0
    %p97 = por %p95, %p96
    %p98 = scmp.ne.s32.totalorder %s87, %s90
    %p99 = scmp.eq.s32.totalorder %s14, 1
    %p100 = por %p98, %p99
    %p101 = scmp.ne.s32.totalorder %s90, %s91
    %p102 = scmp.eq.s32.totalorder %s14, 0
    %p103 = por %p101, %p102
    %p104 = scmp.ne.s32.totalorder %s90, %s91
    %p105 = scmp.eq.s32.totalorder %s15, 1
    %p106 = por %p104, %p105
    %p108 = scmp.ne.s32.totalorder %s91, %s107
    %p109 = scmp.eq.s32.totalorder %s15, 0
    %p110 = por %p108, %p109
    %p111 = scmp.le.s32.totalorder 1, %s9
    %p112 = scmp.lt.s32.totalorder %s9, 3
    %p113 = pnand %p111, %p112
    %p114 = pneg %p113
    // Predicated region
    $region9: #{l1_plus_perceptual_forward.4} parent=5 // pred_check
      _
    $region10: #{l1_plus_perceptual_forward.4} parent=5 // pred_check_branch
      %116 = sbr.rel (%p113) target = $region12
    $region11: #{l1_plus_perceptual_forward.4} parent=5 // pred_region
      %s117 = ssub.s32 %s9, 1
      // Predicated region
      $region13: #{l1_plus_perceptual_forward.4} parent=11 // pred_check
        %p118 = pneg %p56
      $region14: #{l1_plus_perceptual_forward.4} parent=11 // pred_check_branch
        %120 = sbr.rel (%p118) target = $region16
      $region15: #{l1_plus_perceptual_forward.4} parent=11 // pred_region
        _
      $region16: #{l1_plus_perceptual_forward.4} parent=11 // pred_fallthru
        _
      // Predicated region
      $region17: #{l1_plus_perceptual_forward.4} parent=11 // pred_check
        %p121 = pneg %p77
      $region18: #{l1_plus_perceptual_forward.4} parent=11 // pred_check_branch
        %123 = sbr.rel (%p121) target = $region20
      $region19: #{l1_plus_perceptual_forward.4} parent=11 // pred_region
        _
      $region20: #{l1_plus_perceptual_forward.4} parent=11 // pred_fallthru
        _
    $region12: #{l1_plus_perceptual_forward.4} parent=5 // pred_fallthru
      _
    %p124 = scmp.lt.s32.totalorder %s9, 2
    // Predicated region
    $region21: #{l1_plus_perceptual_forward.4} parent=5 // pred_check
      %p125 = pneg %p124
    $region22: #{l1_plus_perceptual_forward.4} parent=5 // pred_check_branch
      %127 = sbr.rel (%p125) target = $region24
    $region23: #{l1_plus_perceptual_forward.4} parent=5 // pred_region
      // Predicated region
      $region25: #{l1_plus_perceptual_forward.4} parent=23 // pred_check
        %p128 = pneg %p29
      $region26: #{l1_plus_perceptual_forward.4} parent=23 // pred_check_branch
        %130 = sbr.rel (%p128) target = $region28
      $region27: #{l1_plus_perceptual_forward.4} parent=23 // pred_region
        %s131 = smul.u32 64, %s9
        %p132 = scmp.lt.s32.totalorder %s131, 127
        %s133 = scalar_select %p132, %s131, 127
        %s134 = smul.addr %s133, 4
        %s135 = scalar_lea.vmem %s0, %s134
        %s136 = smul.u32 64, %s9
      $region28: #{l1_plus_perceptual_forward.4} parent=23 // pred_fallthru
        _
    $region24: #{l1_plus_perceptual_forward.4} parent=5 // pred_fallthru
      _
    %p137 = scmp.le.s32.totalorder 1, %s9
    %p138 = scmp.lt.s32.totalorder %s9, 3
    %p139 = pnand %p137, %p138
    %p140 = pneg %p139
    // Predicated region
    $region29: #{l1_plus_perceptual_forward.4} parent=5 // pred_check
      _
    $region30: #{l1_plus_perceptual_forward.4} parent=5 // pred_check_branch
      %142 = sbr.rel (%p139) target = $region32
    $region31: #{l1_plus_perceptual_forward.4} parent=5 // pred_region
      %s143 = ssub.s32 %s9, 1
      %s144 = smul.u32 64, %s14
      %p145 = scmp.lt.s32.totalorder %s144, 127
      %s146 = scalar_select %p145, %s144, 127
      %s147 = smul.addr %s146, 4
      %s148 = scalar_lea.vmem %s0, %s147
      %p149 = pneg %p35
      %p150 = pneg %p32
      %p151 = pneg %p56
      %p152 = pneg %p53
      %p153 = pneg %p77
      %p154 = pneg %p74
      %p155 = pneg %p103
      %p156 = pneg %p100
      %s157 = smul.u32 64, %s14
      %p158 = scmp.lt.s32.totalorder %s157, 127
      %s159 = scalar_select %p158, %s157, 127
      %s160 = smul.addr %s159, 4
      %s161 = scalar_lea.vmem %s3, %s160
      %s162 = smul.u32 64, %s14
      %p163 = scmp.lt.s32.totalorder %s162, 127
      %s164 = scalar_select %p163, %s162, 127
      %s165 = smul.addr %s164, 4
      %s166 = scalar_lea.vmem %s0, %s165
      %s167 = smul.u32 64, %s14
      %s168 = smul.u32 64, %s14
      %p169 = scmp.lt.s32.totalorder %s168, 127
      %s170 = scalar_select %p169, %s168, 127
      %s171 = smul.addr %s170, 4
      %s172 = scalar_lea.vmem %s3, %s171
      %s173 = smul.u32 64, %s14
      %v175 = vld [vmem:[%s166] sm:$0xf]
      %v176 = vld [vmem:[%s166 + $0x4] sm:$0xf]
      %v177 = vld [vmem:[%s166 + $0x8] sm:$0xf]
      %v178 = vld [vmem:[%s166 + $0xc] sm:$0xf]
      %v179 = vld [vmem:[%s166 + $0x10] sm:$0xf]
      %v180 = vld [vmem:[%s166 + $0x14] sm:$0xf]
      %v181 = vld [vmem:[%s166 + $0x18] sm:$0xf]
      %v182 = vld [vmem:[%s166 + $0x1c] sm:$0xf]
      %v183 = vld [vmem:[%s166 + $0x20] sm:$0xf]
      %v184 = vld [vmem:[%s166 + $0x24] sm:$0xf]
      %v185 = vld [vmem:[%s166 + $0x28] sm:$0xf]
      %v186 = vld [vmem:[%s166 + $0x2c] sm:$0xf]
      %v187 = vld [vmem:[%s166 + $0x30] sm:$0xf]
      %v188 = vld [vmem:[%s166 + $0x34] sm:$0xf]
      %v189 = vld [vmem:[%s166 + $0x38] sm:$0xf]
      %v190 = vld [vmem:[%s166 + $0x3c] sm:$0xf]
      %v191 = vld [vmem:[%s166 + $0x40] sm:$0xf]
      %v192 = vld [vmem:[%s166 + $0x44] sm:$0xf]
      %v193 = vld [vmem:[%s166 + $0x48] sm:$0xf]
      %v194 = vld [vmem:[%s166 + $0x4c] sm:$0xf]
      %v195 = vld [vmem:[%s166 + $0x50] sm:$0xf]
      %v196 = vld [vmem:[%s166 + $0x54] sm:$0xf]
      %v197 = vld [vmem:[%s166 + $0x58] sm:$0xf]
      %v198 = vld [vmem:[%s166 + $0x5c] sm:$0xf]
      %v199 = vld [vmem:[%s166 + $0x60] sm:$0xf]
      %v200 = vld [vmem:[%s166 + $0x64] sm:$0xf]
      %v201 = vld [vmem:[%s166 + $0x68] sm:$0xf]
      %v202 = vld [vmem:[%s166 + $0x6c] sm:$0xf]
      %v203 = vld [vmem:[%s166 + $0x70] sm:$0xf]
      %v204 = vld [vmem:[%s166 + $0x74] sm:$0xf]
      %v205 = vld [vmem:[%s166 + $0x78] sm:$0xf]
      %v206 = vld [vmem:[%s166 + $0x7c] sm:$0xf]
      %v207 = vld [vmem:[%s166 + $0x80] sm:$0xf]
      %v208 = vld [vmem:[%s166 + $0x84] sm:$0xf]
      %v209 = vld [vmem:[%s166 + $0x88] sm:$0xf]
      %v210 = vld [vmem:[%s166 + $0x8c] sm:$0xf]
      %v211 = vld [vmem:[%s166 + $0x90] sm:$0xf]
      %v212 = vld [vmem:[%s166 + $0x94] sm:$0xf]
      %v213 = vld [vmem:[%s166 + $0x98] sm:$0xf]
      %v214 = vld [vmem:[%s166 + $0x9c] sm:$0xf]
      %v215 = vld [vmem:[%s166 + $0xa0] sm:$0xf]
      %v216 = vld [vmem:[%s166 + $0xa4] sm:$0xf]
      %v217 = vld [vmem:[%s166 + $0xa8] sm:$0xf]
      %v218 = vld [vmem:[%s166 + $0xac] sm:$0xf]
      %v219 = vld [vmem:[%s166 + $0xb0] sm:$0xf]
      %v220 = vld [vmem:[%s166 + $0xb4] sm:$0xf]
      %v221 = vld [vmem:[%s166 + $0xb8] sm:$0xf]
      %v222 = vld [vmem:[%s166 + $0xbc] sm:$0xf]
      %v223 = vld [vmem:[%s166 + $0xc0] sm:$0xf]
      %v224 = vld [vmem:[%s166 + $0xc4] sm:$0xf]
      %v225 = vld [vmem:[%s166 + $0xc8] sm:$0xf]
      %v226 = vld [vmem:[%s166 + $0xcc] sm:$0xf]
      %v227 = vld [vmem:[%s166 + $0xd0] sm:$0xf]
      %v228 = vld [vmem:[%s166 + $0xd4] sm:$0xf]
      %v229 = vld [vmem:[%s166 + $0xd8] sm:$0xf]
      %v230 = vld [vmem:[%s166 + $0xdc] sm:$0xf]
      %v231 = vld [vmem:[%s166 + $0xe0] sm:$0xf]
      %v232 = vld [vmem:[%s166 + $0xe4] sm:$0xf]
      %v233 = vld [vmem:[%s166 + $0xe8] sm:$0xf]
      %v234 = vld [vmem:[%s166 + $0xec] sm:$0xf]
      %v235 = vld [vmem:[%s166 + $0xf0] sm:$0xf]
      %v236 = vld [vmem:[%s166 + $0xf4] sm:$0xf]
      %v237 = vld [vmem:[%s166 + $0xf8] sm:$0xf]
      %v238 = vld [vmem:[%s166 + $0xfc] sm:$0xf]
      %v239 = vld [vmem:[%s1] sm:$0xf]
      %v240 = vld [vmem:[%s1 + $0x4] sm:$0xf]
      %v241 = vld [vmem:[%s1 + $0x8] sm:$0xf]
      %v242 = vld [vmem:[%s1 + $0xc] sm:$0x3]
      %v243 = vld [vmem:[%s2] sm:$0x1]
      %v245 = vlaneseq
      %v246 = vshrl.u32 %v245, 7
      %v247 = vsub.s32 0, %v246
      %v248 = vrot.slane %v243, %v247
      %v314 = vunpack.c.l.b16 %v175
      %v315 = vunpack.c.l.b16 %v176
      %v316 = vunpack.c.l.b16 %v177
      %v317 = vunpack.c.l.b16 %v178
      %v318 = vunpack.c.l.b16 %v179
      %v319 = vunpack.c.l.b16 %v180
      %v320 = vunpack.c.l.b16 %v181
      %v321 = vunpack.c.l.b16 %v182
      %v322 = vunpack.c.l.b16 %v183
      %v323 = vunpack.c.l.b16 %v184
      %v324 = vunpack.c.l.b16 %v185
      %v325 = vunpack.c.l.b16 %v186
      %v326 = vunpack.c.l.b16 %v187
      %v327 = vunpack.c.l.b16 %v188
      %v328 = vunpack.c.l.b16 %v189
      %v329 = vunpack.c.l.b16 %v190
      %v330 = vunpack.c.l.b16 %v191
      %v331 = vunpack.c.l.b16 %v192
      %v332 = vunpack.c.l.b16 %v193
      %v333 = vunpack.c.l.b16 %v194
      %v334 = vunpack.c.l.b16 %v195
      %v335 = vunpack.c.l.b16 %v196
      %v336 = vunpack.c.l.b16 %v197
      %v337 = vunpack.c.l.b16 %v198
      %v338 = vunpack.c.l.b16 %v199
      %v339 = vunpack.c.l.b16 %v200
      %v340 = vunpack.c.l.b16 %v201
      %v341 = vunpack.c.l.b16 %v202
      %v342 = vunpack.c.l.b16 %v203
      %v343 = vunpack.c.l.b16 %v204
      %v344 = vunpack.c.l.b16 %v205
      %v345 = vunpack.c.l.b16 %v206
      %v346 = vunpack.c.l.b16 %v207
      %v347 = vunpack.c.l.b16 %v208
      %v348 = vunpack.c.l.b16 %v209
      %v349 = vunpack.c.l.b16 %v210
      %v350 = vunpack.c.l.b16 %v211
      %v351 = vunpack.c.l.b16 %v212
      %v352 = vunpack.c.l.b16 %v213
      %v353 = vunpack.c.l.b16 %v214
      %v354 = vunpack.c.l.b16 %v215
      %v355 = vunpack.c.l.b16 %v216
      %v356 = vunpack.c.l.b16 %v217
      %v357 = vunpack.c.l.b16 %v218
      %v358 = vunpack.c.l.b16 %v219
      %v359 = vunpack.c.l.b16 %v220
      %v360 = vunpack.c.l.b16 %v221
      %v361 = vunpack.c.l.b16 %v222
      %v362 = vunpack.c.l.b16 %v223
      %v363 = vunpack.c.l.b16 %v224
      %v364 = vunpack.c.l.b16 %v225
      %v365 = vunpack.c.l.b16 %v226
      %v366 = vunpack.c.l.b16 %v227
      %v367 = vunpack.c.l.b16 %v228
      %v368 = vunpack.c.l.b16 %v229
      %v369 = vunpack.c.l.b16 %v230
      %v370 = vunpack.c.l.b16 %v231
      %v371 = vunpack.c.l.b16 %v232
      %v372 = vunpack.c.l.b16 %v233
      %v373 = vunpack.c.l.b16 %v234
      %v374 = vunpack.c.l.b16 %v235
      %v375 = vunpack.c.l.b16 %v236
      %v376 = vunpack.c.l.b16 %v237
      %v377 = vunpack.c.l.b16 %v238
      %v378 = vpack.c.b16 %v315, %v314
      %v379 = vpack.c.b16 %v317, %v316
      %v380 = vpack.c.b16 %v319, %v318
      %v381 = vpack.c.b16 %v321, %v320
      %v382 = vpack.c.b16 %v323, %v322
      %v383 = vpack.c.b16 %v325, %v324
      %v384 = vpack.c.b16 %v327, %v326
      %v385 = vpack.c.b16 %v329, %v328
      %v386 = vpack.c.b16 %v331, %v330
      %v387 = vpack.c.b16 %v333, %v332
      %v388 = vpack.c.b16 %v335, %v334
      %v389 = vpack.c.b16 %v337, %v336
      %v390 = vpack.c.b16 %v339, %v338
      %v391 = vpack.c.b16 %v341, %v340
      %v392 = vpack.c.b16 %v343, %v342
      %v393 = vpack.c.b16 %v345, %v344
      %v394 = vpack.c.b16 %v347, %v346
      %v395 = vpack.c.b16 %v349, %v348
      %v396 = vpack.c.b16 %v351, %v350
      %v397 = vpack.c.b16 %v353, %v352
      %v398 = vpack.c.b16 %v355, %v354
      %v399 = vpack.c.b16 %v357, %v356
      %v400 = vpack.c.b16 %v359, %v358
      %v401 = vpack.c.b16 %v361, %v360
      %v402 = vpack.c.b16 %v363, %v362
      %v403 = vpack.c.b16 %v365, %v364
      %v404 = vpack.c.b16 %v367, %v366
      %v405 = vpack.c.b16 %v369, %v368
      %v406 = vpack.c.b16 %v371, %v370
      %v407 = vpack.c.b16 %v373, %v372
      %v408 = vpack.c.b16 %v375, %v374
      %v409 = vpack.c.b16 %v377, %v376
      %v414 = vunpack.c.l.b16 %v239
      %v415 = vunpack.c.l.b16 %v240
      %v416 = vunpack.c.l.b16 %v241
      %v417 = vunpack.c.l.b16 %v242
      %v418 = vpack.c.b16 %v415, %v414
      %v419 = vpack.c.b16 %v417, %v416
      %vm421 = vcmask 220160
      %v423 = vsel %vm421, %v378, 0
      %v426 = vsel %vm421, %v379, 0
      %v429 = vsel %vm421, %v380, 0
      %v432 = vsel %vm421, %v381, 0
      %v435 = vsel %vm421, %v382, 0
      %v438 = vsel %vm421, %v383, 0
      %v441 = vsel %vm421, %v384, 0
      %v444 = vsel %vm421, %v385, 0
      %v447 = vsel %vm421, %v386, 0
      %v450 = vsel %vm421, %v387, 0
      %v453 = vsel %vm421, %v388, 0
      %v456 = vsel %vm421, %v389, 0
      %v459 = vsel %vm421, %v390, 0
      %v462 = vsel %vm421, %v391, 0
      %v465 = vsel %vm421, %v392, 0
      %v468 = vsel %vm421, %v393, 0
      %v471 = vsel %vm421, %v394, 0
      %v474 = vsel %vm421, %v395, 0
      %v477 = vsel %vm421, %v396, 0
      %v480 = vsel %vm421, %v397, 0
      %v483 = vsel %vm421, %v398, 0
      %v486 = vsel %vm421, %v399, 0
      %v489 = vsel %vm421, %v400, 0
      %v492 = vsel %vm421, %v401, 0
      %v495 = vsel %vm421, %v402, 0
      %v498 = vsel %vm421, %v403, 0
      %v501 = vsel %vm421, %v404, 0
      %v504 = vsel %vm421, %v405, 0
      %v507 = vsel %vm421, %v406, 0
      %v510 = vsel %vm421, %v407, 0
      %v513 = vsel %vm421, %v408, 0
      %v516 = vsel %vm421, %v409, 0
      %vm518 = vcmask 1044480
      %vm519 = vcmask 1045504
      %v520 = vsel %vm518, 4294967295, 65535
      %v521 = vsel %vm519, %v520, 0
      %v523 = vand.u32 %v419, %v521
      %525 = vmatprep.subr.bf16.mxu0 0
      %526 = vmatpush1.bf16.msra.mxu0 %v418
      %527 = vmatprep.subr.bf16.mxu0 0
      %528 = vmatpush1.bf16.msra.mxu0 %v523
      %529 = vmatprep.subr.bf16.mxu0 0
      %530 = vmatpush1.bf16.msra.mxu0 0
      %531 = vmatprep.subr.bf16.mxu0 0
      %532 = vmatpush1.bf16.msra.mxu0 0
      %533 = vmatprep.subr.bf16.mxu0 0
      %534 = vmatpush1.bf16.msra.mxu0 0
      %535 = vmatprep.subr.bf16.mxu0 0
      %536 = vmatpush1.bf16.msra.mxu0 0
      %537 = vmatprep.subr.bf16.mxu0 0
      %538 = vmatpush1.bf16.msra.mxu0 0
      %539 = vmatprep.subr.bf16.mxu0 0
      %540 = vmatpush1.bf16.msra.mxu0 0
      %541 = vmatprep.subr.bf16.mxu0 0
      %542 = vmatpush1.bf16.msra.mxu0 0
      %543 = vmatprep.subr.bf16.mxu0 0
      %544 = vmatpush1.bf16.msra.mxu0 0
      %545 = vmatprep.subr.bf16.mxu0 0
      %546 = vmatpush1.bf16.msra.mxu0 0
      %547 = vmatprep.subr.bf16.mxu0 0
      %548 = vmatpush1.bf16.msra.mxu0 0
      %549 = vmatprep.subr.bf16.mxu0 0
      %550 = vmatpush1.bf16.msra.mxu0 0
      %551 = vmatprep.subr.bf16.mxu0 0
      %552 = vmatpush1.bf16.msra.mxu0 0
      %553 = vmatprep.subr.bf16.mxu0 0
      %554 = vmatpush1.bf16.msra.mxu0 0
      %555 = vmatprep.subr.bf16.mxu0 0
      %556 = vmatpush1.bf16.msra.mxu0 0
      %557 = vmatprep.mubr.bf16.mxu0 0
      %558 = vmatmul.mubr.bf16.gmra.mrb[0].mxu0 %v423
      %v559 = vpop.f32.mrb[0].mxu0
      %v560 = vadd.f32 %v248, %v559
      %v561 = vpop.f32.mrb[0].mxu0
      %v562 = vpop.f32.mrb[0].mxu0
      %v563 = vadd.f32 %v248, %v562
      %v564 = vpop.f32.mrb[0].mxu0
      %565 = vmatprep.mubr.bf16.mxu0 0
      %566 = vmatmul.mubr.bf16.gmra.mrb[0].mxu0 %v426
      %v567 = vpop.f32.mrb[0].mxu0
      %v568 = vadd.f32 %v248, %v567
      %v569 = vpop.f32.mrb[0].mxu0
      %v570 = vpop.f32.mrb[0].mxu0
      %v571 = vadd.f32 %v248, %v570
      %v572 = vpop.f32.mrb[0].mxu0
      %573 = vmatprep.mubr.bf16.mxu0 0
      %574 = vmatmul.mubr.bf16.gmra.mrb[0].mxu0 %v429
      %v575 = vpop.f32.mrb[0].mxu0
      %v576 = vadd.f32 %v248, %v575
      %v577 = vpop.f32.mrb[0].mxu0
      %v578 = vpop.f32.mrb[0].mxu0
      %v579 = vadd.f32 %v248, %v578
      %v580 = vpop.f32.mrb[0].mxu0
      %581 = vmatprep.mubr.bf16.mxu0 0
      %582 = vmatmul.mubr.bf16.gmra.mrb[0].mxu0 %v432
      %v583 = vpop.f32.mrb[0].mxu0
      %v584 = vadd.f32 %v248, %v583
      %v585 = vpop.f32.mrb[0].mxu0
      %v586 = vpop.f32.mrb[0].mxu0
      %v587 = vadd.f32 %v248, %v586
      %v588 = vpop.f32.mrb[0].mxu0
      %589 = vmatprep.mubr.bf16.mxu0 0
      %590 = vmatmul.mubr.bf16.gmra.mrb[0].mxu0 %v435
      %v591 = vpop.f32.mrb[0].mxu0
      %v592 = vadd.f32 %v248, %v591
      %v593 = vpop.f32.mrb[0].mxu0
      %v594 = vpop.f32.mrb[0].mxu0
      %v595 = vadd.f32 %v248, %v594
      %v596 = vpop.f32.mrb[0].mxu0
      %597 = vmatprep.mubr.bf16.mxu0 0
      %598 = vmatmul.mubr.bf16.gmra.mrb[0].mxu0 %v438
      %v599 = vpop.f32.mrb[0].mxu0
      %v600 = vadd.f32 %v248, %v599
      %v601 = vpop.f32.mrb[0].mxu0
      %v602 = vpop.f32.mrb[0].mxu0
      %v603 = vadd.f32 %v248, %v602
      %v604 = vpop.f32.mrb[0].mxu0
      %605 = vmatprep.mubr.bf16.mxu0 0
      %606 = vmatmul.mubr.bf16.gmra.mrb[0].mxu0 %v441
      %v607 = vpop.f32.mrb[0].mxu0
      %v608 = vadd.f32 %v248, %v607
      %v609 = vpop.f32.mrb[0].mxu0
      %v610 = vpop.f32.mrb[0].mxu0
      %v611 = vadd.f32 %v248, %v610
      %v612 = vpop.f32.mrb[0].mxu0
      %613 = vmatprep.mubr.bf16.mxu0 0
      %614 = vmatmul.mubr.bf16.gmra.mrb[0].mxu0 %v444
      %v615 = vpop.f32.mrb[0].mxu0
      %v616 = vadd.f32 %v248, %v615
      %v617 = vpop.f32.mrb[0].mxu0
      %v618 = vpop.f32.mrb[0].mxu0
      %v619 = vadd.f32 %v248, %v618
      %v620 = vpop.f32.mrb[0].mxu0
      %621 = vmatprep.mubr.bf16.mxu0 0
      %622 = vmatmul.mubr.bf16.gmra.mrb[0].mxu0 %v447
      %v623 = vpop.f32.mrb[0].mxu0
      %v624 = vadd.f32 %v248, %v623
      %v625 = vpop.f32.mrb[0].mxu0
      %v626 = vpop.f32.mrb[0].mxu0
      %v627 = vadd.f32 %v248, %v626
      %v628 = vpop.f32.mrb[0].mxu0
      %629 = vmatprep.mubr.bf16.mxu0 0
      %630 = vmatmul.mubr.bf16.gmra.mrb[0].mxu0 %v450
      %v631 = vpop.f32.mrb[0].mxu0
      %v632 = vadd.f32 %v248, %v631
      %v633 = vpop.f32.mrb[0].mxu0
      %v634 = vpop.f32.mrb[0].mxu0
      %v635 = vadd.f32 %v248, %v634
      %v636 = vpop.f32.mrb[0].mxu0
      %637 = vmatprep.mubr.bf16.mxu0 0
      %638 = vmatmul.mubr.bf16.gmra.mrb[0].mxu0 %v453
      %v639 = vpop.f32.mrb[0].mxu0
      %v640 = vadd.f32 %v248, %v639
      %v641 = vpop.f32.mrb[0].mxu0
      %v642 = vpop.f32.mrb[0].mxu0
      %v643 = vadd.f32 %v248, %v642
      %v644 = vpop.f32.mrb[0].mxu0
      %645 = vmatprep.mubr.bf16.mxu0 0
      %646 = vmatmul.mubr.bf16.gmra.mrb[0].mxu0 %v456
      %v647 = vpop.f32.mrb[0].mxu0
      %v648 = vadd.f32 %v248, %v647
      %v649 = vpop.f32.mrb[0].mxu0
      %v650 = vpop.f32.mrb[0].mxu0
      %v651 = vadd.f32 %v248, %v650
      %v652 = vpop.f32.mrb[0].mxu0
      %653 = vmatprep.mubr.bf16.mxu0 0
      %654 = vmatmul.mubr.bf16.gmra.mrb[0].mxu0 %v459
      %v655 = vpop.f32.mrb[0].mxu0
      %v656 = vadd.f32 %v248, %v655
      %v657 = vpop.f32.mrb[0].mxu0
      %v658 = vpop.f32.mrb[0].mxu0
      %v659 = vadd.f32 %v248, %v658
      %v660 = vpop.f32.mrb[0].mxu0
      %661 = vmatprep.mubr.bf16.mxu0 0
      %662 = vmatmul.mubr.bf16.gmra.mrb[0].mxu0 %v462
      %v663 = vpop.f32.mrb[0].mxu0
      %v664 = vadd.f32 %v248, %v663
      %v665 = vpop.f32.mrb[0].mxu0
      %v666 = vpop.f32.mrb[0].mxu0
      %v667 = vadd.f32 %v248, %v666
      %v668 = vpop.f32.mrb[0].mxu0
      %669 = vmatprep.mubr.bf16.mxu0 0
      %670 = vmatmul.mubr.bf16.gmra.mrb[0].mxu0 %v465
      %v671 = vpop.f32.mrb[0].mxu0
      %v672 = vadd.f32 %v248, %v671
      %v673 = vpop.f32.mrb[0].mxu0
      %v674 = vpop.f32.mrb[0].mxu0
      %v675 = vadd.f32 %v248, %v674
      %v676 = vpop.f32.mrb[0].mxu0
      %677 = vmatprep.mubr.bf16.mxu0 0
      %678 = vmatmul.mubr.bf16.gmra.mrb[0].mxu0 %v468
      %v679 = vpop.f32.mrb[0].mxu0
      %v680 = vadd.f32 %v248, %v679
      %v681 = vpop.f32.mrb[0].mxu0
      %v682 = vpop.f32.mrb[0].mxu0
      %v683 = vadd.f32 %v248, %v682
      %v684 = vpop.f32.mrb[0].mxu0
      %685 = vmatprep.mubr.bf16.mxu0 0
      %686 = vmatmul.mubr.bf16.gmra.mrb[0].mxu0 %v471
      %v687 = vpop.f32.mrb[0].mxu0
      %v688 = vadd.f32 %v248, %v687
      %v689 = vpop.f32.mrb[0].mxu0
      %v690 = vpop.f32.mrb[0].mxu0
      %v691 = vadd.f32 %v248, %v690
      %v692 = vpop.f32.mrb[0].mxu0
      %693 = vmatprep.mubr.bf16.mxu0 0
      %694 = vmatmul.mubr.bf16.gmra.mrb[0].mxu0 %v474
      %v695 = vpop.f32.mrb[0].mxu0
      %v696 = vadd.f32 %v248, %v695
      %v697 = vpop.f32.mrb[0].mxu0
      %v698 = vpop.f32.mrb[0].mxu0
      %v699 = vadd.f32 %v248, %v698
      %v700 = vpop.f32.mrb[0].mxu0
      %701 = vmatprep.mubr.bf16.mxu0 0
      %702 = vmatmul.mubr.bf16.gmra.mrb[0].mxu0 %v477
      %v703 = vpop.f32.mrb[0].mxu0
      %v704 = vadd.f32 %v248, %v703
      %v705 = vpop.f32.mrb[0].mxu0
      %v706 = vpop.f32.mrb[0].mxu0
      %v707 = vadd.f32 %v248, %v706
      %v708 = vpop.f32.mrb[0].mxu0
      %709 = vmatprep.mubr.bf16.mxu0 0
      %710 = vmatmul.mubr.bf16.gmra.mrb[0].mxu0 %v480
      %v711 = vpop.f32.mrb[0].mxu0
      %v712 = vadd.f32 %v248, %v711
      %v713 = vpop.f32.mrb[0].mxu0
      %v714 = vpop.f32.mrb[0].mxu0
      %v715 = vadd.f32 %v248, %v714
      %v716 = vpop.f32.mrb[0].mxu0
      %717 = vmatprep.mubr.bf16.mxu0 0
      %718 = vmatmul.mubr.bf16.gmra.mrb[0].mxu0 %v483
      %v719 = vpop.f32.mrb[0].mxu0
      %v720 = vadd.f32 %v248, %v719
      %v721 = vpop.f32.mrb[0].mxu0
      %v722 = vpop.f32.mrb[0].mxu0
      %v723 = vadd.f32 %v248, %v722
      %v724 = vpop.f32.mrb[0].mxu0
      %725 = vmatprep.mubr.bf16.mxu0 0
      %726 = vmatmul.mubr.bf16.gmra.mrb[0].mxu0 %v486
      %v727 = vpop.f32.mrb[0].mxu0
      %v728 = vadd.f32 %v248, %v727
      %v729 = vpop.f32.mrb[0].mxu0
      %v730 = vpop.f32.mrb[0].mxu0
      %v731 = vadd.f32 %v248, %v730
      %v732 = vpop.f32.mrb[0].mxu0
      %733 = vmatprep.mubr.bf16.mxu0 0
      %734 = vmatmul.mubr.bf16.gmra.mrb[0].mxu0 %v489
      %v735 = vpop.f32.mrb[0].mxu0
      %v736 = vadd.f32 %v248, %v735
      %v737 = vpop.f32.mrb[0].mxu0
      %v738 = vpop.f32.mrb[0].mxu0
      %v739 = vadd.f32 %v248, %v738
      %v740 = vpop.f32.mrb[0].mxu0
      %741 = vmatprep.mubr.bf16.mxu0 0
      %742 = vmatmul.mubr.bf16.gmra.mrb[0].mxu0 %v492
      %v743 = vpop.f32.mrb[0].mxu0
      %v744 = vadd.f32 %v248, %v743
      %v745 = vpop.f32.mrb[0].mxu0
      %v746 = vpop.f32.mrb[0].mxu0
      %v747 = vadd.f32 %v248, %v746
      %v748 = vpop.f32.mrb[0].mxu0
      %749 = vmatprep.mubr.bf16.mxu0 0
      %750 = vmatmul.mubr.bf16.gmra.mrb[0].mxu0 %v495
      %v751 = vpop.f32.mrb[0].mxu0
      %v752 = vadd.f32 %v248, %v751
      %v753 = vpop.f32.mrb[0].mxu0
      %v754 = vpop.f32.mrb[0].mxu0
      %v755 = vadd.f32 %v248, %v754
      %v756 = vpop.f32.mrb[0].mxu0
      %757 = vmatprep.mubr.bf16.mxu0 0
      %758 = vmatmul.mubr.bf16.gmra.mrb[0].mxu0 %v498
      %v759 = vpop.f32.mrb[0].mxu0
      %v760 = vadd.f32 %v248, %v759
      %v761 = vpop.f32.mrb[0].mxu0
      %v762 = vpop.f32.mrb[0].mxu0
      %v763 = vadd.f32 %v248, %v762
      %v764 = vpop.f32.mrb[0].mxu0
      %765 = vmatprep.mubr.bf16.mxu0 0
      %766 = vmatmul.mubr.bf16.gmra.mrb[0].mxu0 %v501
      %v767 = vpop.f32.mrb[0].mxu0
      %v768 = vadd.f32 %v248, %v767
      %v769 = vpop.f32.mrb[0].mxu0
      %v770 = vpop.f32.mrb[0].mxu0
      %v771 = vadd.f32 %v248, %v770
      %v772 = vpop.f32.mrb[0].mxu0
      %773 = vmatprep.mubr.bf16.mxu0 0
      %774 = vmatmul.mubr.bf16.gmra.mrb[0].mxu0 %v504
      %v775 = vpop.f32.mrb[0].mxu0
      %v776 = vadd.f32 %v248, %v775
      %v777 = vpop.f32.mrb[0].mxu0
      %v778 = vpop.f32.mrb[0].mxu0
      %v779 = vadd.f32 %v248, %v778
      %v780 = vpop.f32.mrb[0].mxu0
      %781 = vmatprep.mubr.bf16.mxu0 0
      %782 = vmatmul.mubr.bf16.gmra.mrb[0].mxu0 %v507
      %v783 = vpop.f32.mrb[0].mxu0
      %v784 = vadd.f32 %v248, %v783
      %v785 = vpop.f32.mrb[0].mxu0
      %v786 = vpop.f32.mrb[0].mxu0
      %v787 = vadd.f32 %v248, %v786
      %v788 = vpop.f32.mrb[0].mxu0
      %789 = vmatprep.mubr.bf16.mxu0 0
      %790 = vmatmul.mubr.bf16.gmra.mrb[0].mxu0 %v510
      %v791 = vpop.f32.mrb[0].mxu0
      %v792 = vadd.f32 %v248, %v791
      %v793 = vpop.f32.mrb[0].mxu0
      %v794 = vpop.f32.mrb[0].mxu0
      %v795 = vadd.f32 %v248, %v794
      %v796 = vpop.f32.mrb[0].mxu0
      %797 = vmatprep.mubr.bf16.mxu0 0
      %798 = vmatmul.mubr.bf16.gmra.mrb[0].mxu0 %v513
      %v799 = vpop.f32.mrb[0].mxu0
      %v800 = vadd.f32 %v248, %v799
      %v801 = vpop.f32.mrb[0].mxu0
      %v802 = vpop.f32.mrb[0].mxu0
      %v803 = vadd.f32 %v248, %v802
      %v804 = vpop.f32.mrb[0].mxu0
      %805 = vmatprep.mubr.bf16.mxu0 0
      %806 = vmatmul.mubr.bf16.gmra.mrb[0].mxu0 %v516
      %v807 = vpop.f32.mrb[0].mxu0
      %v808 = vadd.f32 %v248, %v807
      %v809 = vpop.f32.mrb[0].mxu0
      %v810 = vpop.f32.mrb[0].mxu0
      %v811 = vadd.f32 %v248, %v810
      %v812 = vpop.f32.mrb[0].mxu0
      %813 = vdwg.mxu0
      %v814 = vmax.f32 %v560, 0.0
      %v815 = vmax.f32 %v563, 0.0
      %v816 = vmax.f32 %v568, 0.0
      %v817 = vmax.f32 %v571, 0.0
      %v818 = vmax.f32 %v576, 0.0
      %v819 = vmax.f32 %v579, 0.0
      %v820 = vmax.f32 %v584, 0.0
      %v821 = vmax.f32 %v587, 0.0
      %v822 = vmax.f32 %v592, 0.0
      %v823 = vmax.f32 %v595, 0.0
      %v824 = vmax.f32 %v600, 0.0
      %v825 = vmax.f32 %v603, 0.0
      %v826 = vmax.f32 %v608, 0.0
      %v827 = vmax.f32 %v611, 0.0
      %v828 = vmax.f32 %v616, 0.0
      %v829 = vmax.f32 %v619, 0.0
      %v830 = vmax.f32 %v624, 0.0
      %v831 = vmax.f32 %v627, 0.0
      %v832 = vmax.f32 %v632, 0.0
      %v833 = vmax.f32 %v635, 0.0
      %v834 = vmax.f32 %v640, 0.0
      %v835 = vmax.f32 %v643, 0.0
      %v836 = vmax.f32 %v648, 0.0
      %v837 = vmax.f32 %v651, 0.0
      %v838 = vmax.f32 %v656, 0.0
      %v839 = vmax.f32 %v659, 0.0
      %v840 = vmax.f32 %v664, 0.0
      %v841 = vmax.f32 %v667, 0.0
      %v842 = vmax.f32 %v672, 0.0
      %v843 = vmax.f32 %v675, 0.0
      %v844 = vmax.f32 %v680, 0.0
      %v845 = vmax.f32 %v683, 0.0
      %v846 = vmax.f32 %v688, 0.0
      %v847 = vmax.f32 %v691, 0.0
      %v848 = vmax.f32 %v696, 0.0
      %v849 = vmax.f32 %v699, 0.0
      %v850 = vmax.f32 %v704, 0.0
      %v851 = vmax.f32 %v707, 0.0
      %v852 = vmax.f32 %v712, 0.0
      %v853 = vmax.f32 %v715, 0.0
      %v854 = vmax.f32 %v720, 0.0
      %v855 = vmax.f32 %v723, 0.0
      %v856 = vmax.f32 %v728, 0.0
      %v857 = vmax.f32 %v731, 0.0
      %v858 = vmax.f32 %v736, 0.0
      %v859 = vmax.f32 %v739, 0.0
      %v860 = vmax.f32 %v744, 0.0
      %v861 = vmax.f32 %v747, 0.0
      %v862 = vmax.f32 %v752, 0.0
      %v863 = vmax.f32 %v755, 0.0
      %v864 = vmax.f32 %v760, 0.0
      %v865 = vmax.f32 %v763, 0.0
      %v866 = vmax.f32 %v768, 0.0
      %v867 = vmax.f32 %v771, 0.0
      %v868 = vmax.f32 %v776, 0.0
      %v869 = vmax.f32 %v779, 0.0
      %v870 = vmax.f32 %v784, 0.0
      %v871 = vmax.f32 %v787, 0.0
      %v872 = vmax.f32 %v792, 0.0
      %v873 = vmax.f32 %v795, 0.0
      %v874 = vmax.f32 %v800, 0.0
      %v875 = vmax.f32 %v803, 0.0
      %v876 = vmax.f32 %v808, 0.0
      %v877 = vmax.f32 %v811, 0.0
      %v878 = vpack.c.bf16 %v815, %v814
      %v879 = vpack.c.bf16 %v817, %v816
      %v880 = vpack.c.bf16 %v819, %v818
      %v881 = vpack.c.bf16 %v821, %v820
      %v882 = vpack.c.bf16 %v823, %v822
      %v883 = vpack.c.bf16 %v825, %v824
      %v884 = vpack.c.bf16 %v827, %v826
      %v885 = vpack.c.bf16 %v829, %v828
      %v886 = vpack.c.bf16 %v831, %v830
      %v887 = vpack.c.bf16 %v833, %v832
      %v888 = vpack.c.bf16 %v835, %v834
      %v889 = vpack.c.bf16 %v837, %v836
      %v890 = vpack.c.bf16 %v839, %v838
      %v891 = vpack.c.bf16 %v841, %v840
      %v892 = vpack.c.bf16 %v843, %v842
      %v893 = vpack.c.bf16 %v845, %v844
      %v894 = vpack.c.bf16 %v847, %v846
      %v895 = vpack.c.bf16 %v849, %v848
      %v896 = vpack.c.bf16 %v851, %v850
      %v897 = vpack.c.bf16 %v853, %v852
      %v898 = vpack.c.bf16 %v855, %v854
      %v899 = vpack.c.bf16 %v857, %v856
      %v900 = vpack.c.bf16 %v859, %v858
      %v901 = vpack.c.bf16 %v861, %v860
      %v902 = vpack.c.bf16 %v863, %v862
      %v903 = vpack.c.bf16 %v865, %v864
      %v904 = vpack.c.bf16 %v867, %v866
      %v905 = vpack.c.bf16 %v869, %v868
      %v906 = vpack.c.bf16 %v871, %v870
      %v907 = vpack.c.bf16 %v873, %v872
      %v908 = vpack.c.bf16 %v875, %v874
      %v909 = vpack.c.bf16 %v877, %v876
      %v942 = vunpack.c.l.b16 %v878
      %v943 = vunpack.c.h.b16 %v878
      %v944 = vunpack.c.l.b16 %v879
      %v945 = vunpack.c.h.b16 %v879
      %v946 = vunpack.c.l.b16 %v880
      %v947 = vunpack.c.h.b16 %v880
      %v948 = vunpack.c.l.b16 %v881
      %v949 = vunpack.c.h.b16 %v881
      %v950 = vunpack.c.l.b16 %v882
      %v951 = vunpack.c.h.b16 %v882
      %v952 = vunpack.c.l.b16 %v883
      %v953 = vunpack.c.h.b16 %v883
      %v954 = vunpack.c.l.b16 %v884
      %v955 = vunpack.c.h.b16 %v884
      %v956 = vunpack.c.l.b16 %v885
      %v957 = vunpack.c.h.b16 %v885
      %v958 = vunpack.c.l.b16 %v886
      %v959 = vunpack.c.h.b16 %v886
      %v960 = vunpack.c.l.b16 %v887
      %v961 = vunpack.c.h.b16 %v887
      %v962 = vunpack.c.l.b16 %v888
      %v963 = vunpack.c.h.b16 %v888
      %v964 = vunpack.c.l.b16 %v889
      %v965 = vunpack.c.h.b16 %v889
      %v966 = vunpack.c.l.b16 %v890
      %v967 = vunpack.c.h.b16 %v890
      %v968 = vunpack.c.l.b16 %v891
      %v969 = vunpack.c.h.b16 %v891
      %v970 = vunpack.c.l.b16 %v892
      %v971 = vunpack.c.h.b16 %v892
      %v972 = vunpack.c.l.b16 %v893
      %v973 = vunpack.c.h.b16 %v893
      %v974 = vunpack.c.l.b16 %v894
      %v975 = vunpack.c.h.b16 %v894
      %v976 = vunpack.c.l.b16 %v895
      %v977 = vunpack.c.h.b16 %v895
      %v978 = vunpack.c.l.b16 %v896
      %v979 = vunpack.c.h.b16 %v896
      %v980 = vunpack.c.l.b16 %v897
      %v981 = vunpack.c.h.b16 %v897
      %v982 = vunpack.c.l.b16 %v898
      %v983 = vunpack.c.h.b16 %v898
      %v984 = vunpack.c.l.b16 %v899
      %v985 = vunpack.c.h.b16 %v899
      %v986 = vunpack.c.l.b16 %v900
      %v987 = vunpack.c.h.b16 %v900
      %v988 = vunpack.c.l.b16 %v901
      %v989 = vunpack.c.h.b16 %v901
      %v990 = vunpack.c.l.b16 %v902
      %v991 = vunpack.c.h.b16 %v902
      %v992 = vunpack.c.l.b16 %v903
      %v993 = vunpack.c.h.b16 %v903
      %v994 = vunpack.c.l.b16 %v904
      %v995 = vunpack.c.h.b16 %v904
      %v996 = vunpack.c.l.b16 %v905
      %v997 = vunpack.c.h.b16 %v905
      %v998 = vunpack.c.l.b16 %v906
      %v999 = vunpack.c.h.b16 %v906
      %v1000 = vunpack.c.l.b16 %v907
      %v1001 = vunpack.c.h.b16 %v907
      %v1002 = vunpack.c.l.b16 %v908
      %v1003 = vunpack.c.h.b16 %v908
      %v1004 = vunpack.c.l.b16 %v909
      %v1005 = vunpack.c.h.b16 %v909
      %v1006 = vpack.c.b16 %v942, %v942
      %v1007 = vpack.c.b16 %v943, %v943
      %v1008 = vpack.c.b16 %v944, %v944
      %v1009 = vpack.c.b16 %v945, %v945
      %v1010 = vpack.c.b16 %v946, %v946
      %v1011 = vpack.c.b16 %v947, %v947
      %v1012 = vpack.c.b16 %v948, %v948
      %v1013 = vpack.c.b16 %v949, %v949
      %v1014 = vpack.c.b16 %v950, %v950
      %v1015 = vpack.c.b16 %v951, %v951
      %v1016 = vpack.c.b16 %v952, %v952
      %v1017 = vpack.c.b16 %v953, %v953
      %v1018 = vpack.c.b16 %v954, %v954
      %v1019 = vpack.c.b16 %v955, %v955
      %v1020 = vpack.c.b16 %v956, %v956
      %v1021 = vpack.c.b16 %v957, %v957
      %v1022 = vpack.c.b16 %v958, %v958
      %v1023 = vpack.c.b16 %v959, %v959
      %v1024 = vpack.c.b16 %v960, %v960
      %v1025 = vpack.c.b16 %v961, %v961
      %v1026 = vpack.c.b16 %v962, %v962
      %v1027 = vpack.c.b16 %v963, %v963
      %v1028 = vpack.c.b16 %v964, %v964
      %v1029 = vpack.c.b16 %v965, %v965
      %v1030 = vpack.c.b16 %v966, %v966
      %v1031 = vpack.c.b16 %v967, %v967
      %v1032 = vpack.c.b16 %v968, %v968
      %v1033 = vpack.c.b16 %v969, %v969
      %v1034 = vpack.c.b16 %v970, %v970
      %v1035 = vpack.c.b16 %v971, %v971
      %v1036 = vpack.c.b16 %v972, %v972
      %v1037 = vpack.c.b16 %v973, %v973
      %v1038 = vpack.c.b16 %v974, %v974
      %v1039 = vpack.c.b16 %v975, %v975
      %v1040 = vpack.c.b16 %v976, %v976
      %v1041 = vpack.c.b16 %v977, %v977
      %v1042 = vpack.c.b16 %v978, %v978
      %v1043 = vpack.c.b16 %v979, %v979
      %v1044 = vpack.c.b16 %v980, %v980
      %v1045 = vpack.c.b16 %v981, %v981
      %v1046 = vpack.c.b16 %v982, %v982
      %v1047 = vpack.c.b16 %v983, %v983
      %v1048 = vpack.c.b16 %v984, %v984
      %v1049 = vpack.c.b16 %v985, %v985
      %v1050 = vpack.c.b16 %v986, %v986
      %v1051 = vpack.c.b16 %v987, %v987
      %v1052 = vpack.c.b16 %v988, %v988
      %v1053 = vpack.c.b16 %v989, %v989
      %v1054 = vpack.c.b16 %v990, %v990
      %v1055 = vpack.c.b16 %v991, %v991
      %v1056 = vpack.c.b16 %v992, %v992
      %v1057 = vpack.c.b16 %v993, %v993
      %v1058 = vpack.c.b16 %v994, %v994
      %v1059 = vpack.c.b16 %v995, %v995
      %v1060 = vpack.c.b16 %v996, %v996
      %v1061 = vpack.c.b16 %v997, %v997
      %v1062 = vpack.c.b16 %v998, %v998
      %v1063 = vpack.c.b16 %v999, %v999
      %v1064 = vpack.c.b16 %v1000, %v1000
      %v1065 = vpack.c.b16 %v1001, %v1001
      %v1066 = vpack.c.b16 %v1002, %v1002
      %v1067 = vpack.c.b16 %v1003, %v1003
      %v1068 = vpack.c.b16 %v1004, %v1004
      %v1069 = vpack.c.b16 %v1005, %v1005
      %vm1134 = vcmask 519168
      %1135 = vst.msk [vmem:[%s172] sm:$0xf] %vm1134, %v1006
      %1136 = vst.msk [vmem:[%s172 + $0x4] sm:$0xf] %vm1134, %v1007
      %1137 = vst.msk [vmem:[%s172 + $0x8] sm:$0xf] %vm1134, %v1008
      %1138 = vst.msk [vmem:[%s172 + $0xc] sm:$0xf] %vm1134, %v1009
      %1139 = vst.msk [vmem:[%s172 + $0x10] sm:$0xf] %vm1134, %v1010
      %1140 = vst.msk [vmem:[%s172 + $0x14] sm:$0xf] %vm1134, %v1011
      %1141 = vst.msk [vmem:[%s172 + $0x18] sm:$0xf] %vm1134, %v1012
      %1142 = vst.msk [vmem:[%s172 + $0x1c] sm:$0xf] %vm1134, %v1013
      %1143 = vst.msk [vmem:[%s172 + $0x20] sm:$0xf] %vm1134, %v1014
      %1144 = vst.msk [vmem:[%s172 + $0x24] sm:$0xf] %vm1134, %v1015
      %1145 = vst.msk [vmem:[%s172 + $0x28] sm:$0xf] %vm1134, %v1016
      %1146 = vst.msk [vmem:[%s172 + $0x2c] sm:$0xf] %vm1134, %v1017
      %1147 = vst.msk [vmem:[%s172 + $0x30] sm:$0xf] %vm1134, %v1018
      %1148 = vst.msk [vmem:[%s172 + $0x34] sm:$0xf] %vm1134, %v1019
      %1149 = vst.msk [vmem:[%s172 + $0x38] sm:$0xf] %vm1134, %v1020
      %1150 = vst.msk [vmem:[%s172 + $0x3c] sm:$0xf] %vm1134, %v1021
      %1151 = vst.msk [vmem:[%s172 + $0x40] sm:$0xf] %vm1134, %v1022
      %1152 = vst.msk [vmem:[%s172 + $0x44] sm:$0xf] %vm1134, %v1023
      %1153 = vst.msk [vmem:[%s172 + $0x48] sm:$0xf] %vm1134, %v1024
      %1154 = vst.msk [vmem:[%s172 + $0x4c] sm:$0xf] %vm1134, %v1025
      %1155 = vst.msk [vmem:[%s172 + $0x50] sm:$0xf] %vm1134, %v1026
      %1156 = vst.msk [vmem:[%s172 + $0x54] sm:$0xf] %vm1134, %v1027
      %1157 = vst.msk [vmem:[%s172 + $0x58] sm:$0xf] %vm1134, %v1028
      %1158 = vst.msk [vmem:[%s172 + $0x5c] sm:$0xf] %vm1134, %v1029
      %1159 = vst.msk [vmem:[%s172 + $0x60] sm:$0xf] %vm1134, %v1030
      %1160 = vst.msk [vmem:[%s172 + $0x64] sm:$0xf] %vm1134, %v1031
      %1161 = vst.msk [vmem:[%s172 + $0x68] sm:$0xf] %vm1134, %v1032
      %1162 = vst.msk [vmem:[%s172 + $0x6c] sm:$0xf] %vm1134, %v1033
      %1163 = vst.msk [vmem:[%s172 + $0x70] sm:$0xf] %vm1134, %v1034
      %1164 = vst.msk [vmem:[%s172 + $0x74] sm:$0xf] %vm1134, %v1035
      %1165 = vst.msk [vmem:[%s172 + $0x78] sm:$0xf] %vm1134, %v1036
      %1166 = vst.msk [vmem:[%s172 + $0x7c] sm:$0xf] %vm1134, %v1037
      %1167 = vst.msk [vmem:[%s172 + $0x80] sm:$0xf] %vm1134, %v1038
      %1168 = vst.msk [vmem:[%s172 + $0x84] sm:$0xf] %vm1134, %v1039
      %1169 = vst.msk [vmem:[%s172 + $0x88] sm:$0xf] %vm1134, %v1040
      %1170 = vst.msk [vmem:[%s172 + $0x8c] sm:$0xf] %vm1134, %v1041
      %1171 = vst.msk [vmem:[%s172 + $0x90] sm:$0xf] %vm1134, %v1042
      %1172 = vst.msk [vmem:[%s172 + $0x94] sm:$0xf] %vm1134, %v1043
      %1173 = vst.msk [vmem:[%s172 + $0x98] sm:$0xf] %vm1134, %v1044
      %1174 = vst.msk [vmem:[%s172 + $0x9c] sm:$0xf] %vm1134, %v1045
      %1175 = vst.msk [vmem:[%s172 + $0xa0] sm:$0xf] %vm1134, %v1046
      %1176 = vst.msk [vmem:[%s172 + $0xa4] sm:$0xf] %vm1134, %v1047
      %1177 = vst.msk [vmem:[%s172 + $0xa8] sm:$0xf] %vm1134, %v1048
      %1178 = vst.msk [vmem:[%s172 + $0xac] sm:$0xf] %vm1134, %v1049
      %1179 = vst.msk [vmem:[%s172 + $0xb0] sm:$0xf] %vm1134, %v1050
      %1180 = vst.msk [vmem:[%s172 + $0xb4] sm:$0xf] %vm1134, %v1051
      %1181 = vst.msk [vmem:[%s172 + $0xb8] sm:$0xf] %vm1134, %v1052
      %1182 = vst.msk [vmem:[%s172 + $0xbc] sm:$0xf] %vm1134, %v1053
      %1183 = vst.msk [vmem:[%s172 + $0xc0] sm:$0xf] %vm1134, %v1054
      %1184 = vst.msk [vmem:[%s172 + $0xc4] sm:$0xf] %vm1134, %v1055
      %1185 = vst.msk [vmem:[%s172 + $0xc8] sm:$0xf] %vm1134, %v1056
      %1186 = vst.msk [vmem:[%s172 + $0xcc] sm:$0xf] %vm1134, %v1057
      %1187 = vst.msk [vmem:[%s172 + $0xd0] sm:$0xf] %vm1134, %v1058
      %1188 = vst.msk [vmem:[%s172 + $0xd4] sm:$0xf] %vm1134, %v1059
      %1189 = vst.msk [vmem:[%s172 + $0xd8] sm:$0xf] %vm1134, %v1060
      %1190 = vst.msk [vmem:[%s172 + $0xdc] sm:$0xf] %vm1134, %v1061
      %1191 = vst.msk [vmem:[%s172 + $0xe0] sm:$0xf] %vm1134, %v1062
      %1192 = vst.msk [vmem:[%s172 + $0xe4] sm:$0xf] %vm1134, %v1063
      %1193 = vst.msk [vmem:[%s172 + $0xe8] sm:$0xf] %vm1134, %v1064
      %1194 = vst.msk [vmem:[%s172 + $0xec] sm:$0xf] %vm1134, %v1065
      %1195 = vst.msk [vmem:[%s172 + $0xf0] sm:$0xf] %vm1134, %v1066
      %1196 = vst.msk [vmem:[%s172 + $0xf4] sm:$0xf] %vm1134, %v1067
      %1197 = vst.msk [vmem:[%s172 + $0xf8] sm:$0xf] %vm1134, %v1068
      %1198 = vst.msk [vmem:[%s172 + $0xfc] sm:$0xf] %vm1134, %v1069
      %s1199 = smul.u32 64, %s14
      %p1200 = scmp.lt.s32.totalorder %s1199, 127
      %s1201 = scalar_select %p1200, %s1199, 127
      %s1202 = smul.addr %s1201, 4
      %s1203 = scalar_lea.vmem %s3, %s1202
      // Predicated region
      $region33: #{l1_plus_perceptual_forward.4} parent=31 // pred_check
        %p1204 = pneg %p100
      $region34: #{l1_plus_perceptual_forward.4} parent=31 // pred_check_branch
        %1206 = sbr.rel (%p1204) target = $region36
      $region35: #{l1_plus_perceptual_forward.4} parent=31 // pred_region
        %s1207 = smul.u32 64, %s14
      $region36: #{l1_plus_perceptual_forward.4} parent=31 // pred_fallthru
        _
    $region32: #{l1_plus_perceptual_forward.4} parent=5 // pred_fallthru
      _
    %p1208 = scmp.le.s32.totalorder 2, %s9
    // Predicated region
    $region37: #{l1_plus_perceptual_forward.4} parent=5 // pred_check
      %p1209 = pneg %p1208
    $region38: #{l1_plus_perceptual_forward.4} parent=5 // pred_check_branch
      %1211 = sbr.rel (%p1209) target = $region40
    $region39: #{l1_plus_perceptual_forward.4} parent=5 // pred_region
      %s1212 = ssub.s32 %s9, 2
      // Predicated region
      $region41: #{l1_plus_perceptual_forward.4} parent=39 // pred_check
        %p1213 = pneg %p106
      $region42: #{l1_plus_perceptual_forward.4} parent=39 // pred_check_branch
        %1215 = sbr.rel (%p1213) target = $region44
      $region43: #{l1_plus_perceptual_forward.4} parent=39 // pred_region
        %s1216 = smul.u32 64, %s15
        %p1217 = scmp.lt.s32.totalorder %s1216, 127
        %s1218 = scalar_select %p1217, %s1216, 127
        %s1219 = smul.addr %s1218, 4
        %s1220 = scalar_lea.vmem %s3, %s1219
      $region44: #{l1_plus_perceptual_forward.4} parent=39 // pred_fallthru
        _
    $region40: #{l1_plus_perceptual_forward.4} parent=5 // pred_fallthru
      _
  $region6: #{l1_plus_perceptual_forward.4} parent=0 // loop_footer
    %s13 = sadd.s32 1, %s9
  $region7: #{l1_plus_perceptual_forward.4} parent=0 // loop_footer_branch
    %8 = sbr.rel target = $region3
  $region8: #{l1_plus_perceptual_forward.4} parent=0 // loop_exit
    _

// kernel: l1_plus_perceptual_forward.5
$region0: #{l1_plus_perceptual_forward.5}
  #allocation0 [shape = 'u32[]', space=smem, size = 0x4, offset = 0x4, fixed_abs, tag = 'smem constant byte address 0x4 - core index']
  #allocation1 [shape = 'u32[144,128]{1,0:T(1,128)}', space=vmem, size = 0x12000, scoped, tag = 'internal scratch']
  %s0 = inlined_call_operand.vmem [shape: bf16[512,576], index: 0, kind: input, shape index: {}]
  %s1 = inlined_call_operand.vmem [shape: bf16[512,576], index: 1, kind: input, shape index: {}]
  %s2 = inlined_call_operand.vmem [shape: bf16[576,64], index: 2, kind: input, shape index: {}]
  %s3 = inlined_call_operand.vmem [shape: f32[1,64], index: 3, kind: input, shape index: {}]
  %s4 = inlined_call_operand.hbm [shape: f32[1,1], index: 4, kind: output, shape index: {}]
  %s5 = sld [smem:[#allocation0]]
  $region53: #{l1_plus_perceptual_forward.5} parent=0
    _
  %s7 = ssub.s32 1, %s5
  %s8 = scalar_select 0, %s7, %s5
  $region1: #{l1_plus_perceptual_forward.5} parent=0
    #allocation2 [shape = 'u8[512]{0}', space=vmem, size = 0x400, scoped, tag = 'output window, operand 0, single buffered']
    #allocation3 [shape = 's32[2]{0}', space=sflag, size = 0x8, scoped, tag = 'scoped memory for l1_plus_perceptual_forward.5']
    %9 = vsyncpa [#allocation3], 0
    loop: start=0, step=1, limit=4
    $region2: #{l1_plus_perceptual_forward.5} parent=1 // loop_pre_header
      _
    $region3: #{l1_plus_perceptual_forward.5} parent=1 // loop_header
      %s11 = sphi 0, %s15
      %p12 = scmp.ge.s32.totalorder %s11, 4
      %s21 = sphi 0, %s23
      %s24 = sphi 0, %s21
      %s25 = sphi 0, %s24
      %s41 = sphi 0, %s25
      %s47 = sphi 0, %s49
      %s50 = sphi 0, %s47
      %s51 = sphi 0, %s50
      %s67 = sphi 0, %s51
      %s71 = sphi 0, %s71
      %s73 = sphi 0, %s71
      %s74 = sphi 0, %s73
      %s88 = sphi 0, %s74
      %s92 = sphi 0, %s92
      %s94 = sphi 0, %s92
      %s95 = sphi 0, %s94
      %s109 = sphi 0, %s95
      %s113 = sphi 0, %s113
      %s115 = sphi 0, %s113
      %s116 = sphi 0, %s115
      %s130 = sphi 0, %s116
    $region4: #{l1_plus_perceptual_forward.5} parent=1 // loop_header_branch
      %14 = sbr.rel (%p12) target = $region8
    $region5: #{l1_plus_perceptual_forward.5} parent=1 // loop_body
      %s16 = ssub.s32 %s11, 1
      %s17 = ssub.s32 %s11, 2
      %s18 = sadd.s32 %s11, 1
      %s19 = ssub.s32 %s11, %s18
      %p20 = scmp.eq.s32.totalorder %s19, 0
      %s22 = sadd.s32 %s21, 1
      %s23 = scalar_select %p20, %s21, %s22
      %p26 = pneg %p20
      %p27 = scmp.eq.s32.totalorder %s11, 1
      %p28 = por %p26, %p27
      %p29 = scmp.ne.s32.totalorder %s21, %s24
      %p30 = scmp.eq.s32.totalorder %s11, 0
      %p31 = por %p29, %p30
      %p32 = scmp.ne.s32.totalorder %s21, %s24
      %p33 = scmp.eq.s32.totalorder %s16, 1
      %p34 = por %p32, %p33
      %p35 = scmp.ne.s32.totalorder %s24, %s25
      %p36 = scmp.eq.s32.totalorder %s16, 0
      %p37 = por %p35, %p36
      %p38 = scmp.ne.s32.totalorder %s24, %s25
      %p39 = scmp.eq.s32.totalorder %s17, 1
      %p40 = por %p38, %p39
      %p42 = scmp.ne.s32.totalorder %s25, %s41
      %p43 = scmp.eq.s32.totalorder %s17, 0
      %p44 = por %p42, %p43
      %s45 = ssub.s32 %s11, %s18
      %p46 = scmp.eq.s32.totalorder %s45, 0
      %s48 = sadd.s32 %s47, 1
      %s49 = scalar_select %p46, %s47, %s48
      %p52 = pneg %p46
      %p53 = scmp.eq.s32.totalorder %s11, 1
      %p54 = por %p52, %p53
      %p55 = scmp.ne.s32.totalorder %s47, %s50
      %p56 = scmp.eq.s32.totalorder %s11, 0
      %p57 = por %p55, %p56
      %p58 = scmp.ne.s32.totalorder %s47, %s50
      %p59 = scmp.eq.s32.totalorder %s16, 1
      %p60 = por %p58, %p59
      %p61 = scmp.ne.s32.totalorder %s50, %s51
      %p62 = scmp.eq.s32.totalorder %s16, 0
      %p63 = por %p61, %p62
      %p64 = scmp.ne.s32.totalorder %s50, %s51
      %p65 = scmp.eq.s32.totalorder %s17, 1
      %p66 = por %p64, %p65
      %p68 = scmp.ne.s32.totalorder %s51, %s67
      %p69 = scmp.eq.s32.totalorder %s17, 0
      %p70 = por %p68, %p69
      %s72 = sadd.s32 %s71, 1
      %p75 = scmp.eq.s32.totalorder %s11, 1
      %p76 = scmp.ne.s32.totalorder %s71, %s73
      %p77 = scmp.eq.s32.totalorder %s11, 0
      %p78 = por %p76, %p77
      %p79 = scmp.ne.s32.totalorder %s71, %s73
      %p80 = scmp.eq.s32.totalorder %s16, 1
      %p81 = por %p79, %p80
      %p82 = scmp.ne.s32.totalorder %s73, %s74
      %p83 = scmp.eq.s32.totalorder %s16, 0
      %p84 = por %p82, %p83
      %p85 = scmp.ne.s32.totalorder %s73, %s74
      %p86 = scmp.eq.s32.totalorder %s17, 1
      %p87 = por %p85, %p86
      %p89 = scmp.ne.s32.totalorder %s74, %s88
      %p90 = scmp.eq.s32.totalorder %s17, 0
      %p91 = por %p89, %p90
      %s93 = sadd.s32 %s92, 1
      %p96 = scmp.eq.s32.totalorder %s11, 1
      %p97 = scmp.ne.s32.totalorder %s92, %s94
      %p98 = scmp.eq.s32.totalorder %s11, 0
      %p99 = por %p97, %p98
      %p100 = scmp.ne.s32.totalorder %s92, %s94
      %p101 = scmp.eq.s32.totalorder %s16, 1
      %p102 = por %p100, %p101
      %p103 = scmp.ne.s32.totalorder %s94, %s95
      %p104 = scmp.eq.s32.totalorder %s16, 0
      %p105 = por %p103, %p104
      %p106 = scmp.ne.s32.totalorder %s94, %s95
      %p107 = scmp.eq.s32.totalorder %s17, 1
      %p108 = por %p106, %p107
      %p110 = scmp.ne.s32.totalorder %s95, %s109
      %p111 = scmp.eq.s32.totalorder %s17, 0
      %p112 = por %p110, %p111
      %s114 = sadd.s32 %s113, 1
      %p117 = scmp.eq.s32.totalorder %s11, 1
      %p118 = scmp.ne.s32.totalorder %s113, %s115
      %p119 = scmp.eq.s32.totalorder %s11, 0
      %p120 = por %p118, %p119
      %p121 = scmp.ne.s32.totalorder %s113, %s115
      %p122 = scmp.eq.s32.totalorder %s16, 1
      %p123 = por %p121, %p122
      %p124 = scmp.ne.s32.totalorder %s115, %s116
      %p125 = scmp.eq.s32.totalorder %s16, 0
      %p126 = por %p124, %p125
      %p127 = scmp.ne.s32.totalorder %s115, %s116
      %p128 = scmp.eq.s32.totalorder %s17, 1
      %p129 = por %p127, %p128
      %p131 = scmp.ne.s32.totalorder %s116, %s130
      %p132 = scmp.eq.s32.totalorder %s17, 0
      %p133 = por %p131, %p132
      %p134 = scmp.le.s32.totalorder 1, %s11
      %p135 = scmp.lt.s32.totalorder %s11, 3
      %p136 = pnand %p134, %p135
      %p137 = pneg %p136
      // Predicated region
      $region9: #{l1_plus_perceptual_forward.5} parent=5 // pred_check
        _
      $region10: #{l1_plus_perceptual_forward.5} parent=5 // pred_check_branch
        %139 = sbr.rel (%p136) target = $region12
      $region11: #{l1_plus_perceptual_forward.5} parent=5 // pred_region
        %s140 = ssub.s32 %s11, 1
        // Predicated region
        $region13: #{l1_plus_perceptual_forward.5} parent=11 // pred_check
          %p141 = pneg %p84
        $region14: #{l1_plus_perceptual_forward.5} parent=11 // pred_check_branch
          %143 = sbr.rel (%p141) target = $region16
        $region15: #{l1_plus_perceptual_forward.5} parent=11 // pred_region
          _
        $region16: #{l1_plus_perceptual_forward.5} parent=11 // pred_fallthru
          _
        // Predicated region
        $region17: #{l1_plus_perceptual_forward.5} parent=11 // pred_check
          %p144 = pneg %p105
        $region18: #{l1_plus_perceptual_forward.5} parent=11 // pred_check_branch
          %146 = sbr.rel (%p144) target = $region20
        $region19: #{l1_plus_perceptual_forward.5} parent=11 // pred_region
          _
        $region20: #{l1_plus_perceptual_forward.5} parent=11 // pred_fallthru
          _
      $region12: #{l1_plus_perceptual_forward.5} parent=5 // pred_fallthru
        _
      %p147 = scmp.lt.s32.totalorder %s11, 2
      // Predicated region
      $region21: #{l1_plus_perceptual_forward.5} parent=5 // pred_check
        %p148 = pneg %p147
      $region22: #{l1_plus_perceptual_forward.5} parent=5 // pred_check_branch
        %150 = sbr.rel (%p148) target = $region24
      $region23: #{l1_plus_perceptual_forward.5} parent=5 // pred_region
        // Predicated region
        $region25: #{l1_plus_perceptual_forward.5} parent=23 // pred_check
          %p151 = pneg %p31
        $region26: #{l1_plus_perceptual_forward.5} parent=23 // pred_check_branch
          %153 = sbr.rel (%p151) target = $region28
        $region27: #{l1_plus_perceptual_forward.5} parent=23 // pred_region
          %s154 = smul.u32 32, %s11
          %p155 = scmp.lt.s32.totalorder %s154, 63
          %s156 = scalar_select %p155, %s154, 63
          %s157 = smul.addr %s156, 5
          %s158 = smul.addr %s157, 4
          %s159 = scalar_lea.vmem %s0, %s158
          %s160 = smul.u32 32, %s11
        $region28: #{l1_plus_perceptual_forward.5} parent=23 // pred_fallthru
          _
        // Predicated region
        $region29: #{l1_plus_perceptual_forward.5} parent=23 // pred_check
          %p161 = pneg %p57
        $region30: #{l1_plus_perceptual_forward.5} parent=23 // pred_check_branch
          %163 = sbr.rel (%p161) target = $region32
        $region31: #{l1_plus_perceptual_forward.5} parent=23 // pred_region
          %s164 = smul.u32 32, %s11
          %p165 = scmp.lt.s32.totalorder %s164, 63
          %s166 = scalar_select %p165, %s164, 63
          %s167 = smul.addr %s166, 5
          %s168 = smul.addr %s167, 4
          %s169 = scalar_lea.vmem %s1, %s168
          %s170 = smul.u32 32, %s11
        $region32: #{l1_plus_perceptual_forward.5} parent=23 // pred_fallthru
          _
      $region24: #{l1_plus_perceptual_forward.5} parent=5 // pred_fallthru
        _
      %p171 = scmp.le.s32.totalorder 1, %s11
      %p172 = scmp.lt.s32.totalorder %s11, 3
      %p173 = pnand %p171, %p172
      %p174 = pneg %p173
      // Predicated region
      $region33: #{l1_plus_perceptual_forward.5} parent=5 // pred_check
        _
      $region34: #{l1_plus_perceptual_forward.5} parent=5 // pred_check_branch
        %176 = sbr.rel (%p173) target = $region36
      $region35: #{l1_plus_perceptual_forward.5} parent=5 // pred_region
        %s177 = ssub.s32 %s11, 1
        %s178 = smul.u32 32, %s16
        %p179 = scmp.lt.s32.totalorder %s178, 63
        %s180 = scalar_select %p179, %s178, 63
        %s181 = smul.addr %s180, 5
        %s182 = smul.addr %s181, 4
        %s183 = scalar_lea.vmem %s0, %s182
        %p184 = pneg %p37
        %p185 = pneg %p34
        %s186 = smul.u32 32, %s16
        %p187 = scmp.lt.s32.totalorder %s186, 63
        %s188 = scalar_select %p187, %s186, 63
        %s189 = smul.addr %s188, 5
        %s190 = smul.addr %s189, 4
        %s191 = scalar_lea.vmem %s1, %s190
        %p192 = pneg %p63
        %p193 = pneg %p60
        %p194 = pneg %p84
        %p195 = pneg %p81
        %p196 = pneg %p105
        %p197 = pneg %p102
        %p198 = pneg %p126
        %p199 = pneg %p123
        %s200 = smul.u32 32, %s16
        %p201 = scmp.lt.s32.totalorder %s200, 63
        %s202 = scalar_select %p201, %s200, 63
        %s203 = smul.addr %s202, 5
        %s204 = smul.addr %s203, 4
        %s205 = scalar_lea.vmem %s0, %s204
        %s206 = smul.u32 32, %s16
        %s207 = smul.u32 32, %s16
        %p208 = scmp.lt.s32.totalorder %s207, 63
        %s209 = scalar_select %p208, %s207, 63
        %s210 = smul.addr %s209, 5
        %s211 = smul.addr %s210, 4
        %s212 = scalar_lea.vmem %s1, %s211
        %s213 = smul.u32 32, %s16
        %v215 = vld [vmem:[%s2] sm:$0xf]
        %v216 = vld [vmem:[%s2 + $0x4] sm:$0xf]
        %v217 = vld [vmem:[%s2 + $0x8] sm:$0xf]
        %v218 = vld [vmem:[%s2 + $0xc] sm:$0xf]
        %v219 = vld [vmem:[%s2 + $0x10] sm:$0xf]
        %v220 = vld [vmem:[%s2 + $0x14] sm:$0xf]
        %v221 = vld [vmem:[%s2 + $0x18] sm:$0xf]
        %v222 = vld [vmem:[%s2 + $0x1c] sm:$0xf]
        %v223 = vld [vmem:[%s2 + $0x20] sm:$0xf]
        %v224 = vld [vmem:[%s2 + $0x24] sm:$0xf]
        %v225 = vld [vmem:[%s2 + $0x28] sm:$0xf]
        %v226 = vld [vmem:[%s2 + $0x2c] sm:$0xf]
        %v227 = vld [vmem:[%s2 + $0x30] sm:$0xf]
        %v228 = vld [vmem:[%s2 + $0x34] sm:$0xf]
        %v229 = vld [vmem:[%s2 + $0x38] sm:$0xf]
        %v230 = vld [vmem:[%s2 + $0x3c] sm:$0xf]
        %v231 = vld [vmem:[%s2 + $0x40] sm:$0xf]
        %v232 = vld [vmem:[%s2 + $0x44] sm:$0xf]
        %v233 = vld [vmem:[%s2 + $0x48] sm:$0xf]
        %v234 = vld [vmem:[%s2 + $0x4c] sm:$0xf]
        %v235 = vld [vmem:[%s2 + $0x50] sm:$0xf]
        %v236 = vld [vmem:[%s2 + $0x54] sm:$0xf]
        %v237 = vld [vmem:[%s2 + $0x58] sm:$0xf]
        %v238 = vld [vmem:[%s2 + $0x5c] sm:$0xf]
        %v239 = vld [vmem:[%s2 + $0x60] sm:$0xf]
        %v240 = vld [vmem:[%s2 + $0x64] sm:$0xf]
        %v241 = vld [vmem:[%s2 + $0x68] sm:$0xf]
        %v242 = vld [vmem:[%s2 + $0x6c] sm:$0xf]
        %v243 = vld [vmem:[%s2 + $0x70] sm:$0xf]
        %v244 = vld [vmem:[%s2 + $0x74] sm:$0xf]
        %v245 = vld [vmem:[%s2 + $0x78] sm:$0xf]
        %v246 = vld [vmem:[%s2 + $0x7c] sm:$0xf]
        %v247 = vld [vmem:[%s2 + $0x80] sm:$0xf]
        %v248 = vld [vmem:[%s2 + $0x84] sm:$0xf]
        %v249 = vld [vmem:[%s2 + $0x88] sm:$0xf]
        %v250 = vld [vmem:[%s2 + $0x8c] sm:$0xf]
        %v251 = vld [vmem:[%s2 + $0x90] sm:$0xf]
        %v252 = vld [vmem:[%s2 + $0x94] sm:$0xf]
        %v253 = vld [vmem:[%s2 + $0x98] sm:$0xf]
        %v254 = vld [vmem:[%s2 + $0x9c] sm:$0xf]
        %v255 = vld [vmem:[%s2 + $0xa0] sm:$0xf]
        %v256 = vld [vmem:[%s2 + $0xa4] sm:$0xf]
        %v257 = vld [vmem:[%s2 + $0xa8] sm:$0xf]
        %v258 = vld [vmem:[%s2 + $0xac] sm:$0xf]
        %v259 = vld [vmem:[%s2 + $0xb0] sm:$0xf]
        %v260 = vld [vmem:[%s2 + $0xb4] sm:$0xf]
        %v261 = vld [vmem:[%s2 + $0xb8] sm:$0xf]
        %v262 = vld [vmem:[%s2 + $0xbc] sm:$0xf]
        %v263 = vld [vmem:[%s2 + $0xc0] sm:$0xf]
        %v264 = vld [vmem:[%s2 + $0xc4] sm:$0xf]
        %v265 = vld [vmem:[%s2 + $0xc8] sm:$0xf]
        %v266 = vld [vmem:[%s2 + $0xcc] sm:$0xf]
        %v267 = vld [vmem:[%s2 + $0xd0] sm:$0xf]
        %v268 = vld [vmem:[%s2 + $0xd4] sm:$0xf]
        %v269 = vld [vmem:[%s2 + $0xd8] sm:$0xf]
        %v270 = vld [vmem:[%s2 + $0xdc] sm:$0xf]
        %v271 = vld [vmem:[%s2 + $0xe0] sm:$0xf]
        %v272 = vld [vmem:[%s2 + $0xe4] sm:$0xf]
        %v273 = vld [vmem:[%s2 + $0xe8] sm:$0xf]
        %v274 = vld [vmem:[%s2 + $0xec] sm:$0xf]
        %v275 = vld [vmem:[%s2 + $0xf0] sm:$0xf]
        %v276 = vld [vmem:[%s2 + $0xf4] sm:$0xf]
        %v277 = vld [vmem:[%s2 + $0xf8] sm:$0xf]
        %v278 = vld [vmem:[%s2 + $0xfc] sm:$0xf]
        %v279 = vld [vmem:[%s2 + $0x100] sm:$0xf]
        %v280 = vld [vmem:[%s2 + $0x104] sm:$0xf]
        %v281 = vld [vmem:[%s2 + $0x108] sm:$0xf]
        %v282 = vld [vmem:[%s2 + $0x10c] sm:$0xf]
        %v283 = vld [vmem:[%s2 + $0x110] sm:$0xf]
        %v284 = vld [vmem:[%s2 + $0x114] sm:$0xf]
        %v285 = vld [vmem:[%s2 + $0x118] sm:$0xf]
        %v286 = vld [vmem:[%s2 + $0x11c] sm:$0xf]
        %v287 = vld [vmem:[%s3] sm:$0x1]
        %v288 = vld [vmem:[%s205] sm:$0xff]
        %v289 = vld [vmem:[%s205 + $0x8] sm:$0xff]
        %v290 = vld [vmem:[%s205 + $0x10] sm:$0xf]
        %v291 = vld [vmem:[%s205 + $0x14] sm:$0xff]
        %v292 = vld [vmem:[%s205 + $0x1c] sm:$0xff]
        %v293 = vld [vmem:[%s205 + $0x24] sm:$0xf]
        %v294 = vld [vmem:[%s205 + $0x28] sm:$0xff]
        %v295 = vld [vmem:[%s205 + $0x30] sm:$0xff]
        %v296 = vld [vmem:[%s205 + $0x38] sm:$0xf]
        %v297 = vld [vmem:[%s205 + $0x3c] sm:$0xff]
        %v298 = vld [vmem:[%s205 + $0x44] sm:$0xff]
        %v299 = vld [vmem:[%s205 + $0x4c] sm:$0xf]
        %v300 = vld [vmem:[%s205 + $0x50] sm:$0xff]
        %v301 = vld [vmem:[%s205 + $0x58] sm:$0xff]
        %v302 = vld [vmem:[%s205 + $0x60] sm:$0xf]
        %v303 = vld [vmem:[%s205 + $0x64] sm:$0xff]
        %v304 = vld [vmem:[%s205 + $0x6c] sm:$0xff]
        %v305 = vld [vmem:[%s205 + $0x74] sm:$0xf]
        %v306 = vld [vmem:[%s205 + $0x78] sm:$0xff]
        %v307 = vld [vmem:[%s205 + $0x80] sm:$0xff]
        %v308 = vld [vmem:[%s205 + $0x88] sm:$0xf]
        %v309 = vld [vmem:[%s205 + $0x8c] sm:$0xff]
        %v310 = vld [vmem:[%s205 + $0x94] sm:$0xff]
        %v311 = vld [vmem:[%s205 + $0x9c] sm:$0xf]
        %v312 = vld [vmem:[%s205 + $0xa0] sm:$0xff]
        %v313 = vld [vmem:[%s205 + $0xa8] sm:$0xff]
        %v314 = vld [vmem:[%s205 + $0xb0] sm:$0xf]
        %v315 = vld [vmem:[%s205 + $0xb4] sm:$0xff]
        %v316 = vld [vmem:[%s205 + $0xbc] sm:$0xff]
        %v317 = vld [vmem:[%s205 + $0xc4] sm:$0xf]
        %v318 = vld [vmem:[%s205 + $0xc8] sm:$0xff]
        %v319 = vld [vmem:[%s205 + $0xd0] sm:$0xff]
        %v320 = vld [vmem:[%s205 + $0xd8] sm:$0xf]
        %v321 = vld [vmem:[%s205 + $0xdc] sm:$0xff]
        %v322 = vld [vmem:[%s205 + $0xe4] sm:$0xff]
        %v323 = vld [vmem:[%s205 + $0xec] sm:$0xf]
        %v324 = vld [vmem:[%s205 + $0xf0] sm:$0xff]
        %v325 = vld [vmem:[%s205 + $0xf8] sm:$0xff]
        %v326 = vld [vmem:[%s205 + $0x100] sm:$0xf]
        %v327 = vld [vmem:[%s205 + $0x104] sm:$0xff]
        %v328 = vld [vmem:[%s205 + $0x10c] sm:$0xff]
        %v329 = vld [vmem:[%s205 + $0x114] sm:$0xf]
        %v330 = vld [vmem:[%s205 + $0x118] sm:$0xff]
        %v331 = vld [vmem:[%s205 + $0x120] sm:$0xff]
        %v332 = vld [vmem:[%s205 + $0x128] sm:$0xf]
        %v333 = vld [vmem:[%s205 + $0x12c] sm:$0xff]
        %v334 = vld [vmem:[%s205 + $0x134] sm:$0xff]
        %v335 = vld [vmem:[%s205 + $0x13c] sm:$0xf]
        %v336 = vld [vmem:[%s205 + $0x140] sm:$0xff]
        %v337 = vld [vmem:[%s205 + $0x148] sm:$0xff]
        %v338 = vld [vmem:[%s205 + $0x150] sm:$0xf]
        %v339 = vld [vmem:[%s205 + $0x154] sm:$0xff]
        %v340 = vld [vmem:[%s205 + $0x15c] sm:$0xff]
        %v341 = vld [vmem:[%s205 + $0x164] sm:$0xf]
        %v342 = vld [vmem:[%s205 + $0x168] sm:$0xff]
        %v343 = vld [vmem:[%s205 + $0x170] sm:$0xff]
        %v344 = vld [vmem:[%s205 + $0x178] sm:$0xf]
        %v345 = vld [vmem:[%s205 + $0x17c] sm:$0xff]
        %v346 = vld [vmem:[%s205 + $0x184] sm:$0xff]
        %v347 = vld [vmem:[%s205 + $0x18c] sm:$0xf]
        %v348 = vld [vmem:[%s205 + $0x190] sm:$0xff]
        %v349 = vld [vmem:[%s205 + $0x198] sm:$0xff]
        %v350 = vld [vmem:[%s205 + $0x1a0] sm:$0xf]
        %v351 = vld [vmem:[%s205 + $0x1a4] sm:$0xff]
        %v352 = vld [vmem:[%s205 + $0x1ac] sm:$0xff]
        %v353 = vld [vmem:[%s205 + $0x1b4] sm:$0xf]
        %v354 = vld [vmem:[%s205 + $0x1b8] sm:$0xff]
        %v355 = vld [vmem:[%s205 + $0x1c0] sm:$0xff]
        %v356 = vld [vmem:[%s205 + $0x1c8] sm:$0xf]
        %v357 = vld [vmem:[%s205 + $0x1cc] sm:$0xff]
        %v358 = vld [vmem:[%s205 + $0x1d4] sm:$0xff]
        %v359 = vld [vmem:[%s205 + $0x1dc] sm:$0xf]
        %v360 = vld [vmem:[%s205 + $0x1e0] sm:$0xff]
        %v361 = vld [vmem:[%s205 + $0x1e8] sm:$0xff]
        %v362 = vld [vmem:[%s205 + $0x1f0] sm:$0xf]
        %v363 = vld [vmem:[%s205 + $0x1f4] sm:$0xff]
        %v364 = vld [vmem:[%s205 + $0x1fc] sm:$0xff]
        %v365 = vld [vmem:[%s205 + $0x204] sm:$0xf]
        %v366 = vld [vmem:[%s205 + $0x208] sm:$0xff]
        %v367 = vld [vmem:[%s205 + $0x210] sm:$0xff]
        %v368 = vld [vmem:[%s205 + $0x218] sm:$0xf]
        %v369 = vld [vmem:[%s205 + $0x21c] sm:$0xff]
        %v370 = vld [vmem:[%s205 + $0x224] sm:$0xff]
        %v371 = vld [vmem:[%s205 + $0x22c] sm:$0xf]
        %v372 = vld [vmem:[%s205 + $0x230] sm:$0xff]
        %v373 = vld [vmem:[%s205 + $0x238] sm:$0xff]
        %v374 = vld [vmem:[%s205 + $0x240] sm:$0xf]
        %v375 = vld [vmem:[%s205 + $0x244] sm:$0xff]
        %v376 = vld [vmem:[%s205 + $0x24c] sm:$0xff]
        %v377 = vld [vmem:[%s205 + $0x254] sm:$0xf]
        %v378 = vld [vmem:[%s205 + $0x258] sm:$0xff]
        %v379 = vld [vmem:[%s205 + $0x260] sm:$0xff]
        %v380 = vld [vmem:[%s205 + $0x268] sm:$0xf]
        %v381 = vld [vmem:[%s205 + $0x26c] sm:$0xff]
        %v382 = vld [vmem:[%s205 + $0x274] sm:$0xff]
        %v383 = vld [vmem:[%s205 + $0x27c] sm:$0xf]
        %v385 = vlaneseq
        %v386 = vshrl.u32 %v385, 7
        %v387 = vsub.s32 0, %v386
        %v388 = vrot.slane %v287, %v387
        %v486 = vunpack.c.l.b16 %v288
        %v487 = vunpack.c.h.b16 %v288
        %v488 = vunpack.c.l.b16 %v289
        %v489 = vunpack.c.h.b16 %v289
        %v490 = vunpack.c.l.b16 %v290
        %v491 = vunpack.c.l.b16 %v291
        %v492 = vunpack.c.h.b16 %v291
        %v493 = vunpack.c.l.b16 %v292
        %v494 = vunpack.c.h.b16 %v292
        %v495 = vunpack.c.l.b16 %v293
        %v496 = vunpack.c.l.b16 %v294
        %v497 = vunpack.c.h.b16 %v294
        %v498 = vunpack.c.l.b16 %v295
        %v499 = vunpack.c.h.b16 %v295
        %v500 = vunpack.c.l.b16 %v296
        %v501 = vunpack.c.l.b16 %v297
        %v502 = vunpack.c.h.b16 %v297
        %v503 = vunpack.c.l.b16 %v298
        %v504 = vunpack.c.h.b16 %v298
        %v505 = vunpack.c.l.b16 %v299
        %v506 = vunpack.c.l.b16 %v300
        %v507 = vunpack.c.h.b16 %v300
        %v508 = vunpack.c.l.b16 %v301
        %v509 = vunpack.c.h.b16 %v301
        %v510 = vunpack.c.l.b16 %v302
        %v511 = vunpack.c.l.b16 %v303
        %v512 = vunpack.c.h.b16 %v303
        %v513 = vunpack.c.l.b16 %v304
        %v514 = vunpack.c.h.b16 %v304
        %v515 = vunpack.c.l.b16 %v305
        %v516 = vunpack.c.l.b16 %v306
        %v517 = vunpack.c.h.b16 %v306
        %v518 = vunpack.c.l.b16 %v307
        %v519 = vunpack.c.h.b16 %v307
        %v520 = vunpack.c.l.b16 %v308
        %v521 = vunpack.c.l.b16 %v309
        %v522 = vunpack.c.h.b16 %v309
        %v523 = vunpack.c.l.b16 %v310
        %v524 = vunpack.c.h.b16 %v310
        %v525 = vunpack.c.l.b16 %v311
        %v526 = vunpack.c.l.b16 %v312
        %v527 = vunpack.c.h.b16 %v312
        %v528 = vunpack.c.l.b16 %v313
        %v529 = vunpack.c.h.b16 %v313
        %v530 = vunpack.c.l.b16 %v314
        %v531 = vunpack.c.l.b16 %v315
        %v532 = vunpack.c.h.b16 %v315
        %v533 = vunpack.c.l.b16 %v316
        %v534 = vunpack.c.h.b16 %v316
        %v535 = vunpack.c.l.b16 %v317
        %v536 = vunpack.c.l.b16 %v318
        %v537 = vunpack.c.h.b16 %v318
        %v538 = vunpack.c.l.b16 %v319
        %v539 = vunpack.c.h.b16 %v319
        %v540 = vunpack.c.l.b16 %v320
        %v541 = vunpack.c.l.b16 %v321
        %v542 = vunpack.c.h.b16 %v321
        %v543 = vunpack.c.l.b16 %v322
        %v544 = vunpack.c.h.b16 %v322
        %v545 = vunpack.c.l.b16 %v323
        %v546 = vunpack.c.l.b16 %v324
        %v547 = vunpack.c.h.b16 %v324
        %v548 = vunpack.c.l.b16 %v325
        %v549 = vunpack.c.h.b16 %v325
        %v550 = vunpack.c.l.b16 %v326
        %v551 = vunpack.c.l.b16 %v327
        %v552 = vunpack.c.h.b16 %v327
        %v553 = vunpack.c.l.b16 %v328
        %v554 = vunpack.c.h.b16 %v328
        %v555 = vunpack.c.l.b16 %v329
        %v556 = vunpack.c.l.b16 %v330
        %v557 = vunpack.c.h.b16 %v330
        %v558 = vunpack.c.l.b16 %v331
        %v559 = vunpack.c.h.b16 %v331
        %v560 = vunpack.c.l.b16 %v332
        %v561 = vunpack.c.l.b16 %v333
        %v562 = vunpack.c.h.b16 %v333
        %v563 = vunpack.c.l.b16 %v334
        %v564 = vunpack.c.h.b16 %v334
        %v565 = vunpack.c.l.b16 %v335
        %v566 = vunpack.c.l.b16 %v336
        %v567 = vunpack.c.h.b16 %v336
        %v568 = vunpack.c.l.b16 %v337
        %v569 = vunpack.c.h.b16 %v337
        %v570 = vunpack.c.l.b16 %v338
        %v571 = vunpack.c.l.b16 %v339
        %v572 = vunpack.c.h.b16 %v339
        %v573 = vunpack.c.l.b16 %v340
        %v574 = vunpack.c.h.b16 %v340
        %v575 = vunpack.c.l.b16 %v341
        %v576 = vunpack.c.l.b16 %v342
        %v577 = vunpack.c.h.b16 %v342
        %v578 = vunpack.c.l.b16 %v343
        %v579 = vunpack.c.h.b16 %v343
        %v580 = vunpack.c.l.b16 %v344
        %v581 = vunpack.c.l.b16 %v345
        %v582 = vunpack.c.h.b16 %v345
        %v583 = vunpack.c.l.b16 %v346
        %v584 = vunpack.c.h.b16 %v346
        %v585 = vunpack.c.l.b16 %v347
        %v586 = vunpack.c.l.b16 %v348
        %v587 = vunpack.c.h.b16 %v348
        %v588 = vunpack.c.l.b16 %v349
        %v589 = vunpack.c.h.b16 %v349
        %v590 = vunpack.c.l.b16 %v350
        %v591 = vunpack.c.l.b16 %v351
        %v592 = vunpack.c.h.b16 %v351
        %v593 = vunpack.c.l.b16 %v352
        %v594 = vunpack.c.h.b16 %v352
        %v595 = vunpack.c.l.b16 %v353
        %v596 = vunpack.c.l.b16 %v354
        %v597 = vunpack.c.h.b16 %v354
        %v598 = vunpack.c.l.b16 %v355
        %v599 = vunpack.c.h.b16 %v355
        %v600 = vunpack.c.l.b16 %v356
        %v601 = vunpack.c.l.b16 %v357
        %v602 = vunpack.c.h.b16 %v357
        %v603 = vunpack.c.l.b16 %v358
        %v604 = vunpack.c.h.b16 %v358
        %v605 = vunpack.c.l.b16 %v359
        %v606 = vunpack.c.l.b16 %v360
        %v607 = vunpack.c.h.b16 %v360
        %v608 = vunpack.c.l.b16 %v361
        %v609 = vunpack.c.h.b16 %v361
        %v610 = vunpack.c.l.b16 %v362
        %v611 = vunpack.c.l.b16 %v363
        %v612 = vunpack.c.h.b16 %v363
        %v613 = vunpack.c.l.b16 %v364
        %v614 = vunpack.c.h.b16 %v364
        %v615 = vunpack.c.l.b16 %v365
        %v616 = vunpack.c.l.b16 %v366
        %v617 = vunpack.c.h.b16 %v366
        %v618 = vunpack.c.l.b16 %v367
        %v619 = vunpack.c.h.b16 %v367
        %v620 = vunpack.c.l.b16 %v368
        %v621 = vunpack.c.l.b16 %v369
        %v622 = vunpack.c.h.b16 %v369
        %v623 = vunpack.c.l.b16 %v370
        %v624 = vunpack.c.h.b16 %v370
        %v625 = vunpack.c.l.b16 %v371
        %v626 = vunpack.c.l.b16 %v372
        %v627 = vunpack.c.h.b16 %v372
        %v628 = vunpack.c.l.b16 %v373
        %v629 = vunpack.c.h.b16 %v373
        %v630 = vunpack.c.l.b16 %v374
        %v631 = vunpack.c.l.b16 %v375
        %v632 = vunpack.c.h.b16 %v375
        %v633 = vunpack.c.l.b16 %v376
        %v634 = vunpack.c.h.b16 %v376
        %v635 = vunpack.c.l.b16 %v377
        %v636 = vunpack.c.l.b16 %v378
        %v637 = vunpack.c.h.b16 %v378
        %v638 = vunpack.c.l.b16 %v379
        %v639 = vunpack.c.h.b16 %v379
        %v640 = vunpack.c.l.b16 %v380
        %v641 = vunpack.c.l.b16 %v381
        %v642 = vunpack.c.h.b16 %v381
        %v643 = vunpack.c.l.b16 %v382
        %v644 = vunpack.c.h.b16 %v382
        %v645 = vunpack.c.l.b16 %v383
        %v646 = vpack.c.b16 %v491, %v486
        %v647 = vpack.c.b16 %v492, %v487
        %v648 = vpack.c.b16 %v493, %v488
        %v649 = vpack.c.b16 %v494, %v489
        %v650 = vpack.c.b16 %v495, %v490
        %v651 = vpack.c.b16 %v501, %v496
        %v652 = vpack.c.b16 %v502, %v497
        %v653 = vpack.c.b16 %v503, %v498
        %v654 = vpack.c.b16 %v504, %v499
        %v655 = vpack.c.b16 %v505, %v500
        %v656 = vpack.c.b16 %v511, %v506
        %v657 = vpack.c.b16 %v512, %v507
        %v658 = vpack.c.b16 %v513, %v508
        %v659 = vpack.c.b16 %v514, %v509
        %v660 = vpack.c.b16 %v515, %v510
        %v661 = vpack.c.b16 %v521, %v516
        %v662 = vpack.c.b16 %v522, %v517
        %v663 = vpack.c.b16 %v523, %v518
        %v664 = vpack.c.b16 %v524, %v519
        %v665 = vpack.c.b16 %v525, %v520
        %v666 = vpack.c.b16 %v531, %v526
        %v667 = vpack.c.b16 %v532, %v527
        %v668 = vpack.c.b16 %v533, %v528
        %v669 = vpack.c.b16 %v534, %v529
        %v670 = vpack.c.b16 %v535, %v530
        %v671 = vpack.c.b16 %v541, %v536
        %v672 = vpack.c.b16 %v542, %v537
        %v673 = vpack.c.b16 %v543, %v538
        %v674 = vpack.c.b16 %v544, %v539
        %v675 = vpack.c.b16 %v545, %v540
        %v676 = vpack.c.b16 %v551, %v546
        %v677 = vpack.c.b16 %v552, %v547
        %v678 = vpack.c.b16 %v553, %v548
        %v679 = vpack.c.b16 %v554, %v549
        %v680 = vpack.c.b16 %v555, %v550
        %v681 = vpack.c.b16 %v561, %v556
        %v682 = vpack.c.b16 %v562, %v557
        %v683 = vpack.c.b16 %v563, %v558
        %v684 = vpack.c.b16 %v564, %v559
        %v685 = vpack.c.b16 %v565, %v560
        %v686 = vpack.c.b16 %v571, %v566
        %v687 = vpack.c.b16 %v572, %v567
        %v688 = vpack.c.b16 %v573, %v568
        %v689 = vpack.c.b16 %v574, %v569
        %v690 = vpack.c.b16 %v575, %v570
        %v691 = vpack.c.b16 %v581, %v576
        %v692 = vpack.c.b16 %v582, %v577
        %v693 = vpack.c.b16 %v583, %v578
        %v694 = vpack.c.b16 %v584, %v579
        %v695 = vpack.c.b16 %v585, %v580
        %v696 = vpack.c.b16 %v591, %v586
        %v697 = vpack.c.b16 %v592, %v587
        %v698 = vpack.c.b16 %v593, %v588
        %v699 = vpack.c.b16 %v594, %v589
        %v700 = vpack.c.b16 %v595, %v590
        %v701 = vpack.c.b16 %v601, %v596
        %v702 = vpack.c.b16 %v602, %v597
        %v703 = vpack.c.b16 %v603, %v598
        %v704 = vpack.c.b16 %v604, %v599
        %v705 = vpack.c.b16 %v605, %v600
        %v706 = vpack.c.b16 %v611, %v606
        %v707 = vpack.c.b16 %v612, %v607
        %v708 = vpack.c.b16 %v613, %v608
        %v709 = vpack.c.b16 %v614, %v609
        %v710 = vpack.c.b16 %v615, %v610
        %v711 = vpack.c.b16 %v621, %v616
        %v712 = vpack.c.b16 %v622, %v617
        %v713 = vpack.c.b16 %v623, %v618
        %v714 = vpack.c.b16 %v624, %v619
        %v715 = vpack.c.b16 %v625, %v620
        %v716 = vpack.c.b16 %v631, %v626
        %v717 = vpack.c.b16 %v632, %v627
        %v718 = vpack.c.b16 %v633, %v628
        %v719 = vpack.c.b16 %v634, %v629
        %v720 = vpack.c.b16 %v635, %v630
        %v721 = vpack.c.b16 %v641, %v636
        %v722 = vpack.c.b16 %v642, %v637
        %v723 = vpack.c.b16 %v643, %v638
        %v724 = vpack.c.b16 %v644, %v639
        %v725 = vpack.c.b16 %v645, %v640
        %v862 = vunpack.c.l.b16 %v215
        %v863 = vunpack.c.l.b16 %v216
        %v864 = vunpack.c.l.b16 %v217
        %v865 = vunpack.c.l.b16 %v218
        %v866 = vunpack.c.l.b16 %v219
        %v867 = vunpack.c.l.b16 %v220
        %v868 = vunpack.c.l.b16 %v221
        %v869 = vunpack.c.l.b16 %v222
        %v870 = vunpack.c.l.b16 %v223
        %v871 = vunpack.c.l.b16 %v224
        %v872 = vunpack.c.l.b16 %v225
        %v873 = vunpack.c.l.b16 %v226
        %v874 = vunpack.c.l.b16 %v227
        %v875 = vunpack.c.l.b16 %v228
        %v876 = vunpack.c.l.b16 %v229
        %v877 = vunpack.c.l.b16 %v230
        %v878 = vunpack.c.l.b16 %v231
        %v879 = vunpack.c.l.b16 %v232
        %v880 = vunpack.c.l.b16 %v233
        %v881 = vunpack.c.l.b16 %v234
        %v882 = vunpack.c.l.b16 %v235
        %v883 = vunpack.c.l.b16 %v236
        %v884 = vunpack.c.l.b16 %v237
        %v885 = vunpack.c.l.b16 %v238
        %v886 = vunpack.c.l.b16 %v239
        %v887 = vunpack.c.l.b16 %v240
        %v888 = vunpack.c.l.b16 %v241
        %v889 = vunpack.c.l.b16 %v242
        %v890 = vunpack.c.l.b16 %v243
        %v891 = vunpack.c.l.b16 %v244
        %v892 = vunpack.c.l.b16 %v245
        %v893 = vunpack.c.l.b16 %v246
        %v894 = vunpack.c.l.b16 %v247
        %v895 = vunpack.c.l.b16 %v248
        %v896 = vunpack.c.l.b16 %v249
        %v897 = vunpack.c.l.b16 %v250
        %v898 = vunpack.c.l.b16 %v251
        %v899 = vunpack.c.l.b16 %v252
        %v900 = vunpack.c.l.b16 %v253
        %v901 = vunpack.c.l.b16 %v254
        %v902 = vunpack.c.l.b16 %v255
        %v903 = vunpack.c.l.b16 %v256
        %v904 = vunpack.c.l.b16 %v257
        %v905 = vunpack.c.l.b16 %v258
        %v906 = vunpack.c.l.b16 %v259
        %v907 = vunpack.c.l.b16 %v260
        %v908 = vunpack.c.l.b16 %v261
        %v909 = vunpack.c.l.b16 %v262
        %v910 = vunpack.c.l.b16 %v263
        %v911 = vunpack.c.l.b16 %v264
        %v912 = vunpack.c.l.b16 %v265
        %v913 = vunpack.c.l.b16 %v266
        %v914 = vunpack.c.l.b16 %v267
        %v915 = vunpack.c.l.b16 %v268
        %v916 = vunpack.c.l.b16 %v269
        %v917 = vunpack.c.l.b16 %v270
        %v918 = vunpack.c.l.b16 %v271
        %v919 = vunpack.c.l.b16 %v272
        %v920 = vunpack.c.l.b16 %v273
        %v921 = vunpack.c.l.b16 %v274
        %v922 = vunpack.c.l.b16 %v275
        %v923 = vunpack.c.l.b16 %v276
        %v924 = vunpack.c.l.b16 %v277
        %v925 = vunpack.c.l.b16 %v278
        %v926 = vunpack.c.l.b16 %v279
        %v927 = vunpack.c.l.b16 %v280
        %v928 = vunpack.c.l.b16 %v281
        %v929 = vunpack.c.l.b16 %v282
        %v930 = vunpack.c.l.b16 %v283
        %v931 = vunpack.c.l.b16 %v284
        %v932 = vunpack.c.l.b16 %v285
        %v933 = vunpack.c.l.b16 %v286
        %v934 = vpack.c.b16 %v863, %v862
        %v935 = vpack.c.b16 %v865, %v864
        %v936 = vpack.c.b16 %v867, %v866
        %v937 = vpack.c.b16 %v869, %v868
        %v938 = vpack.c.b16 %v871, %v870
        %v939 = vpack.c.b16 %v873, %v872
        %v940 = vpack.c.b16 %v875, %v874
        %v941 = vpack.c.b16 %v877, %v876
        %v942 = vpack.c.b16 %v879, %v878
        %v943 = vpack.c.b16 %v881, %v880
        %v944 = vpack.c.b16 %v883, %v882
        %v945 = vpack.c.b16 %v885, %v884
        %v946 = vpack.c.b16 %v887, %v886
        %v947 = vpack.c.b16 %v889, %v888
        %v948 = vpack.c.b16 %v891, %v890
        %v949 = vpack.c.b16 %v893, %v892
        %v950 = vpack.c.b16 %v895, %v894
        %v951 = vpack.c.b16 %v897, %v896
        %v952 = vpack.c.b16 %v899, %v898
        %v953 = vpack.c.b16 %v901, %v900
        %v954 = vpack.c.b16 %v903, %v902
        %v955 = vpack.c.b16 %v905, %v904
        %v956 = vpack.c.b16 %v907, %v906
        %v957 = vpack.c.b16 %v909, %v908
        %v958 = vpack.c.b16 %v911, %v910
        %v959 = vpack.c.b16 %v913, %v912
        %v960 = vpack.c.b16 %v915, %v914
        %v961 = vpack.c.b16 %v917, %v916
        %v962 = vpack.c.b16 %v919, %v918
        %v963 = vpack.c.b16 %v921, %v920
        %v964 = vpack.c.b16 %v923, %v922
        %v965 = vpack.c.b16 %v925, %v924
        %v966 = vpack.c.b16 %v927, %v926
        %v967 = vpack.c.b16 %v929, %v928
        %v968 = vpack.c.b16 %v931, %v930
        %v969 = vpack.c.b16 %v933, %v932
        %vm1006 = vcmask 523264
        %v1008 = vsel %vm1006, %v650, 0
        %v1011 = vsel %vm1006, %v655, 0
        %v1014 = vsel %vm1006, %v660, 0
        %v1017 = vsel %vm1006, %v665, 0
        %v1020 = vsel %vm1006, %v670, 0
        %v1023 = vsel %vm1006, %v675, 0
        %v1026 = vsel %vm1006, %v680, 0
        %v1029 = vsel %vm1006, %v685, 0
        %v1032 = vsel %vm1006, %v690, 0
        %v1035 = vsel %vm1006, %v695, 0
        %v1038 = vsel %vm1006, %v700, 0
        %v1041 = vsel %vm1006, %v705, 0
        %v1044 = vsel %vm1006, %v710, 0
        %v1047 = vsel %vm1006, %v715, 0
        %v1050 = vsel %vm1006, %v720, 0
        %v1053 = vsel %vm1006, %v725, 0
        %1055 = vmatprep.subr.bf16.mxu0 0
        %1056 = vmatpush1.bf16.msra.mxu0 %v934
        %1057 = vmatprep.subr.bf16.mxu0 0
        %1058 = vmatpush1.bf16.msra.mxu0 %v935
        %1059 = vmatprep.subr.bf16.mxu0 0
        %1060 = vmatpush1.bf16.msra.mxu0 %v936
        %1061 = vmatprep.subr.bf16.mxu0 0
        %1062 = vmatpush1.bf16.msra.mxu0 %v937
        %1063 = vmatprep.subr.bf16.mxu0 0
        %1064 = vmatpush1.bf16.msra.mxu0 %v938
        %1065 = vmatprep.subr.bf16.mxu0 0
        %1066 = vmatpush1.bf16.msra.mxu0 %v939
        %1067 = vmatprep.subr.bf16.mxu0 0
        %1068 = vmatpush1.bf16.msra.mxu0 %v940
        %1069 = vmatprep.subr.bf16.mxu0 0
        %1070 = vmatpush1.bf16.msra.mxu0 %v941
        %1071 = vmatprep.subr.bf16.mxu0 0
        %1072 = vmatpush1.bf16.msra.mxu0 %v942
        %1073 = vmatprep.subr.bf16.mxu0 0
        %1074 = vmatpush1.bf16.msra.mxu0 %v943
        %1075 = vmatprep.subr.bf16.mxu0 0
        %1076 = vmatpush1.bf16.msra.mxu0 %v944
        %1077 = vmatprep.subr.bf16.mxu0 0
        %1078 = vmatpush1.bf16.msra.mxu0 %v945
        %1079 = vmatprep.subr.bf16.mxu0 0
        %1080 = vmatpush1.bf16.msra.mxu0 %v946
        %1081 = vmatprep.subr.bf16.mxu0 0
        %1082 = vmatpush1.bf16.msra.mxu0 %v947
        %1083 = vmatprep.subr.bf16.mxu0 0
        %1084 = vmatpush1.bf16.msra.mxu0 %v948
        %1085 = vmatprep.subr.bf16.mxu0 0
        %1086 = vmatpush1.bf16.msra.mxu0 %v949
        %1087 = vmatprep.mubr.bf16.mxu0 %v647
        %1088 = vmatmul.mubr.bf16.gmra.mrb[0].mxu0 %v646
        %v1089 = vpop.f32.mrb[0].mxu0
        %v1090 = vadd.f32 %v388, %v1089
        %v1091 = vpop.f32.mrb[0].mxu0
        %v1092 = vpop.f32.mrb[0].mxu0
        %v1093 = vadd.f32 %v388, %v1092
        %v1094 = vpop.f32.mrb[0].mxu0
        %1095 = vmatprep.mubr.bf16.mxu0 %v652
        %1096 = vmatmul.mubr.bf16.gmra.mrb[0].mxu0 %v651
        %v1097 = vpop.f32.mrb[0].mxu0
        %v1098 = vadd.f32 %v388, %v1097
        %v1099 = vpop.f32.mrb[0].mxu0
        %v1100 = vpop.f32.mrb[0].mxu0
        %v1101 = vadd.f32 %v388, %v1100
        %v1102 = vpop.f32.mrb[0].mxu0
        %1103 = vmatprep.mubr.bf16.mxu0 %v657
        %1104 = vmatmul.mubr.bf16.gmra.mrb[0].mxu0 %v656
        %v1105 = vpop.f32.mrb[0].mxu0
        %v1106 = vadd.f32 %v388, %v1105
        %v1107 = vpop.f32.mrb[0].mxu0
        %v1108 = vpop.f32.mrb[0].mxu0
        %v1109 = vadd.f32 %v388, %v1108
        %v1110 = vpop.f32.mrb[0].mxu0
        %1111 = vmatprep.mubr.bf16.mxu0 %v662
        %1112 = vmatmul.mubr.bf16.gmra.mrb[0].mxu0 %v661
        %v1113 = vpop.f32.mrb[0].mxu0
        %v1114 = vadd.f32 %v388, %v1113
        %v1115 = vpop.f32.mrb[0].mxu0
        %v1116 = vpop.f32.mrb[0].mxu0
        %v1117 = vadd.f32 %v388, %v1116
        %v1118 = vpop.f32.mrb[0].mxu0
        %1119 = vmatprep.mubr.bf16.mxu0 %v667
        %1120 = vmatmul.mubr.bf16.gmra.mrb[0].mxu0 %v666
        %v1121 = vpop.f32.mrb[0].mxu0
        %v1122 = vadd.f32 %v388, %v1121
        %v1123 = vpop.f32.mrb[0].mxu0
        %v1124 = vpop.f32.mrb[0].mxu0
        %v1125 = vadd.f32 %v388, %v1124
        %v1126 = vpop.f32.mrb[0].mxu0
        %1127 = vmatprep.mubr.bf16.mxu0 %v672
        %1128 = vmatmul.mubr.bf16.gmra.mrb[0].mxu0 %v671
        %v1129 = vpop.f32.mrb[0].mxu0
        %v1130 = vadd.f32 %v388, %v1129
        %v1131 = vpop.f32.mrb[0].mxu0
        %v1132 = vpop.f32.mrb[0].mxu0
        %v1133 = vadd.f32 %v388, %v1132
        %v1134 = vpop.f32.mrb[0].mxu0
        %1135 = vmatprep.mubr.bf16.mxu0 %v677
        %1136 = vmatmul.mubr.bf16.gmra.mrb[0].mxu0 %v676
        %v1137 = vpop.f32.mrb[0].mxu0
        %v1138 = vadd.f32 %v388, %v1137
        %v1139 = vpop.f32.mrb[0].mxu0
        %v1140 = vpop.f32.mrb[0].mxu0
        %v1141 = vadd.f32 %v388, %v1140
        %v1142 = vpop.f32.mrb[0].mxu0
        %1143 = vmatprep.mubr.bf16.mxu0 %v682
        %1144 = vmatmul.mubr.bf16.gmra.mrb[0].mxu0 %v681
        %v1145 = vpop.f32.mrb[0].mxu0
        %v1146 = vadd.f32 %v388, %v1145
        %v1147 = vpop.f32.mrb[0].mxu0
        %v1148 = vpop.f32.mrb[0].mxu0
        %v1149 = vadd.f32 %v388, %v1148
        %v1150 = vpop.f32.mrb[0].mxu0
        %1151 = vmatprep.mubr.bf16.mxu0 %v687
        %1152 = vmatmul.mubr.bf16.gmra.mrb[0].mxu0 %v686
        %v1153 = vpop.f32.mrb[0].mxu0
        %v1154 = vadd.f32 %v388, %v1153
        %v1155 = vpop.f32.mrb[0].mxu0
        %v1156 = vpop.f32.mrb[0].mxu0
        %v1157 = vadd.f32 %v388, %v1156
        %v1158 = vpop.f32.mrb[0].mxu0
        %1159 = vmatprep.mubr.bf16.mxu0 %v692
        %1160 = vmatmul.mubr.bf16.gmra.mrb[0].mxu0 %v691
        %v1161 = vpop.f32.mrb[0].mxu0
        %v1162 = vadd.f32 %v388, %v1161
        %v1163 = vpop.f32.mrb[0].mxu0
        %v1164 = vpop.f32.mrb[0].mxu0
        %v1165 = vadd.f32 %v388, %v1164
        %v1166 = vpop.f32.mrb[0].mxu0
        %1167 = vmatprep.mubr.bf16.mxu0 %v697
        %1168 = vmatmul.mubr.bf16.gmra.mrb[0].mxu0 %v696
        %v1169 = vpop.f32.mrb[0].mxu0
        %v1170 = vadd.f32 %v388, %v1169
        %v1171 = vpop.f32.mrb[0].mxu0
        %v1172 = vpop.f32.mrb[0].mxu0
        %v1173 = vadd.f32 %v388, %v1172
        %v1174 = vpop.f32.mrb[0].mxu0
        %1175 = vmatprep.mubr.bf16.mxu0 %v702
        %1176 = vmatmul.mubr.bf16.gmra.mrb[0].mxu0 %v701
        %v1177 = vpop.f32.mrb[0].mxu0
        %v1178 = vadd.f32 %v388, %v1177
        %v1179 = vpop.f32.mrb[0].mxu0
        %v1180 = vpop.f32.mrb[0].mxu0
        %v1181 = vadd.f32 %v388, %v1180
        %v1182 = vpop.f32.mrb[0].mxu0
        %1183 = vmatprep.mubr.bf16.mxu0 %v707
        %1184 = vmatmul.mubr.bf16.gmra.mrb[0].mxu0 %v706
        %v1185 = vpop.f32.mrb[0].mxu0
        %v1186 = vadd.f32 %v388, %v1185
        %v1187 = vpop.f32.mrb[0].mxu0
        %v1188 = vpop.f32.mrb[0].mxu0
        %v1189 = vadd.f32 %v388, %v1188
        %v1190 = vpop.f32.mrb[0].mxu0
        %1191 = vmatprep.mubr.bf16.mxu0 %v712
        %1192 = vmatmul.mubr.bf16.gmra.mrb[0].mxu0 %v711
        %v1193 = vpop.f32.mrb[0].mxu0
        %v1194 = vadd.f32 %v388, %v1193
        %v1195 = vpop.f32.mrb[0].mxu0
        %v1196 = vpop.f32.mrb[0].mxu0
        %v1197 = vadd.f32 %v388, %v1196
        %v1198 = vpop.f32.mrb[0].mxu0
        %1199 = vmatprep.mubr.bf16.mxu0 %v717
        %1200 = vmatmul.mubr.bf16.gmra.mrb[0].mxu0 %v716
        %v1201 = vpop.f32.mrb[0].mxu0
        %v1202 = vadd.f32 %v388, %v1201
        %v1203 = vpop.f32.mrb[0].mxu0
        %v1204 = vpop.f32.mrb[0].mxu0
        %v1205 = vadd.f32 %v388, %v1204
        %v1206 = vpop.f32.mrb[0].mxu0
        %1207 = vmatprep.mubr.bf16.mxu0 %v722
        %1208 = vmatmul.mubr.bf16.gmra.mrb[0].mxu0 %v721
        %v1209 = vpop.f32.mrb[0].mxu0
        %v1210 = vadd.f32 %v388, %v1209
        %v1211 = vpop.f32.mrb[0].mxu0
        %v1212 = vpop.f32.mrb[0].mxu0
        %v1213 = vadd.f32 %v388, %v1212
        %v1214 = vpop.f32.mrb[0].mxu0
        %1215 = vdwg.mxu0
        %1216 = vmatprep.subr.bf16.mxu0 0
        %1217 = vmatpush1.bf16.msra.mxu0 %v950
        %1218 = vmatprep.subr.bf16.mxu0 0
        %1219 = vmatpush1.bf16.msra.mxu0 %v951
        %1220 = vmatprep.subr.bf16.mxu0 0
        %1221 = vmatpush1.bf16.msra.mxu0 %v952
        %1222 = vmatprep.subr.bf16.mxu0 0
        %1223 = vmatpush1.bf16.msra.mxu0 %v953
        %1224 = vmatprep.subr.bf16.mxu0 0
        %1225 = vmatpush1.bf16.msra.mxu0 %v954
        %1226 = vmatprep.subr.bf16.mxu0 0
        %1227 = vmatpush1.bf16.msra.mxu0 %v955
        %1228 = vmatprep.subr.bf16.mxu0 0
        %1229 = vmatpush1.bf16.msra.mxu0 %v956
        %1230 = vmatprep.subr.bf16.mxu0 0
        %1231 = vmatpush1.bf16.msra.mxu0 %v957
        %1232 = vmatprep.subr.bf16.mxu0 0
        %1233 = vmatpush1.bf16.msra.mxu0 %v958
        %1234 = vmatprep.subr.bf16.mxu0 0
        %1235 = vmatpush1.bf16.msra.mxu0 %v959
        %1236 = vmatprep.subr.bf16.mxu0 0
        %1237 = vmatpush1.bf16.msra.mxu0 %v960
        %1238 = vmatprep.subr.bf16.mxu0 0
        %1239 = vmatpush1.bf16.msra.mxu0 %v961
        %1240 = vmatprep.subr.bf16.mxu0 0
        %1241 = vmatpush1.bf16.msra.mxu0 %v962
        %1242 = vmatprep.subr.bf16.mxu0 0
        %1243 = vmatpush1.bf16.msra.mxu0 %v963
        %1244 = vmatprep.subr.bf16.mxu0 0
        %1245 = vmatpush1.bf16.msra.mxu0 %v964
        %1246 = vmatprep.subr.bf16.mxu0 0
        %1247 = vmatpush1.bf16.msra.mxu0 %v965
        %1248 = vmatprep.mubr.bf16.mxu0 %v649
        %1249 = vmatmul.mubr.bf16.gmra.mrb[0].mxu0 %v648
        %v1250 = vpop.f32.mrb[0].mxu0
        %v1251 = vadd.f32 %v1090, %v1250
        %v1252 = vpop.f32.mrb[0].mxu0
        %v1253 = vpop.f32.mrb[0].mxu0
        %v1254 = vadd.f32 %v1093, %v1253
        %v1255 = vpop.f32.mrb[0].mxu0
        %1256 = vmatprep.mubr.bf16.mxu0 %v654
        %1257 = vmatmul.mubr.bf16.gmra.mrb[0].mxu0 %v653
        %v1258 = vpop.f32.mrb[0].mxu0
        %v1259 = vadd.f32 %v1098, %v1258
        %v1260 = vpop.f32.mrb[0].mxu0
        %v1261 = vpop.f32.mrb[0].mxu0
        %v1262 = vadd.f32 %v1101, %v1261
        %v1263 = vpop.f32.mrb[0].mxu0
        %1264 = vmatprep.mubr.bf16.mxu0 %v659
        %1265 = vmatmul.mubr.bf16.gmra.mrb[0].mxu0 %v658
        %v1266 = vpop.f32.mrb[0].mxu0
        %v1267 = vadd.f32 %v1106, %v1266
        %v1268 = vpop.f32.mrb[0].mxu0
        %v1269 = vpop.f32.mrb[0].mxu0
        %v1270 = vadd.f32 %v1109, %v1269
        %v1271 = vpop.f32.mrb[0].mxu0
        %1272 = vmatprep.mubr.bf16.mxu0 %v664
        %1273 = vmatmul.mubr.bf16.gmra.mrb[0].mxu0 %v663
        %v1274 = vpop.f32.mrb[0].mxu0
        %v1275 = vadd.f32 %v1114, %v1274
        %v1276 = vpop.f32.mrb[0].mxu0
        %v1277 = vpop.f32.mrb[0].mxu0
        %v1278 = vadd.f32 %v1117, %v1277
        %v1279 = vpop.f32.mrb[0].mxu0
        %1280 = vmatprep.mubr.bf16.mxu0 %v669
        %1281 = vmatmul.mubr.bf16.gmra.mrb[0].mxu0 %v668
        %v1282 = vpop.f32.mrb[0].mxu0
        %v1283 = vadd.f32 %v1122, %v1282
        %v1284 = vpop.f32.mrb[0].mxu0
        %v1285 = vpop.f32.mrb[0].mxu0
        %v1286 = vadd.f32 %v1125, %v1285
        %v1287 = vpop.f32.mrb[0].mxu0
        %1288 = vmatprep.mubr.bf16.mxu0 %v674
        %1289 = vmatmul.mubr.bf16.gmra.mrb[0].mxu0 %v673
        %v1290 = vpop.f32.mrb[0].mxu0
        %v1291 = vadd.f32 %v1130, %v1290
        %v1292 = vpop.f32.mrb[0].mxu0
        %v1293 = vpop.f32.mrb[0].mxu0
        %v1294 = vadd.f32 %v1133, %v1293
        %v1295 = vpop.f32.mrb[0].mxu0
        %1296 = vmatprep.mubr.bf16.mxu0 %v679
        %1297 = vmatmul.mubr.bf16.gmra.mrb[0].mxu0 %v678
        %v1298 = vpop.f32.mrb[0].mxu0
        %v1299 = vadd.f32 %v1138, %v1298
        %v1300 = vpop.f32.mrb[0].mxu0
        %v1301 = vpop.f32.mrb[0].mxu0
        %v1302 = vadd.f32 %v1141, %v1301
        %v1303 = vpop.f32.mrb[0].mxu0
        %1304 = vmatprep.mubr.bf16.mxu0 %v684
        %1305 = vmatmul.mubr.bf16.gmra.mrb[0].mxu0 %v683
        %v1306 = vpop.f32.mrb[0].mxu0
        %v1307 = vadd.f32 %v1146, %v1306
        %v1308 = vpop.f32.mrb[0].mxu0
        %v1309 = vpop.f32.mrb[0].mxu0
        %v1310 = vadd.f32 %v1149, %v1309
        %v1311 = vpop.f32.mrb[0].mxu0
        %1312 = vmatprep.mubr.bf16.mxu0 %v689
        %1313 = vmatmul.mubr.bf16.gmra.mrb[0].mxu0 %v688
        %v1314 = vpop.f32.mrb[0].mxu0
        %v1315 = vadd.f32 %v1154, %v1314
        %v1316 = vpop.f32.mrb[0].mxu0
        %v1317 = vpop.f32.mrb[0].mxu0
        %v1318 = vadd.f32 %v1157, %v1317
        %v1319 = vpop.f32.mrb[0].mxu0
        %1320 = vmatprep.mubr.bf16.mxu0 %v694
        %1321 = vmatmul.mubr.bf16.gmra.mrb[0].mxu0 %v693
        %v1322 = vpop.f32.mrb[0].mxu0
        %v1323 = vadd.f32 %v1162, %v1322
        %v1324 = vpop.f32.mrb[0].mxu0
        %v1325 = vpop.f32.mrb[0].mxu0
        %v1326 = vadd.f32 %v1165, %v1325
        %v1327 = vpop.f32.mrb[0].mxu0
        %1328 = vmatprep.mubr.bf16.mxu0 %v699
        %1329 = vmatmul.mubr.bf16.gmra.mrb[0].mxu0 %v698
        %v1330 = vpop.f32.mrb[0].mxu0
        %v1331 = vadd.f32 %v1170, %v1330
        %v1332 = vpop.f32.mrb[0].mxu0
        %v1333 = vpop.f32.mrb[0].mxu0
        %v1334 = vadd.f32 %v1173, %v1333
        %v1335 = vpop.f32.mrb[0].mxu0
        %1336 = vmatprep.mubr.bf16.mxu0 %v704
        %1337 = vmatmul.mubr.bf16.gmra.mrb[0].mxu0 %v703
        %v1338 = vpop.f32.mrb[0].mxu0
        %v1339 = vadd.f32 %v1178, %v1338
        %v1340 = vpop.f32.mrb[0].mxu0
        %v1341 = vpop.f32.mrb[0].mxu0
        %v1342 = vadd.f32 %v1181, %v1341
        %v1343 = vpop.f32.mrb[0].mxu0
        %1344 = vmatprep.mubr.bf16.mxu0 %v709
        %1345 = vmatmul.mubr.bf16.gmra.mrb[0].mxu0 %v708
        %v1346 = vpop.f32.mrb[0].mxu0
        %v1347 = vadd.f32 %v1186, %v1346
        %v1348 = vpop.f32.mrb[0].mxu0
        %v1349 = vpop.f32.mrb[0].mxu0
        %v1350 = vadd.f32 %v1189, %v1349
        %v1351 = vpop.f32.mrb[0].mxu0
        %1352 = vmatprep.mubr.bf16.mxu0 %v714
        %1353 = vmatmul.mubr.bf16.gmra.mrb[0].mxu0 %v713
        %v1354 = vpop.f32.mrb[0].mxu0
        %v1355 = vadd.f32 %v1194, %v1354
        %v1356 = vpop.f32.mrb[0].mxu0
        %v1357 = vpop.f32.mrb[0].mxu0
        %v1358 = vadd.f32 %v1197, %v1357
        %v1359 = vpop.f32.mrb[0].mxu0
        %1360 = vmatprep.mubr.bf16.mxu0 %v719
        %1361 = vmatmul.mubr.bf16.gmra.mrb[0].mxu0 %v718
        %v1362 = vpop.f32.mrb[0].mxu0
        %v1363 = vadd.f32 %v1202, %v1362
        %v1364 = vpop.f32.mrb[0].mxu0
        %v1365 = vpop.f32.mrb[0].mxu0
        %v1366 = vadd.f32 %v1205, %v1365
        %v1367 = vpop.f32.mrb[0].mxu0
        %1368 = vmatprep.mubr.bf16.mxu0 %v724
        %1369 = vmatmul.mubr.bf16.gmra.mrb[0].mxu0 %v723
        %v1370 = vpop.f32.mrb[0].mxu0
        %v1371 = vadd.f32 %v1210, %v1370
        %v1372 = vpop.f32.mrb[0].mxu0
        %v1373 = vpop.f32.mrb[0].mxu0
        %v1374 = vadd.f32 %v1213, %v1373
        %v1375 = vpop.f32.mrb[0].mxu0
        %1376 = vdwg.mxu0
        %1377 = vmatprep.subr.bf16.mxu0 0
        %1378 = vmatpush1.bf16.msra.mxu0 %v966
        %1379 = vmatprep.subr.bf16.mxu0 0
        %1380 = vmatpush1.bf16.msra.mxu0 %v967
        %1381 = vmatprep.subr.bf16.mxu0 0
        %1382 = vmatpush1.bf16.msra.mxu0 %v968
        %1383 = vmatprep.subr.bf16.mxu0 0
        %1384 = vmatpush1.bf16.msra.mxu0 %v969
        %1385 = vmatprep.subr.bf16.mxu0 0
        %1386 = vmatpush1.bf16.msra.mxu0 0
        %1387 = vmatprep.subr.bf16.mxu0 0
        %1388 = vmatpush1.bf16.msra.mxu0 0
        %1389 = vmatprep.subr.bf16.mxu0 0
        %1390 = vmatpush1.bf16.msra.mxu0 0
        %1391 = vmatprep.subr.bf16.mxu0 0
        %1392 = vmatpush1.bf16.msra.mxu0 0
        %1393 = vmatprep.subr.bf16.mxu0 0
        %1394 = vmatpush1.bf16.msra.mxu0 0
        %1395 = vmatprep.subr.bf16.mxu0 0
        %1396 = vmatpush1.bf16.msra.mxu0 0
        %1397 = vmatprep.subr.bf16.mxu0 0
        %1398 = vmatpush1.bf16.msra.mxu0 0
        %1399 = vmatprep.subr.bf16.mxu0 0
        %1400 = vmatpush1.bf16.msra.mxu0 0
        %1401 = vmatprep.subr.bf16.mxu0 0
        %1402 = vmatpush1.bf16.msra.mxu0 0
        %1403 = vmatprep.subr.bf16.mxu0 0
        %1404 = vmatpush1.bf16.msra.mxu0 0
        %1405 = vmatprep.subr.bf16.mxu0 0
        %1406 = vmatpush1.bf16.msra.mxu0 0
        %1407 = vmatprep.subr.bf16.mxu0 0
        %1408 = vmatpush1.bf16.msra.mxu0 0
        %1409 = vmatprep.mubr.bf16.mxu0 0
        %1410 = vmatmul.mubr.bf16.gmra.mrb[0].mxu0 %v1008
        %v1411 = vpop.f32.mrb[0].mxu0
        %v1412 = vadd.f32 %v1251, %v1411
        %v1413 = vpop.f32.mrb[0].mxu0
        %v1414 = vpop.f32.mrb[0].mxu0
        %v1415 = vadd.f32 %v1254, %v1414
        %v1416 = vpop.f32.mrb[0].mxu0
        %1417 = vmatprep.mubr.bf16.mxu0 0
        %1418 = vmatmul.mubr.bf16.gmra.mrb[0].mxu0 %v1011
        %v1419 = vpop.f32.mrb[0].mxu0
        %v1420 = vadd.f32 %v1259, %v1419
        %v1421 = vpop.f32.mrb[0].mxu0
        %v1422 = vpop.f32.mrb[0].mxu0
        %v1423 = vadd.f32 %v1262, %v1422
        %v1424 = vpop.f32.mrb[0].mxu0
        %1425 = vmatprep.mubr.bf16.mxu0 0
        %1426 = vmatmul.mubr.bf16.gmra.mrb[0].mxu0 %v1014
        %v1427 = vpop.f32.mrb[0].mxu0
        %v1428 = vadd.f32 %v1267, %v1427
        %v1429 = vpop.f32.mrb[0].mxu0
        %v1430 = vpop.f32.mrb[0].mxu0
        %v1431 = vadd.f32 %v1270, %v1430
        %v1432 = vpop.f32.mrb[0].mxu0
        %1433 = vmatprep.mubr.bf16.mxu0 0
        %1434 = vmatmul.mubr.bf16.gmra.mrb[0].mxu0 %v1017
        %v1435 = vpop.f32.mrb[0].mxu0
        %v1436 = vadd.f32 %v1275, %v1435
        %v1437 = vpop.f32.mrb[0].mxu0
        %v1438 = vpop.f32.mrb[0].mxu0
        %v1439 = vadd.f32 %v1278, %v1438
        %v1440 = vpop.f32.mrb[0].mxu0
        %1441 = vmatprep.mubr.bf16.mxu0 0
        %1442 = vmatmul.mubr.bf16.gmra.mrb[0].mxu0 %v1020
        %v1443 = vpop.f32.mrb[0].mxu0
        %v1444 = vadd.f32 %v1283, %v1443
        %v1445 = vpop.f32.mrb[0].mxu0
        %v1446 = vpop.f32.mrb[0].mxu0
        %v1447 = vadd.f32 %v1286, %v1446
        %v1448 = vpop.f32.mrb[0].mxu0
        %1449 = vmatprep.mubr.bf16.mxu0 0
        %1450 = vmatmul.mubr.bf16.gmra.mrb[0].mxu0 %v1023
        %v1451 = vpop.f32.mrb[0].mxu0
        %v1452 = vadd.f32 %v1291, %v1451
        %v1453 = vpop.f32.mrb[0].mxu0
        %v1454 = vpop.f32.mrb[0].mxu0
        %v1455 = vadd.f32 %v1294, %v1454
        %v1456 = vpop.f32.mrb[0].mxu0
        %1457 = vmatprep.mubr.bf16.mxu0 0
        %1458 = vmatmul.mubr.bf16.gmra.mrb[0].mxu0 %v1026
        %v1459 = vpop.f32.mrb[0].mxu0
        %v1460 = vadd.f32 %v1299, %v1459
        %v1461 = vpop.f32.mrb[0].mxu0
        %v1462 = vpop.f32.mrb[0].mxu0
        %v1463 = vadd.f32 %v1302, %v1462
        %v1464 = vpop.f32.mrb[0].mxu0
        %1465 = vmatprep.mubr.bf16.mxu0 0
        %1466 = vmatmul.mubr.bf16.gmra.mrb[0].mxu0 %v1029
        %v1467 = vpop.f32.mrb[0].mxu0
        %v1468 = vadd.f32 %v1307, %v1467
        %v1469 = vpop.f32.mrb[0].mxu0
        %v1470 = vpop.f32.mrb[0].mxu0
        %v1471 = vadd.f32 %v1310, %v1470
        %v1472 = vpop.f32.mrb[0].mxu0
        %1473 = vmatprep.mubr.bf16.mxu0 0
        %1474 = vmatmul.mubr.bf16.gmra.mrb[0].mxu0 %v1032
        %v1475 = vpop.f32.mrb[0].mxu0
        %v1476 = vadd.f32 %v1315, %v1475
        %v1477 = vpop.f32.mrb[0].mxu0
        %v1478 = vpop.f32.mrb[0].mxu0
        %v1479 = vadd.f32 %v1318, %v1478
        %v1480 = vpop.f32.mrb[0].mxu0
        %1481 = vmatprep.mubr.bf16.mxu0 0
        %1482 = vmatmul.mubr.bf16.gmra.mrb[0].mxu0 %v1035
        %v1483 = vpop.f32.mrb[0].mxu0
        %v1484 = vadd.f32 %v1323, %v1483
        %v1485 = vpop.f32.mrb[0].mxu0
        %v1486 = vpop.f32.mrb[0].mxu0
        %v1487 = vadd.f32 %v1326, %v1486
        %v1488 = vpop.f32.mrb[0].mxu0
        %1489 = vmatprep.mubr.bf16.mxu0 0
        %1490 = vmatmul.mubr.bf16.gmra.mrb[0].mxu0 %v1038
        %v1491 = vpop.f32.mrb[0].mxu0
        %v1492 = vadd.f32 %v1331, %v1491
        %v1493 = vpop.f32.mrb[0].mxu0
        %v1494 = vpop.f32.mrb[0].mxu0
        %v1495 = vadd.f32 %v1334, %v1494
        %v1496 = vpop.f32.mrb[0].mxu0
        %1497 = vmatprep.mubr.bf16.mxu0 0
        %1498 = vmatmul.mubr.bf16.gmra.mrb[0].mxu0 %v1041
        %v1499 = vpop.f32.mrb[0].mxu0
        %v1500 = vadd.f32 %v1339, %v1499
        %v1501 = vpop.f32.mrb[0].mxu0
        %v1502 = vpop.f32.mrb[0].mxu0
        %v1503 = vadd.f32 %v1342, %v1502
        %v1504 = vpop.f32.mrb[0].mxu0
        %1505 = vmatprep.mubr.bf16.mxu0 0
        %1506 = vmatmul.mubr.bf16.gmra.mrb[0].mxu0 %v1044
        %v1507 = vpop.f32.mrb[0].mxu0
        %v1508 = vadd.f32 %v1347, %v1507
        %v1509 = vpop.f32.mrb[0].mxu0
        %v1510 = vpop.f32.mrb[0].mxu0
        %v1511 = vadd.f32 %v1350, %v1510
        %v1512 = vpop.f32.mrb[0].mxu0
        %1513 = vmatprep.mubr.bf16.mxu0 0
        %1514 = vmatmul.mubr.bf16.gmra.mrb[0].mxu0 %v1047
        %v1515 = vpop.f32.mrb[0].mxu0
        %v1516 = vadd.f32 %v1355, %v1515
        %v1517 = vpop.f32.mrb[0].mxu0
        %v1518 = vpop.f32.mrb[0].mxu0
        %v1519 = vadd.f32 %v1358, %v1518
        %v1520 = vpop.f32.mrb[0].mxu0
        %1521 = vmatprep.mubr.bf16.mxu0 0
        %1522 = vmatmul.mubr.bf16.gmra.mrb[0].mxu0 %v1050
        %v1523 = vpop.f32.mrb[0].mxu0
        %v1524 = vadd.f32 %v1363, %v1523
        %v1525 = vpop.f32.mrb[0].mxu0
        %v1526 = vpop.f32.mrb[0].mxu0
        %v1527 = vadd.f32 %v1366, %v1526
        %v1528 = vpop.f32.mrb[0].mxu0
        %1529 = vmatprep.mubr.bf16.mxu0 0
        %1530 = vmatmul.mubr.bf16.gmra.mrb[0].mxu0 %v1053
        %v1531 = vpop.f32.mrb[0].mxu0
        %v1532 = vadd.f32 %v1371, %v1531
        %v1533 = vpop.f32.mrb[0].mxu0
        %v1534 = vpop.f32.mrb[0].mxu0
        %v1535 = vadd.f32 %v1374, %v1534
        %v1536 = vpop.f32.mrb[0].mxu0
        %1537 = vdwg.mxu0
        %v1538 = vmax.f32 %v1412, 0.0
        %v1539 = vmax.f32 %v1415, 0.0
        %v1540 = vmax.f32 %v1420, 0.0
        %v1541 = vmax.f32 %v1423, 0.0
        %v1542 = vmax.f32 %v1428, 0.0
        %v1543 = vmax.f32 %v1431, 0.0
        %v1544 = vmax.f32 %v1436, 0.0
        %v1545 = vmax.f32 %v1439, 0.0
        %v1546 = vmax.f32 %v1444, 0.0
        %v1547 = vmax.f32 %v1447, 0.0
        %v1548 = vmax.f32 %v1452, 0.0
        %v1549 = vmax.f32 %v1455, 0.0
        %v1550 = vmax.f32 %v1460, 0.0
        %v1551 = vmax.f32 %v1463, 0.0
        %v1552 = vmax.f32 %v1468, 0.0
        %v1553 = vmax.f32 %v1471, 0.0
        %v1554 = vmax.f32 %v1476, 0.0
        %v1555 = vmax.f32 %v1479, 0.0
        %v1556 = vmax.f32 %v1484, 0.0
        %v1557 = vmax.f32 %v1487, 0.0
        %v1558 = vmax.f32 %v1492, 0.0
        %v1559 = vmax.f32 %v1495, 0.0
        %v1560 = vmax.f32 %v1500, 0.0
        %v1561 = vmax.f32 %v1503, 0.0
        %v1562 = vmax.f32 %v1508, 0.0
        %v1563 = vmax.f32 %v1511, 0.0
        %v1564 = vmax.f32 %v1516, 0.0
        %v1565 = vmax.f32 %v1519, 0.0
        %v1566 = vmax.f32 %v1524, 0.0
        %v1567 = vmax.f32 %v1527, 0.0
        %v1568 = vmax.f32 %v1532, 0.0
        %v1569 = vmax.f32 %v1535, 0.0
        %v1570 = vld [vmem:[%s212] sm:$0xff]
        %v1571 = vld [vmem:[%s212 + $0x8] sm:$0xff]
        %v1572 = vld [vmem:[%s212 + $0x10] sm:$0xf]
        %v1573 = vld [vmem:[%s212 + $0x14] sm:$0xff]
        %v1574 = vld [vmem:[%s212 + $0x1c] sm:$0xff]
        %v1575 = vld [vmem:[%s212 + $0x24] sm:$0xf]
        %v1576 = vld [vmem:[%s212 + $0x28] sm:$0xff]
        %v1577 = vld [vmem:[%s212 + $0x30] sm:$0xff]
        %v1578 = vld [vmem:[%s212 + $0x38] sm:$0xf]
        %v1579 = vld [vmem:[%s212 + $0x3c] sm:$0xff]
        %v1580 = vld [vmem:[%s212 + $0x44] sm:$0xff]
        %v1581 = vld [vmem:[%s212 + $0x4c] sm:$0xf]
        %v1582 = vld [vmem:[%s212 + $0x50] sm:$0xff]
        %v1583 = vld [vmem:[%s212 + $0x58] sm:$0xff]
        %v1584 = vld [vmem:[%s212 + $0x60] sm:$0xf]
        %v1585 = vld [vmem:[%s212 + $0x64] sm:$0xff]
        %v1586 = vld [vmem:[%s212 + $0x6c] sm:$0xff]
        %v1587 = vld [vmem:[%s212 + $0x74] sm:$0xf]
        %v1588 = vld [vmem:[%s212 + $0x78] sm:$0xff]
        %v1589 = vld [vmem:[%s212 + $0x80] sm:$0xff]
        %v1590 = vld [vmem:[%s212 + $0x88] sm:$0xf]
        %v1591 = vld [vmem:[%s212 + $0x8c] sm:$0xff]
        %v1592 = vld [vmem:[%s212 + $0x94] sm:$0xff]
        %v1593 = vld [vmem:[%s212 + $0x9c] sm:$0xf]
        %v1594 = vld [vmem:[%s212 + $0xa0] sm:$0xff]
        %v1595 = vld [vmem:[%s212 + $0xa8] sm:$0xff]
        %v1596 = vld [vmem:[%s212 + $0xb0] sm:$0xf]
        %v1597 = vld [vmem:[%s212 + $0xb4] sm:$0xff]
        %v1598 = vld [vmem:[%s212 + $0xbc] sm:$0xff]
        %v1599 = vld [vmem:[%s212 + $0xc4] sm:$0xf]
        %v1600 = vld [vmem:[%s212 + $0xc8] sm:$0xff]
        %v1601 = vld [vmem:[%s212 + $0xd0] sm:$0xff]
        %v1602 = vld [vmem:[%s212 + $0xd8] sm:$0xf]
        %v1603 = vld [vmem:[%s212 + $0xdc] sm:$0xff]
        %v1604 = vld [vmem:[%s212 + $0xe4] sm:$0xff]
        %v1605 = vld [vmem:[%s212 + $0xec] sm:$0xf]
        %v1606 = vld [vmem:[%s212 + $0xf0] sm:$0xff]
        %v1607 = vld [vmem:[%s212 + $0xf8] sm:$0xff]
        %v1608 = vld [vmem:[%s212 + $0x100] sm:$0xf]
        %v1609 = vld [vmem:[%s212 + $0x104] sm:$0xff]
        %v1610 = vld [vmem:[%s212 + $0x10c] sm:$0xff]
        %v1611 = vld [vmem:[%s212 + $0x114] sm:$0xf]
        %v1612 = vld [vmem:[%s212 + $0x118] sm:$0xff]
        %v1613 = vld [vmem:[%s212 + $0x120] sm:$0xff]
        %v1614 = vld [vmem:[%s212 + $0x128] sm:$0xf]
        %v1615 = vld [vmem:[%s212 + $0x12c] sm:$0xff]
        %v1616 = vld [vmem:[%s212 + $0x134] sm:$0xff]
        %v1617 = vld [vmem:[%s212 + $0x13c] sm:$0xf]
        %v1618 = vld [vmem:[%s212 + $0x140] sm:$0xff]
        %v1619 = vld [vmem:[%s212 + $0x148] sm:$0xff]
        %v1620 = vld [vmem:[%s212 + $0x150] sm:$0xf]
        %v1621 = vld [vmem:[%s212 + $0x154] sm:$0xff]
        %v1622 = vld [vmem:[%s212 + $0x15c] sm:$0xff]
        %v1623 = vld [vmem:[%s212 + $0x164] sm:$0xf]
        %v1624 = vld [vmem:[%s212 + $0x168] sm:$0xff]
        %v1625 = vld [vmem:[%s212 + $0x170] sm:$0xff]
        %v1626 = vld [vmem:[%s212 + $0x178] sm:$0xf]
        %v1627 = vld [vmem:[%s212 + $0x17c] sm:$0xff]
        %v1628 = vld [vmem:[%s212 + $0x184] sm:$0xff]
        %v1629 = vld [vmem:[%s212 + $0x18c] sm:$0xf]
        %v1630 = vld [vmem:[%s212 + $0x190] sm:$0xff]
        %v1631 = vld [vmem:[%s212 + $0x198] sm:$0xff]
        %v1632 = vld [vmem:[%s212 + $0x1a0] sm:$0xf]
        %v1633 = vld [vmem:[%s212 + $0x1a4] sm:$0xff]
        %v1634 = vld [vmem:[%s212 + $0x1ac] sm:$0xff]
        %v1635 = vld [vmem:[%s212 + $0x1b4] sm:$0xf]
        %v1636 = vld [vmem:[%s212 + $0x1b8] sm:$0xff]
        %v1637 = vld [vmem:[%s212 + $0x1c0] sm:$0xff]
        %v1638 = vld [vmem:[%s212 + $0x1c8] sm:$0xf]
        %v1639 = vld [vmem:[%s212 + $0x1cc] sm:$0xff]
        %v1640 = vld [vmem:[%s212 + $0x1d4] sm:$0xff]
        %v1641 = vld [vmem:[%s212 + $0x1dc] sm:$0xf]
        %v1642 = vld [vmem:[%s212 + $0x1e0] sm:$0xff]
        %v1643 = vld [vmem:[%s212 + $0x1e8] sm:$0xff]
        %v1644 = vld [vmem:[%s212 + $0x1f0] sm:$0xf]
        %v1645 = vld [vmem:[%s212 + $0x1f4] sm:$0xff]
        %v1646 = vld [vmem:[%s212 + $0x1fc] sm:$0xff]
        %v1647 = vld [vmem:[%s212 + $0x204] sm:$0xf]
        %v1648 = vld [vmem:[%s212 + $0x208] sm:$0xff]
        %v1649 = vld [vmem:[%s212 + $0x210] sm:$0xff]
        %v1650 = vld [vmem:[%s212 + $0x218] sm:$0xf]
        %v1651 = vld [vmem:[%s212 + $0x21c] sm:$0xff]
        %v1652 = vld [vmem:[%s212 + $0x224] sm:$0xff]
        %v1653 = vld [vmem:[%s212 + $0x22c] sm:$0xf]
        %v1654 = vld [vmem:[%s212 + $0x230] sm:$0xff]
        %v1655 = vld [vmem:[%s212 + $0x238] sm:$0xff]
        %v1656 = vld [vmem:[%s212 + $0x240] sm:$0xf]
        %v1657 = vld [vmem:[%s212 + $0x244] sm:$0xff]
        %v1658 = vld [vmem:[%s212 + $0x24c] sm:$0xff]
        %v1659 = vld [vmem:[%s212 + $0x254] sm:$0xf]
        %v1660 = vld [vmem:[%s212 + $0x258] sm:$0xff]
        %v1661 = vld [vmem:[%s212 + $0x260] sm:$0xff]
        %v1662 = vld [vmem:[%s212 + $0x268] sm:$0xf]
        %v1663 = vld [vmem:[%s212 + $0x26c] sm:$0xff]
        %v1664 = vld [vmem:[%s212 + $0x274] sm:$0xff]
        %v1665 = vld [vmem:[%s212 + $0x27c] sm:$0xf]
        %v1762 = vunpack.c.l.b16 %v1570
        %v1763 = vunpack.c.h.b16 %v1570
        %v1764 = vunpack.c.l.b16 %v1571
        %v1765 = vunpack.c.h.b16 %v1571
        %v1766 = vunpack.c.l.b16 %v1572
        %v1767 = vunpack.c.l.b16 %v1573
        %v1768 = vunpack.c.h.b16 %v1573
        %v1769 = vunpack.c.l.b16 %v1574
        %v1770 = vunpack.c.h.b16 %v1574
        %v1771 = vunpack.c.l.b16 %v1575
        %v1772 = vunpack.c.l.b16 %v1576
        %v1773 = vunpack.c.h.b16 %v1576
        %v1774 = vunpack.c.l.b16 %v1577
        %v1775 = vunpack.c.h.b16 %v1577
        %v1776 = vunpack.c.l.b16 %v1578
        %v1777 = vunpack.c.l.b16 %v1579
        %v1778 = vunpack.c.h.b16 %v1579
        %v1779 = vunpack.c.l.b16 %v1580
        %v1780 = vunpack.c.h.b16 %v1580
        %v1781 = vunpack.c.l.b16 %v1581
        %v1782 = vunpack.c.l.b16 %v1582
        %v1783 = vunpack.c.h.b16 %v1582
        %v1784 = vunpack.c.l.b16 %v1583
        %v1785 = vunpack.c.h.b16 %v1583
        %v1786 = vunpack.c.l.b16 %v1584
        %v1787 = vunpack.c.l.b16 %v1585
        %v1788 = vunpack.c.h.b16 %v1585
        %v1789 = vunpack.c.l.b16 %v1586
        %v1790 = vunpack.c.h.b16 %v1586
        %v1791 = vunpack.c.l.b16 %v1587
        %v1792 = vunpack.c.l.b16 %v1588
        %v1793 = vunpack.c.h.b16 %v1588
        %v1794 = vunpack.c.l.b16 %v1589
        %v1795 = vunpack.c.h.b16 %v1589
        %v1796 = vunpack.c.l.b16 %v1590
        %v1797 = vunpack.c.l.b16 %v1591
        %v1798 = vunpack.c.h.b16 %v1591
        %v1799 = vunpack.c.l.b16 %v1592
        %v1800 = vunpack.c.h.b16 %v1592
        %v1801 = vunpack.c.l.b16 %v1593
        %v1802 = vunpack.c.l.b16 %v1594
        %v1803 = vunpack.c.h.b16 %v1594
        %v1804 = vunpack.c.l.b16 %v1595
        %v1805 = vunpack.c.h.b16 %v1595
        %v1806 = vunpack.c.l.b16 %v1596
        %v1807 = vunpack.c.l.b16 %v1597
        %v1808 = vunpack.c.h.b16 %v1597
        %v1809 = vunpack.c.l.b16 %v1598
        %v1810 = vunpack.c.h.b16 %v1598
        %v1811 = vunpack.c.l.b16 %v1599
        %v1812 = vunpack.c.l.b16 %v1600
        %v1813 = vunpack.c.h.b16 %v1600
        %v1814 = vunpack.c.l.b16 %v1601
        %v1815 = vunpack.c.h.b16 %v1601
        %v1816 = vunpack.c.l.b16 %v1602
        %v1817 = vunpack.c.l.b16 %v1603
        %v1818 = vunpack.c.h.b16 %v1603
        %v1819 = vunpack.c.l.b16 %v1604
        %v1820 = vunpack.c.h.b16 %v1604
        %v1821 = vunpack.c.l.b16 %v1605
        %v1822 = vunpack.c.l.b16 %v1606
        %v1823 = vunpack.c.h.b16 %v1606
        %v1824 = vunpack.c.l.b16 %v1607
        %v1825 = vunpack.c.h.b16 %v1607
        %v1826 = vunpack.c.l.b16 %v1608
        %v1827 = vunpack.c.l.b16 %v1609
        %v1828 = vunpack.c.h.b16 %v1609
        %v1829 = vunpack.c.l.b16 %v1610
        %v1830 = vunpack.c.h.b16 %v1610
        %v1831 = vunpack.c.l.b16 %v1611
        %v1832 = vunpack.c.l.b16 %v1612
        %v1833 = vunpack.c.h.b16 %v1612
        %v1834 = vunpack.c.l.b16 %v1613
        %v1835 = vunpack.c.h.b16 %v1613
        %v1836 = vunpack.c.l.b16 %v1614
        %v1837 = vunpack.c.l.b16 %v1615
        %v1838 = vunpack.c.h.b16 %v1615
        %v1839 = vunpack.c.l.b16 %v1616
        %v1840 = vunpack.c.h.b16 %v1616
        %v1841 = vunpack.c.l.b16 %v1617
        %v1842 = vunpack.c.l.b16 %v1618
        %v1843 = vunpack.c.h.b16 %v1618
        %v1844 = vunpack.c.l.b16 %v1619
        %v1845 = vunpack.c.h.b16 %v1619
        %v1846 = vunpack.c.l.b16 %v1620
        %v1847 = vunpack.c.l.b16 %v1621
        %v1848 = vunpack.c.h.b16 %v1621
        %v1849 = vunpack.c.l.b16 %v1622
        %v1850 = vunpack.c.h.b16 %v1622
        %v1851 = vunpack.c.l.b16 %v1623
        %v1852 = vunpack.c.l.b16 %v1624
        %v1853 = vunpack.c.h.b16 %v1624
        %v1854 = vunpack.c.l.b16 %v1625
        %v1855 = vunpack.c.h.b16 %v1625
        %v1856 = vunpack.c.l.b16 %v1626
        %v1857 = vunpack.c.l.b16 %v1627
        %v1858 = vunpack.c.h.b16 %v1627
        %v1859 = vunpack.c.l.b16 %v1628
        %v1860 = vunpack.c.h.b16 %v1628
        %v1861 = vunpack.c.l.b16 %v1629
        %v1862 = vunpack.c.l.b16 %v1630
        %v1863 = vunpack.c.h.b16 %v1630
        %v1864 = vunpack.c.l.b16 %v1631
        %v1865 = vunpack.c.h.b16 %v1631
        %v1866 = vunpack.c.l.b16 %v1632
        %v1867 = vunpack.c.l.b16 %v1633
        %v1868 = vunpack.c.h.b16 %v1633
        %v1869 = vunpack.c.l.b16 %v1634
        %v1870 = vunpack.c.h.b16 %v1634
        %v1871 = vunpack.c.l.b16 %v1635
        %v1872 = vunpack.c.l.b16 %v1636
        %v1873 = vunpack.c.h.b16 %v1636
        %v1874 = vunpack.c.l.b16 %v1637
        %v1875 = vunpack.c.h.b16 %v1637
        %v1876 = vunpack.c.l.b16 %v1638
        %v1877 = vunpack.c.l.b16 %v1639
        %v1878 = vunpack.c.h.b16 %v1639
        %v1879 = vunpack.c.l.b16 %v1640
        %v1880 = vunpack.c.h.b16 %v1640
        %v1881 = vunpack.c.l.b16 %v1641
        %v1882 = vunpack.c.l.b16 %v1642
        %v1883 = vunpack.c.h.b16 %v1642
        %v1884 = vunpack.c.l.b16 %v1643
        %v1885 = vunpack.c.h.b16 %v1643
        %v1886 = vunpack.c.l.b16 %v1644
        %v1887 = vunpack.c.l.b16 %v1645
        %v1888 = vunpack.c.h.b16 %v1645
        %v1889 = vunpack.c.l.b16 %v1646
        %v1890 = vunpack.c.h.b16 %v1646
        %v1891 = vunpack.c.l.b16 %v1647
        %v1892 = vunpack.c.l.b16 %v1648
        %v1893 = vunpack.c.h.b16 %v1648
        %v1894 = vunpack.c.l.b16 %v1649
        %v1895 = vunpack.c.h.b16 %v1649
        %v1896 = vunpack.c.l.b16 %v1650
        %v1897 = vunpack.c.l.b16 %v1651
        %v1898 = vunpack.c.h.b16 %v1651
        %v1899 = vunpack.c.l.b16 %v1652
        %v1900 = vunpack.c.h.b16 %v1652
        %v1901 = vunpack.c.l.b16 %v1653
        %v1902 = vunpack.c.l.b16 %v1654
        %v1903 = vunpack.c.h.b16 %v1654
        %v1904 = vunpack.c.l.b16 %v1655
        %v1905 = vunpack.c.h.b16 %v1655
        %v1906 = vunpack.c.l.b16 %v1656
        %v1907 = vunpack.c.l.b16 %v1657
        %v1908 = vunpack.c.h.b16 %v1657
        %v1909 = vunpack.c.l.b16 %v1658
        %v1910 = vunpack.c.h.b16 %v1658
        %v1911 = vunpack.c.l.b16 %v1659
        %v1912 = vunpack.c.l.b16 %v1660
        %v1913 = vunpack.c.h.b16 %v1660
        %v1914 = vunpack.c.l.b16 %v1661
        %v1915 = vunpack.c.h.b16 %v1661
        %v1916 = vunpack.c.l.b16 %v1662
        %v1917 = vunpack.c.l.b16 %v1663
        %v1918 = vunpack.c.h.b16 %v1663
        %v1919 = vunpack.c.l.b16 %v1664
        %v1920 = vunpack.c.h.b16 %v1664
        %v1921 = vunpack.c.l.b16 %v1665
        %v1922 = vpack.c.b16 %v1767, %v1762
        %v1923 = vpack.c.b16 %v1768, %v1763
        %v1924 = vpack.c.b16 %v1769, %v1764
        %v1925 = vpack.c.b16 %v1770, %v1765
        %v1926 = vpack.c.b16 %v1771, %v1766
        %v1927 = vpack.c.b16 %v1777, %v1772
        %v1928 = vpack.c.b16 %v1778, %v1773
        %v1929 = vpack.c.b16 %v1779, %v1774
        %v1930 = vpack.c.b16 %v1780, %v1775
        %v1931 = vpack.c.b16 %v1781, %v1776
        %v1932 = vpack.c.b16 %v1787, %v1782
        %v1933 = vpack.c.b16 %v1788, %v1783
        %v1934 = vpack.c.b16 %v1789, %v1784
        %v1935 = vpack.c.b16 %v1790, %v1785
        %v1936 = vpack.c.b16 %v1791, %v1786
        %v1937 = vpack.c.b16 %v1797, %v1792
        %v1938 = vpack.c.b16 %v1798, %v1793
        %v1939 = vpack.c.b16 %v1799, %v1794
        %v1940 = vpack.c.b16 %v1800, %v1795
        %v1941 = vpack.c.b16 %v1801, %v1796
        %v1942 = vpack.c.b16 %v1807, %v1802
        %v1943 = vpack.c.b16 %v1808, %v1803
        %v1944 = vpack.c.b16 %v1809, %v1804
        %v1945 = vpack.c.b16 %v1810, %v1805
        %v1946 = vpack.c.b16 %v1811, %v1806
        %v1947 = vpack.c.b16 %v1817, %v1812
        %v1948 = vpack.c.b16 %v1818, %v1813
        %v1949 = vpack.c.b16 %v1819, %v1814
        %v1950 = vpack.c.b16 %v1820, %v1815
        %v1951 = vpack.c.b16 %v1821, %v1816
        %v1952 = vpack.c.b16 %v1827, %v1822
        %v1953 = vpack.c.b16 %v1828, %v1823
        %v1954 = vpack.c.b16 %v1829, %v1824
        %v1955 = vpack.c.b16 %v1830, %v1825
        %v1956 = vpack.c.b16 %v1831, %v1826
        %v1957 = vpack.c.b16 %v1837, %v1832
        %v1958 = vpack.c.b16 %v1838, %v1833
        %v1959 = vpack.c.b16 %v1839, %v1834
        %v1960 = vpack.c.b16 %v1840, %v1835
        %v1961 = vpack.c.b16 %v1841, %v1836
        %v1962 = vpack.c.b16 %v1847, %v1842
        %v1963 = vpack.c.b16 %v1848, %v1843
        %v1964 = vpack.c.b16 %v1849, %v1844
        %v1965 = vpack.c.b16 %v1850, %v1845
        %v1966 = vpack.c.b16 %v1851, %v1846
        %v1967 = vpack.c.b16 %v1857, %v1852
        %v1968 = vpack.c.b16 %v1858, %v1853
        %v1969 = vpack.c.b16 %v1859, %v1854
        %v1970 = vpack.c.b16 %v1860, %v1855
        %v1971 = vpack.c.b16 %v1861, %v1856
        %v1972 = vpack.c.b16 %v1867, %v1862
        %v1973 = vpack.c.b16 %v1868, %v1863
        %v1974 = vpack.c.b16 %v1869, %v1864
        %v1975 = vpack.c.b16 %v1870, %v1865
        %v1976 = vpack.c.b16 %v1871, %v1866
        %v1977 = vpack.c.b16 %v1877, %v1872
        %v1978 = vpack.c.b16 %v1878, %v1873
        %v1979 = vpack.c.b16 %v1879, %v1874
        %v1980 = vpack.c.b16 %v1880, %v1875
        %v1981 = vpack.c.b16 %v1881, %v1876
        %v1982 = vpack.c.b16 %v1887, %v1882
        %v1983 = vpack.c.b16 %v1888, %v1883
        %v1984 = vpack.c.b16 %v1889, %v1884
        %v1985 = vpack.c.b16 %v1890, %v1885
        %v1986 = vpack.c.b16 %v1891, %v1886
        %v1987 = vpack.c.b16 %v1897, %v1892
        %v1988 = vpack.c.b16 %v1898, %v1893
        %v1989 = vpack.c.b16 %v1899, %v1894
        %v1990 = vpack.c.b16 %v1900, %v1895
        %v1991 = vpack.c.b16 %v1901, %v1896
        %v1992 = vpack.c.b16 %v1907, %v1902
        %v1993 = vpack.c.b16 %v1908, %v1903
        %v1994 = vpack.c.b16 %v1909, %v1904
        %v1995 = vpack.c.b16 %v1910, %v1905
        %v1996 = vpack.c.b16 %v1911, %v1906
        %v1997 = vpack.c.b16 %v1917, %v1912
        %v1998 = vpack.c.b16 %v1918, %v1913
        %v1999 = vpack.c.b16 %v1919, %v1914
        %v2000 = vpack.c.b16 %v1920, %v1915
        %v2001 = vpack.c.b16 %v1921, %v1916
        %v2067 = vsel %vm1006, %v1926, 0
        %v2070 = vsel %vm1006, %v1931, 0
        %v2073 = vsel %vm1006, %v1936, 0
        %v2076 = vsel %vm1006, %v1941, 0
        %v2079 = vsel %vm1006, %v1946, 0
        %v2082 = vsel %vm1006, %v1951, 0
        %v2085 = vsel %vm1006, %v1956, 0
        %v2088 = vsel %vm1006, %v1961, 0
        %v2091 = vsel %vm1006, %v1966, 0
        %v2094 = vsel %vm1006, %v1971, 0
        %v2097 = vsel %vm1006, %v1976, 0
        %v2100 = vsel %vm1006, %v1981, 0
        %v2103 = vsel %vm1006, %v1986, 0
        %v2106 = vsel %vm1006, %v1991, 0
        %v2109 = vsel %vm1006, %v1996, 0
        %v2112 = vsel %vm1006, %v2001, 0
        %2114 = vmatprep.subr.bf16.mxu0 0
        %2115 = vmatpush1.bf16.msra.mxu0 %v934
        %2116 = vmatprep.subr.bf16.mxu0 0
        %2117 = vmatpush1.bf16.msra.mxu0 %v935
        %2118 = vmatprep.subr.bf16.mxu0 0
        %2119 = vmatpush1.bf16.msra.mxu0 %v936
        %2120 = vmatprep.subr.bf16.mxu0 0
        %2121 = vmatpush1.bf16.msra.mxu0 %v937
        %2122 = vmatprep.subr.bf16.mxu0 0
        %2123 = vmatpush1.bf16.msra.mxu0 %v938
        %2124 = vmatprep.subr.bf16.mxu0 0
        %2125 = vmatpush1.bf16.msra.mxu0 %v939
        %2126 = vmatprep.subr.bf16.mxu0 0
        %2127 = vmatpush1.bf16.msra.mxu0 %v940
        %2128 = vmatprep.subr.bf16.mxu0 0
        %2129 = vmatpush1.bf16.msra.mxu0 %v941
        %2130 = vmatprep.subr.bf16.mxu0 0
        %2131 = vmatpush1.bf16.msra.mxu0 %v942
        %2132 = vmatprep.subr.bf16.mxu0 0
        %2133 = vmatpush1.bf16.msra.mxu0 %v943
        %2134 = vmatprep.subr.bf16.mxu0 0
        %2135 = vmatpush1.bf16.msra.mxu0 %v944
        %2136 = vmatprep.subr.bf16.mxu0 0
        %2137 = vmatpush1.bf16.msra.mxu0 %v945
        %2138 = vmatprep.subr.bf16.mxu0 0
        %2139 = vmatpush1.bf16.msra.mxu0 %v946
        %2140 = vmatprep.subr.bf16.mxu0 0
        %2141 = vmatpush1.bf16.msra.mxu0 %v947
        %2142 = vmatprep.subr.bf16.mxu0 0
        %2143 = vmatpush1.bf16.msra.mxu0 %v948
        %2144 = vmatprep.subr.bf16.mxu0 0
        %2145 = vmatpush1.bf16.msra.mxu0 %v949
        %2146 = vmatprep.mubr.bf16.mxu0 %v1923
        %2147 = vmatmul.mubr.bf16.gmra.mrb[0].mxu0 %v1922
        %v2148 = vpop.f32.mrb[0].mxu0
        %v2149 = vadd.f32 %v388, %v2148
        %v2150 = vpop.f32.mrb[0].mxu0
        %v2151 = vpop.f32.mrb[0].mxu0
        %v2152 = vadd.f32 %v388, %v2151
        %v2153 = vpop.f32.mrb[0].mxu0
        %2154 = vmatprep.mubr.bf16.mxu0 %v1928
        %2155 = vmatmul.mubr.bf16.gmra.mrb[0].mxu0 %v1927
        %v2156 = vpop.f32.mrb[0].mxu0
        %v2157 = vadd.f32 %v388, %v2156
        %v2158 = vpop.f32.mrb[0].mxu0
        %v2159 = vpop.f32.mrb[0].mxu0
        %v2160 = vadd.f32 %v388, %v2159
        %v2161 = vpop.f32.mrb[0].mxu0
        %2162 = vmatprep.mubr.bf16.mxu0 %v1933
        %2163 = vmatmul.mubr.bf16.gmra.mrb[0].mxu0 %v1932
        %v2164 = vpop.f32.mrb[0].mxu0
        %v2165 = vadd.f32 %v388, %v2164
        %v2166 = vpop.f32.mrb[0].mxu0
        %v2167 = vpop.f32.mrb[0].mxu0
        %v2168 = vadd.f32 %v388, %v2167
        %v2169 = vpop.f32.mrb[0].mxu0
        %2170 = vmatprep.mubr.bf16.mxu0 %v1938
        %2171 = vmatmul.mubr.bf16.gmra.mrb[0].mxu0 %v1937
        %v2172 = vpop.f32.mrb[0].mxu0
        %v2173 = vadd.f32 %v388, %v2172
        %v2174 = vpop.f32.mrb[0].mxu0
        %v2175 = vpop.f32.mrb[0].mxu0
        %v2176 = vadd.f32 %v388, %v2175
        %v2177 = vpop.f32.mrb[0].mxu0
        %2178 = vmatprep.mubr.bf16.mxu0 %v1943
        %2179 = vmatmul.mubr.bf16.gmra.mrb[0].mxu0 %v1942
        %v2180 = vpop.f32.mrb[0].mxu0
        %v2181 = vadd.f32 %v388, %v2180
        %v2182 = vpop.f32.mrb[0].mxu0
        %v2183 = vpop.f32.mrb[0].mxu0
        %v2184 = vadd.f32 %v388, %v2183
        %v2185 = vpop.f32.mrb[0].mxu0
        %2186 = vmatprep.mubr.bf16.mxu0 %v1948
        %2187 = vmatmul.mubr.bf16.gmra.mrb[0].mxu0 %v1947
        %v2188 = vpop.f32.mrb[0].mxu0
        %v2189 = vadd.f32 %v388, %v2188
        %v2190 = vpop.f32.mrb[0].mxu0
        %v2191 = vpop.f32.mrb[0].mxu0
        %v2192 = vadd.f32 %v388, %v2191
        %v2193 = vpop.f32.mrb[0].mxu0
        %2194 = vmatprep.mubr.bf16.mxu0 %v1953
        %2195 = vmatmul.mubr.bf16.gmra.mrb[0].mxu0 %v1952
        %v2196 = vpop.f32.mrb[0].mxu0
        %v2197 = vadd.f32 %v388, %v2196
        %v2198 = vpop.f32.mrb[0].mxu0
        %v2199 = vpop.f32.mrb[0].mxu0
        %v2200 = vadd.f32 %v388, %v2199
        %v2201 = vpop.f32.mrb[0].mxu0
        %2202 = vmatprep.mubr.bf16.mxu0 %v1958
        %2203 = vmatmul.mubr.bf16.gmra.mrb[0].mxu0 %v1957
        %v2204 = vpop.f32.mrb[0].mxu0
        %v2205 = vadd.f32 %v388, %v2204
        %v2206 = vpop.f32.mrb[0].mxu0
        %v2207 = vpop.f32.mrb[0].mxu0
        %v2208 = vadd.f32 %v388, %v2207
        %v2209 = vpop.f32.mrb[0].mxu0
        %2210 = vmatprep.mubr.bf16.mxu0 %v1963
        %2211 = vmatmul.mubr.bf16.gmra.mrb[0].mxu0 %v1962
        %v2212 = vpop.f32.mrb[0].mxu0
        %v2213 = vadd.f32 %v388, %v2212
        %v2214 = vpop.f32.mrb[0].mxu0
        %v2215 = vpop.f32.mrb[0].mxu0
        %v2216 = vadd.f32 %v388, %v2215
        %v2217 = vpop.f32.mrb[0].mxu0
        %2218 = vmatprep.mubr.bf16.mxu0 %v1968
        %2219 = vmatmul.mubr.bf16.gmra.mrb[0].mxu0 %v1967
        %v2220 = vpop.f32.mrb[0].mxu0
        %v2221 = vadd.f32 %v388, %v2220
        %v2222 = vpop.f32.mrb[0].mxu0
        %v2223 = vpop.f32.mrb[0].mxu0
        %v2224 = vadd.f32 %v388, %v2223
        %v2225 = vpop.f32.mrb[0].mxu0
        %2226 = vmatprep.mubr.bf16.mxu0 %v1973
        %2227 = vmatmul.mubr.bf16.gmra.mrb[0].mxu0 %v1972
        %v2228 = vpop.f32.mrb[0].mxu0
        %v2229 = vadd.f32 %v388, %v2228
        %v2230 = vpop.f32.mrb[0].mxu0
        %v2231 = vpop.f32.mrb[0].mxu0
        %v2232 = vadd.f32 %v388, %v2231
        %v2233 = vpop.f32.mrb[0].mxu0
        %2234 = vmatprep.mubr.bf16.mxu0 %v1978
        %2235 = vmatmul.mubr.bf16.gmra.mrb[0].mxu0 %v1977
        %v2236 = vpop.f32.mrb[0].mxu0
        %v2237 = vadd.f32 %v388, %v2236
        %v2238 = vpop.f32.mrb[0].mxu0
        %v2239 = vpop.f32.mrb[0].mxu0
        %v2240 = vadd.f32 %v388, %v2239
        %v2241 = vpop.f32.mrb[0].mxu0
        %2242 = vmatprep.mubr.bf16.mxu0 %v1983
        %2243 = vmatmul.mubr.bf16.gmra.mrb[0].mxu0 %v1982
        %v2244 = vpop.f32.mrb[0].mxu0
        %v2245 = vadd.f32 %v388, %v2244
        %v2246 = vpop.f32.mrb[0].mxu0
        %v2247 = vpop.f32.mrb[0].mxu0
        %v2248 = vadd.f32 %v388, %v2247
        %v2249 = vpop.f32.mrb[0].mxu0
        %2250 = vmatprep.mubr.bf16.mxu0 %v1988
        %2251 = vmatmul.mubr.bf16.gmra.mrb[0].mxu0 %v1987
        %v2252 = vpop.f32.mrb[0].mxu0
        %v2253 = vadd.f32 %v388, %v2252
        %v2254 = vpop.f32.mrb[0].mxu0
        %v2255 = vpop.f32.mrb[0].mxu0
        %v2256 = vadd.f32 %v388, %v2255
        %v2257 = vpop.f32.mrb[0].mxu0
        %2258 = vmatprep.mubr.bf16.mxu0 %v1993
        %2259 = vmatmul.mubr.bf16.gmra.mrb[0].mxu0 %v1992
        %v2260 = vpop.f32.mrb[0].mxu0
        %v2261 = vadd.f32 %v388, %v2260
        %v2262 = vpop.f32.mrb[0].mxu0
        %v2263 = vpop.f32.mrb[0].mxu0
        %v2264 = vadd.f32 %v388, %v2263
        %v2265 = vpop.f32.mrb[0].mxu0
        %2266 = vmatprep.mubr.bf16.mxu0 %v1998
        %2267 = vmatmul.mubr.bf16.gmra.mrb[0].mxu0 %v1997
        %v2268 = vpop.f32.mrb[0].mxu0
        %v2269 = vadd.f32 %v388, %v2268
        %v2270 = vpop.f32.mrb[0].mxu0
        %v2271 = vpop.f32.mrb[0].mxu0
        %v2272 = vadd.f32 %v388, %v2271
        %v2273 = vpop.f32.mrb[0].mxu0
        %2274 = vdwg.mxu0
        %2275 = vmatprep.subr.bf16.mxu0 0
        %2276 = vmatpush1.bf16.msra.mxu0 %v950
        %2277 = vmatprep.subr.bf16.mxu0 0
        %2278 = vmatpush1.bf16.msra.mxu0 %v951
        %2279 = vmatprep.subr.bf16.mxu0 0
        %2280 = vmatpush1.bf16.msra.mxu0 %v952
        %2281 = vmatprep.subr.bf16.mxu0 0
        %2282 = vmatpush1.bf16.msra.mxu0 %v953
        %2283 = vmatprep.subr.bf16.mxu0 0
        %2284 = vmatpush1.bf16.msra.mxu0 %v954
        %2285 = vmatprep.subr.bf16.mxu0 0
        %2286 = vmatpush1.bf16.msra.mxu0 %v955
        %2287 = vmatprep.subr.bf16.mxu0 0
        %2288 = vmatpush1.bf16.msra.mxu0 %v956
        %2289 = vmatprep.subr.bf16.mxu0 0
        %2290 = vmatpush1.bf16.msra.mxu0 %v957
        %2291 = vmatprep.subr.bf16.mxu0 0
        %2292 = vmatpush1.bf16.msra.mxu0 %v958
        %2293 = vmatprep.subr.bf16.mxu0 0
        %2294 = vmatpush1.bf16.msra.mxu0 %v959
        %2295 = vmatprep.subr.bf16.mxu0 0
        %2296 = vmatpush1.bf16.msra.mxu0 %v960
        %2297 = vmatprep.subr.bf16.mxu0 0
        %2298 = vmatpush1.bf16.msra.mxu0 %v961
        %2299 = vmatprep.subr.bf16.mxu0 0
        %2300 = vmatpush1.bf16.msra.mxu0 %v962
        %2301 = vmatprep.subr.bf16.mxu0 0
        %2302 = vmatpush1.bf16.msra.mxu0 %v963
        %2303 = vmatprep.subr.bf16.mxu0 0
        %2304 = vmatpush1.bf16.msra.mxu0 %v964
        %2305 = vmatprep.subr.bf16.mxu0 0
        %2306 = vmatpush1.bf16.msra.mxu0 %v965
        %2307 = vmatprep.mubr.bf16.mxu0 %v1925
        %2308 = vmatmul.mubr.bf16.gmra.mrb[0].mxu0 %v1924
        %v2309 = vpop.f32.mrb[0].mxu0
        %v2310 = vadd.f32 %v2149, %v2309
        %v2311 = vpop.f32.mrb[0].mxu0
        %v2312 = vpop.f32.mrb[0].mxu0
        %v2313 = vadd.f32 %v2152, %v2312
        %v2314 = vpop.f32.mrb[0].mxu0
        %2315 = vmatprep.mubr.bf16.mxu0 %v1930
        %2316 = vmatmul.mubr.bf16.gmra.mrb[0].mxu0 %v1929
        %v2317 = vpop.f32.mrb[0].mxu0
        %v2318 = vadd.f32 %v2157, %v2317
        %v2319 = vpop.f32.mrb[0].mxu0
        %v2320 = vpop.f32.mrb[0].mxu0
        %v2321 = vadd.f32 %v2160, %v2320
        %v2322 = vpop.f32.mrb[0].mxu0
        %2323 = vmatprep.mubr.bf16.mxu0 %v1935
        %2324 = vmatmul.mubr.bf16.gmra.mrb[0].mxu0 %v1934
        %v2325 = vpop.f32.mrb[0].mxu0
        %v2326 = vadd.f32 %v2165, %v2325
        %v2327 = vpop.f32.mrb[0].mxu0
        %v2328 = vpop.f32.mrb[0].mxu0
        %v2329 = vadd.f32 %v2168, %v2328
        %v2330 = vpop.f32.mrb[0].mxu0
        %2331 = vmatprep.mubr.bf16.mxu0 %v1940
        %2332 = vmatmul.mubr.bf16.gmra.mrb[0].mxu0 %v1939
        %v2333 = vpop.f32.mrb[0].mxu0
        %v2334 = vadd.f32 %v2173, %v2333
        %v2335 = vpop.f32.mrb[0].mxu0
        %v2336 = vpop.f32.mrb[0].mxu0
        %v2337 = vadd.f32 %v2176, %v2336
        %v2338 = vpop.f32.mrb[0].mxu0
        %2339 = vmatprep.mubr.bf16.mxu0 %v1945
        %2340 = vmatmul.mubr.bf16.gmra.mrb[0].mxu0 %v1944
        %v2341 = vpop.f32.mrb[0].mxu0
        %v2342 = vadd.f32 %v2181, %v2341
        %v2343 = vpop.f32.mrb[0].mxu0
        %v2344 = vpop.f32.mrb[0].mxu0
        %v2345 = vadd.f32 %v2184, %v2344
        %v2346 = vpop.f32.mrb[0].mxu0
        %2347 = vmatprep.mubr.bf16.mxu0 %v1950
        %2348 = vmatmul.mubr.bf16.gmra.mrb[0].mxu0 %v1949
        %v2349 = vpop.f32.mrb[0].mxu0
        %v2350 = vadd.f32 %v2189, %v2349
        %v2351 = vpop.f32.mrb[0].mxu0
        %v2352 = vpop.f32.mrb[0].mxu0
        %v2353 = vadd.f32 %v2192, %v2352
        %v2354 = vpop.f32.mrb[0].mxu0
        %2355 = vmatprep.mubr.bf16.mxu0 %v1955
        %2356 = vmatmul.mubr.bf16.gmra.mrb[0].mxu0 %v1954
        %v2357 = vpop.f32.mrb[0].mxu0
        %v2358 = vadd.f32 %v2197, %v2357
        %v2359 = vpop.f32.mrb[0].mxu0
        %v2360 = vpop.f32.mrb[0].mxu0
        %v2361 = vadd.f32 %v2200, %v2360
        %v2362 = vpop.f32.mrb[0].mxu0
        %2363 = vmatprep.mubr.bf16.mxu0 %v1960
        %2364 = vmatmul.mubr.bf16.gmra.mrb[0].mxu0 %v1959
        %v2365 = vpop.f32.mrb[0].mxu0
        %v2366 = vadd.f32 %v2205, %v2365
        %v2367 = vpop.f32.mrb[0].mxu0
        %v2368 = vpop.f32.mrb[0].mxu0
        %v2369 = vadd.f32 %v2208, %v2368
        %v2370 = vpop.f32.mrb[0].mxu0
        %2371 = vmatprep.mubr.bf16.mxu0 %v1965
        %2372 = vmatmul.mubr.bf16.gmra.mrb[0].mxu0 %v1964
        %v2373 = vpop.f32.mrb[0].mxu0
        %v2374 = vadd.f32 %v2213, %v2373
        %v2375 = vpop.f32.mrb[0].mxu0
        %v2376 = vpop.f32.mrb[0].mxu0
        %v2377 = vadd.f32 %v2216, %v2376
        %v2378 = vpop.f32.mrb[0].mxu0
        %2379 = vmatprep.mubr.bf16.mxu0 %v1970
        %2380 = vmatmul.mubr.bf16.gmra.mrb[0].mxu0 %v1969
        %v2381 = vpop.f32.mrb[0].mxu0
        %v2382 = vadd.f32 %v2221, %v2381
        %v2383 = vpop.f32.mrb[0].mxu0
        %v2384 = vpop.f32.mrb[0].mxu0
        %v2385 = vadd.f32 %v2224, %v2384
        %v2386 = vpop.f32.mrb[0].mxu0
        %2387 = vmatprep.mubr.bf16.mxu0 %v1975
        %2388 = vmatmul.mubr.bf16.gmra.mrb[0].mxu0 %v1974
        %v2389 = vpop.f32.mrb[0].mxu0
        %v2390 = vadd.f32 %v2229, %v2389
        %v2391 = vpop.f32.mrb[0].mxu0
        %v2392 = vpop.f32.mrb[0].mxu0
        %v2393 = vadd.f32 %v2232, %v2392
        %v2394 = vpop.f32.mrb[0].mxu0
        %2395 = vmatprep.mubr.bf16.mxu0 %v1980
        %2396 = vmatmul.mubr.bf16.gmra.mrb[0].mxu0 %v1979
        %v2397 = vpop.f32.mrb[0].mxu0
        %v2398 = vadd.f32 %v2237, %v2397
        %v2399 = vpop.f32.mrb[0].mxu0
        %v2400 = vpop.f32.mrb[0].mxu0
        %v2401 = vadd.f32 %v2240, %v2400
        %v2402 = vpop.f32.mrb[0].mxu0
        %2403 = vmatprep.mubr.bf16.mxu0 %v1985
        %2404 = vmatmul.mubr.bf16.gmra.mrb[0].mxu0 %v1984
        %v2405 = vpop.f32.mrb[0].mxu0
        %v2406 = vadd.f32 %v2245, %v2405
        %v2407 = vpop.f32.mrb[0].mxu0
        %v2408 = vpop.f32.mrb[0].mxu0
        %v2409 = vadd.f32 %v2248, %v2408
        %v2410 = vpop.f32.mrb[0].mxu0
        %2411 = vmatprep.mubr.bf16.mxu0 %v1990
        %2412 = vmatmul.mubr.bf16.gmra.mrb[0].mxu0 %v1989
        %v2413 = vpop.f32.mrb[0].mxu0
        %v2414 = vadd.f32 %v2253, %v2413
        %v2415 = vpop.f32.mrb[0].mxu0
        %v2416 = vpop.f32.mrb[0].mxu0
        %v2417 = vadd.f32 %v2256, %v2416
        %v2418 = vpop.f32.mrb[0].mxu0
        %2419 = vmatprep.mubr.bf16.mxu0 %v1995
        %2420 = vmatmul.mubr.bf16.gmra.mrb[0].mxu0 %v1994
        %v2421 = vpop.f32.mrb[0].mxu0
        %v2422 = vadd.f32 %v2261, %v2421
        %v2423 = vpop.f32.mrb[0].mxu0
        %v2424 = vpop.f32.mrb[0].mxu0
        %v2425 = vadd.f32 %v2264, %v2424
        %v2426 = vpop.f32.mrb[0].mxu0
        %2427 = vmatprep.mubr.bf16.mxu0 %v2000
        %2428 = vmatmul.mubr.bf16.gmra.mrb[0].mxu0 %v1999
        %v2429 = vpop.f32.mrb[0].mxu0
        %v2430 = vadd.f32 %v2269, %v2429
        %v2431 = vpop.f32.mrb[0].mxu0
        %v2432 = vpop.f32.mrb[0].mxu0
        %v2433 = vadd.f32 %v2272, %v2432
        %v2434 = vpop.f32.mrb[0].mxu0
        %2435 = vdwg.mxu0
        %2436 = vmatprep.subr.bf16.mxu0 0
        %2437 = vmatpush1.bf16.msra.mxu0 %v966
        %2438 = vmatprep.subr.bf16.mxu0 0
        %2439 = vmatpush1.bf16.msra.mxu0 %v967
        %2440 = vmatprep.subr.bf16.mxu0 0
        %2441 = vmatpush1.bf16.msra.mxu0 %v968
        %2442 = vmatprep.subr.bf16.mxu0 0
        %2443 = vmatpush1.bf16.msra.mxu0 %v969
        %2444 = vmatprep.subr.bf16.mxu0 0
        %2445 = vmatpush1.bf16.msra.mxu0 0
        %2446 = vmatprep.subr.bf16.mxu0 0
        %2447 = vmatpush1.bf16.msra.mxu0 0
        %2448 = vmatprep.subr.bf16.mxu0 0
        %2449 = vmatpush1.bf16.msra.mxu0 0
        %2450 = vmatprep.subr.bf16.mxu0 0
        %2451 = vmatpush1.bf16.msra.mxu0 0
        %2452 = vmatprep.subr.bf16.mxu0 0
        %2453 = vmatpush1.bf16.msra.mxu0 0
        %2454 = vmatprep.subr.bf16.mxu0 0
        %2455 = vmatpush1.bf16.msra.mxu0 0
        %2456 = vmatprep.subr.bf16.mxu0 0
        %2457 = vmatpush1.bf16.msra.mxu0 0
        %2458 = vmatprep.subr.bf16.mxu0 0
        %2459 = vmatpush1.bf16.msra.mxu0 0
        %2460 = vmatprep.subr.bf16.mxu0 0
        %2461 = vmatpush1.bf16.msra.mxu0 0
        %2462 = vmatprep.subr.bf16.mxu0 0
        %2463 = vmatpush1.bf16.msra.mxu0 0
        %2464 = vmatprep.subr.bf16.mxu0 0
        %2465 = vmatpush1.bf16.msra.mxu0 0
        %2466 = vmatprep.subr.bf16.mxu0 0
        %2467 = vmatpush1.bf16.msra.mxu0 0
        %2468 = vmatprep.mubr.bf16.mxu0 0
        %2469 = vmatmul.mubr.bf16.gmra.mrb[0].mxu0 %v2067
        %v2470 = vpop.f32.mrb[0].mxu0
        %v2471 = vadd.f32 %v2310, %v2470
        %v2472 = vpop.f32.mrb[0].mxu0
        %v2473 = vpop.f32.mrb[0].mxu0
        %v2474 = vadd.f32 %v2313, %v2473
        %v2475 = vpop.f32.mrb[0].mxu0
        %2476 = vmatprep.mubr.bf16.mxu0 0
        %2477 = vmatmul.mubr.bf16.gmra.mrb[0].mxu0 %v2070
        %v2478 = vpop.f32.mrb[0].mxu0
        %v2479 = vadd.f32 %v2318, %v2478
        %v2480 = vpop.f32.mrb[0].mxu0
        %v2481 = vpop.f32.mrb[0].mxu0
        %v2482 = vadd.f32 %v2321, %v2481
        %v2483 = vpop.f32.mrb[0].mxu0
        %2484 = vmatprep.mubr.bf16.mxu0 0
        %2485 = vmatmul.mubr.bf16.gmra.mrb[0].mxu0 %v2073
        %v2486 = vpop.f32.mrb[0].mxu0
        %v2487 = vadd.f32 %v2326, %v2486
        %v2488 = vpop.f32.mrb[0].mxu0
        %v2489 = vpop.f32.mrb[0].mxu0
        %v2490 = vadd.f32 %v2329, %v2489
        %v2491 = vpop.f32.mrb[0].mxu0
        %2492 = vmatprep.mubr.bf16.mxu0 0
        %2493 = vmatmul.mubr.bf16.gmra.mrb[0].mxu0 %v2076
        %v2494 = vpop.f32.mrb[0].mxu0
        %v2495 = vadd.f32 %v2334, %v2494
        %v2496 = vpop.f32.mrb[0].mxu0
        %v2497 = vpop.f32.mrb[0].mxu0
        %v2498 = vadd.f32 %v2337, %v2497
        %v2499 = vpop.f32.mrb[0].mxu0
        %2500 = vmatprep.mubr.bf16.mxu0 0
        %2501 = vmatmul.mubr.bf16.gmra.mrb[0].mxu0 %v2079
        %v2502 = vpop.f32.mrb[0].mxu0
        %v2503 = vadd.f32 %v2342, %v2502
        %v2504 = vpop.f32.mrb[0].mxu0
        %v2505 = vpop.f32.mrb[0].mxu0
        %v2506 = vadd.f32 %v2345, %v2505
        %v2507 = vpop.f32.mrb[0].mxu0
        %2508 = vmatprep.mubr.bf16.mxu0 0
        %2509 = vmatmul.mubr.bf16.gmra.mrb[0].mxu0 %v2082
        %v2510 = vpop.f32.mrb[0].mxu0
        %v2511 = vadd.f32 %v2350, %v2510
        %v2512 = vpop.f32.mrb[0].mxu0
        %v2513 = vpop.f32.mrb[0].mxu0
        %v2514 = vadd.f32 %v2353, %v2513
        %v2515 = vpop.f32.mrb[0].mxu0
        %2516 = vmatprep.mubr.bf16.mxu0 0
        %2517 = vmatmul.mubr.bf16.gmra.mrb[0].mxu0 %v2085
        %v2518 = vpop.f32.mrb[0].mxu0
        %v2519 = vadd.f32 %v2358, %v2518
        %v2520 = vpop.f32.mrb[0].mxu0
        %v2521 = vpop.f32.mrb[0].mxu0
        %v2522 = vadd.f32 %v2361, %v2521
        %v2523 = vpop.f32.mrb[0].mxu0
        %2524 = vmatprep.mubr.bf16.mxu0 0
        %2525 = vmatmul.mubr.bf16.gmra.mrb[0].mxu0 %v2088
        %v2526 = vpop.f32.mrb[0].mxu0
        %v2527 = vadd.f32 %v2366, %v2526
        %v2528 = vpop.f32.mrb[0].mxu0
        %v2529 = vpop.f32.mrb[0].mxu0
        %v2530 = vadd.f32 %v2369, %v2529
        %v2531 = vpop.f32.mrb[0].mxu0
        %2532 = vmatprep.mubr.bf16.mxu0 0
        %2533 = vmatmul.mubr.bf16.gmra.mrb[0].mxu0 %v2091
        %v2534 = vpop.f32.mrb[0].mxu0
        %v2535 = vadd.f32 %v2374, %v2534
        %v2536 = vpop.f32.mrb[0].mxu0
        %v2537 = vpop.f32.mrb[0].mxu0
        %v2538 = vadd.f32 %v2377, %v2537
        %v2539 = vpop.f32.mrb[0].mxu0
        %2540 = vmatprep.mubr.bf16.mxu0 0
        %2541 = vmatmul.mubr.bf16.gmra.mrb[0].mxu0 %v2094
        %v2542 = vpop.f32.mrb[0].mxu0
        %v2543 = vadd.f32 %v2382, %v2542
        %v2544 = vpop.f32.mrb[0].mxu0
        %v2545 = vpop.f32.mrb[0].mxu0
        %v2546 = vadd.f32 %v2385, %v2545
        %v2547 = vpop.f32.mrb[0].mxu0
        %2548 = vmatprep.mubr.bf16.mxu0 0
        %2549 = vmatmul.mubr.bf16.gmra.mrb[0].mxu0 %v2097
        %v2550 = vpop.f32.mrb[0].mxu0
        %v2551 = vadd.f32 %v2390, %v2550
        %v2552 = vpop.f32.mrb[0].mxu0
        %v2553 = vpop.f32.mrb[0].mxu0
        %v2554 = vadd.f32 %v2393, %v2553
        %v2555 = vpop.f32.mrb[0].mxu0
        %2556 = vmatprep.mubr.bf16.mxu0 0
        %2557 = vmatmul.mubr.bf16.gmra.mrb[0].mxu0 %v2100
        %v2558 = vpop.f32.mrb[0].mxu0
        %v2559 = vadd.f32 %v2398, %v2558
        %v2560 = vpop.f32.mrb[0].mxu0
        %v2561 = vpop.f32.mrb[0].mxu0
        %v2562 = vadd.f32 %v2401, %v2561
        %v2563 = vpop.f32.mrb[0].mxu0
        %2564 = vmatprep.mubr.bf16.mxu0 0
        %2565 = vmatmul.mubr.bf16.gmra.mrb[0].mxu0 %v2103
        %v2566 = vpop.f32.mrb[0].mxu0
        %v2567 = vadd.f32 %v2406, %v2566
        %v2568 = vpop.f32.mrb[0].mxu0
        %v2569 = vpop.f32.mrb[0].mxu0
        %v2570 = vadd.f32 %v2409, %v2569
        %v2571 = vpop.f32.mrb[0].mxu0
        %2572 = vmatprep.mubr.bf16.mxu0 0
        %2573 = vmatmul.mubr.bf16.gmra.mrb[0].mxu0 %v2106
        %v2574 = vpop.f32.mrb[0].mxu0
        %v2575 = vadd.f32 %v2414, %v2574
        %v2576 = vpop.f32.mrb[0].mxu0
        %v2577 = vpop.f32.mrb[0].mxu0
        %v2578 = vadd.f32 %v2417, %v2577
        %v2579 = vpop.f32.mrb[0].mxu0
        %2580 = vmatprep.mubr.bf16.mxu0 0
        %2581 = vmatmul.mubr.bf16.gmra.mrb[0].mxu0 %v2109
        %v2582 = vpop.f32.mrb[0].mxu0
        %v2583 = vadd.f32 %v2422, %v2582
        %v2584 = vpop.f32.mrb[0].mxu0
        %v2585 = vpop.f32.mrb[0].mxu0
        %v2586 = vadd.f32 %v2425, %v2585
        %v2587 = vpop.f32.mrb[0].mxu0
        %2588 = vmatprep.mubr.bf16.mxu0 0
        %2589 = vmatmul.mubr.bf16.gmra.mrb[0].mxu0 %v2112
        %v2590 = vpop.f32.mrb[0].mxu0
        %v2591 = vadd.f32 %v2430, %v2590
        %v2592 = vpop.f32.mrb[0].mxu0
        %v2593 = vpop.f32.mrb[0].mxu0
        %v2594 = vadd.f32 %v2433, %v2593
        %v2595 = vpop.f32.mrb[0].mxu0
        %2596 = vdwg.mxu0
        %v2597 = vmax.f32 %v2471, 0.0
        %v2598 = vmax.f32 %v2474, 0.0
        %v2599 = vmax.f32 %v2479, 0.0
        %v2600 = vmax.f32 %v2482, 0.0
        %v2601 = vmax.f32 %v2487, 0.0
        %v2602 = vmax.f32 %v2490, 0.0
        %v2603 = vmax.f32 %v2495, 0.0
        %v2604 = vmax.f32 %v2498, 0.0
        %v2605 = vmax.f32 %v2503, 0.0
        %v2606 = vmax.f32 %v2506, 0.0
        %v2607 = vmax.f32 %v2511, 0.0
        %v2608 = vmax.f32 %v2514, 0.0
        %v2609 = vmax.f32 %v2519, 0.0
        %v2610 = vmax.f32 %v2522, 0.0
        %v2611 = vmax.f32 %v2527, 0.0
        %v2612 = vmax.f32 %v2530, 0.0
        %v2613 = vmax.f32 %v2535, 0.0
        %v2614 = vmax.f32 %v2538, 0.0
        %v2615 = vmax.f32 %v2543, 0.0
        %v2616 = vmax.f32 %v2546, 0.0
        %v2617 = vmax.f32 %v2551, 0.0
        %v2618 = vmax.f32 %v2554, 0.0
        %v2619 = vmax.f32 %v2559, 0.0
        %v2620 = vmax.f32 %v2562, 0.0
        %v2621 = vmax.f32 %v2567, 0.0
        %v2622 = vmax.f32 %v2570, 0.0
        %v2623 = vmax.f32 %v2575, 0.0
        %v2624 = vmax.f32 %v2578, 0.0
        %v2625 = vmax.f32 %v2583, 0.0
        %v2626 = vmax.f32 %v2586, 0.0
        %v2627 = vmax.f32 %v2591, 0.0
        %v2628 = vmax.f32 %v2594, 0.0
        %v2629 = vsub.f32 %v1538, %v2597
        %v2630 = vsub.f32 %v1539, %v2598
        %v2631 = vsub.f32 %v1540, %v2599
        %v2632 = vsub.f32 %v1541, %v2600
        %v2633 = vsub.f32 %v1542, %v2601
        %v2634 = vsub.f32 %v1543, %v2602
        %v2635 = vsub.f32 %v1544, %v2603
        %v2636 = vsub.f32 %v1545, %v2604
        %v2637 = vsub.f32 %v1546, %v2605
        %v2638 = vsub.f32 %v1547, %v2606
        %v2639 = vsub.f32 %v1548, %v2607
        %v2640 = vsub.f32 %v1549, %v2608
        %v2641 = vsub.f32 %v1550, %v2609
        %v2642 = vsub.f32 %v1551, %v2610
        %v2643 = vsub.f32 %v1552, %v2611
        %v2644 = vsub.f32 %v1553, %v2612
        %v2645 = vsub.f32 %v1554, %v2613
        %v2646 = vsub.f32 %v1555, %v2614
        %v2647 = vsub.f32 %v1556, %v2615
        %v2648 = vsub.f32 %v1557, %v2616
        %v2649 = vsub.f32 %v1558, %v2617
        %v2650 = vsub.f32 %v1559, %v2618
        %v2651 = vsub.f32 %v1560, %v2619
        %v2652 = vsub.f32 %v1561, %v2620
        %v2653 = vsub.f32 %v1562, %v2621
        %v2654 = vsub.f32 %v1563, %v2622
        %v2655 = vsub.f32 %v1564, %v2623
        %v2656 = vsub.f32 %v1565, %v2624
        %v2657 = vsub.f32 %v1566, %v2625
        %v2658 = vsub.f32 %v1567, %v2626
        %v2659 = vsub.f32 %v1568, %v2627
        %v2660 = vsub.f32 %v1569, %v2628
        %v2661 = vmul.f32 %v2629, %v2629
        %v2662 = vmul.f32 %v2630, %v2630
        %v2663 = vmul.f32 %v2631, %v2631
        %v2664 = vmul.f32 %v2632, %v2632
        %v2665 = vmul.f32 %v2633, %v2633
        %v2666 = vmul.f32 %v2634, %v2634
        %v2667 = vmul.f32 %v2635, %v2635
        %v2668 = vmul.f32 %v2636, %v2636
        %v2669 = vmul.f32 %v2637, %v2637
        %v2670 = vmul.f32 %v2638, %v2638
        %v2671 = vmul.f32 %v2639, %v2639
        %v2672 = vmul.f32 %v2640, %v2640
        %v2673 = vmul.f32 %v2641, %v2641
        %v2674 = vmul.f32 %v2642, %v2642
        %v2675 = vmul.f32 %v2643, %v2643
        %v2676 = vmul.f32 %v2644, %v2644
        %v2677 = vmul.f32 %v2645, %v2645
        %v2678 = vmul.f32 %v2646, %v2646
        %v2679 = vmul.f32 %v2647, %v2647
        %v2680 = vmul.f32 %v2648, %v2648
        %v2681 = vmul.f32 %v2649, %v2649
        %v2682 = vmul.f32 %v2650, %v2650
        %v2683 = vmul.f32 %v2651, %v2651
        %v2684 = vmul.f32 %v2652, %v2652
        %v2685 = vmul.f32 %v2653, %v2653
        %v2686 = vmul.f32 %v2654, %v2654
        %v2687 = vmul.f32 %v2655, %v2655
        %v2688 = vmul.f32 %v2656, %v2656
        %v2689 = vmul.f32 %v2657, %v2657
        %v2690 = vmul.f32 %v2658, %v2658
        %v2691 = vmul.f32 %v2659, %v2659
        %v2692 = vmul.f32 %v2660, %v2660
        %v2693 = vsel %vm1006, %v2661, 0.0
        %v2694 = vsel %vm1006, %v2662, 0.0
        %v2695 = vadd.f32 %v2693, %v2694
        %v2696 = vsel %vm1006, %v2663, 0.0
        %v2697 = vadd.f32 %v2695, %v2696
        %v2698 = vsel %vm1006, %v2664, 0.0
        %v2699 = vadd.f32 %v2697, %v2698
        %v2700 = vsel %vm1006, %v2665, 0.0
        %v2701 = vadd.f32 %v2699, %v2700
        %v2702 = vsel %vm1006, %v2666, 0.0
        %v2703 = vadd.f32 %v2701, %v2702
        %v2704 = vsel %vm1006, %v2667, 0.0
        %v2705 = vadd.f32 %v2703, %v2704
        %v2706 = vsel %vm1006, %v2668, 0.0
        %v2707 = vadd.f32 %v2705, %v2706
        %v2708 = vsel %vm1006, %v2669, 0.0
        %v2709 = vadd.f32 %v2707, %v2708
        %v2710 = vsel %vm1006, %v2670, 0.0
        %v2711 = vadd.f32 %v2709, %v2710
        %v2712 = vsel %vm1006, %v2671, 0.0
        %v2713 = vadd.f32 %v2711, %v2712
        %v2714 = vsel %vm1006, %v2672, 0.0
        %v2715 = vadd.f32 %v2713, %v2714
        %v2716 = vsel %vm1006, %v2673, 0.0
        %v2717 = vadd.f32 %v2715, %v2716
        %v2718 = vsel %vm1006, %v2674, 0.0
        %v2719 = vadd.f32 %v2717, %v2718
        %v2720 = vsel %vm1006, %v2675, 0.0
        %v2721 = vadd.f32 %v2719, %v2720
        %v2722 = vsel %vm1006, %v2676, 0.0
        %v2723 = vadd.f32 %v2721, %v2722
        %v2724 = vsel %vm1006, %v2677, 0.0
        %v2725 = vadd.f32 %v2723, %v2724
        %v2726 = vsel %vm1006, %v2678, 0.0
        %v2727 = vadd.f32 %v2725, %v2726
        %v2728 = vsel %vm1006, %v2679, 0.0
        %v2729 = vadd.f32 %v2727, %v2728
        %v2730 = vsel %vm1006, %v2680, 0.0
        %v2731 = vadd.f32 %v2729, %v2730
        %v2732 = vsel %vm1006, %v2681, 0.0
        %v2733 = vadd.f32 %v2731, %v2732
        %v2734 = vsel %vm1006, %v2682, 0.0
        %v2735 = vadd.f32 %v2733, %v2734
        %v2736 = vsel %vm1006, %v2683, 0.0
        %v2737 = vadd.f32 %v2735, %v2736
        %v2738 = vsel %vm1006, %v2684, 0.0
        %v2739 = vadd.f32 %v2737, %v2738
        %v2740 = vsel %vm1006, %v2685, 0.0
        %v2741 = vadd.f32 %v2739, %v2740
        %v2742 = vsel %vm1006, %v2686, 0.0
        %v2743 = vadd.f32 %v2741, %v2742
        %v2744 = vsel %vm1006, %v2687, 0.0
        %v2745 = vadd.f32 %v2743, %v2744
        %v2746 = vsel %vm1006, %v2688, 0.0
        %v2747 = vadd.f32 %v2745, %v2746
        %v2748 = vsel %vm1006, %v2689, 0.0
        %v2749 = vadd.f32 %v2747, %v2748
        %v2750 = vsel %vm1006, %v2690, 0.0
        %v2751 = vadd.f32 %v2749, %v2750
        %v2752 = vsel %vm1006, %v2691, 0.0
        %v2753 = vadd.f32 %v2751, %v2752
        %v2754 = vsel %vm1006, %v2692, 0.0
        %v2755 = vadd.f32 %v2753, %v2754
        %2756 = vadd.xlane.f32.xlu0 %v2755
        %v2757 = vpop.xlane.xlu0 %2756
        %v2758 = vrot.slane %v2757, 4
        %v2759 = vadd.f32 %v2757, %v2758
        %v2760 = vrot.slane %v2759, 2
        %v2761 = vadd.f32 %v2759, %v2760
        %v2762 = vrot.slane %v2761, 1
        %v2763 = vadd.f32 %v2761, %v2762
        %s2764 = vtos %v2763
        %v2765 = vstv %s2764
        %p2766 = scmp.eq.s32.totalorder %s16, 0
        // Predicated region
        $region37: #{l1_plus_perceptual_forward.5} parent=35 // pred_check
          %p2767 = pneg %p2766
        $region38: #{l1_plus_perceptual_forward.5} parent=35 // pred_check_branch
          %2769 = sbr.rel (%p2767) target = $region40
        $region39: #{l1_plus_perceptual_forward.5} parent=35 // pred_region
          %vm2770 = vcmask 0
          %2771 = vst.msk [vmem:[#allocation2] sm:$0x1] %vm2770, 0.0
        $region40: #{l1_plus_perceptual_forward.5} parent=35 // pred_fallthru
          _
        %v2772 = vld [vmem:[#allocation2] sm:$0x1]
        %v2773 = vadd.f32 %v2772, %v2765
        %vm2774 = vcmask 0
        %2775 = vst.msk [vmem:[#allocation2] sm:$0x1] %vm2774, %v2773
        // Predicated region
        $region41: #{l1_plus_perceptual_forward.5} parent=35 // pred_check
          %p2776 = pneg %p123
        $region42: #{l1_plus_perceptual_forward.5} parent=35 // pred_check_branch
          %2778 = sbr.rel (%p2776) target = $region44
        $region43: #{l1_plus_perceptual_forward.5} parent=35 // pred_region
          %s2780 = ssub.s32 16, 16
          %2781 = vsyncadd [#allocation3], %s2780
          %s2783 = sshll.u32 [#allocation2], 4
          %s2784 = int_to_ptr.vmem [resolvable:$true] %s2783
          %2786 = dma.vmem_to_hbm [thread:$0]  %s2784, 16, %s4, [#allocation3]
        $region44: #{l1_plus_perceptual_forward.5} parent=35 // pred_fallthru
          _
        // Predicated region
        $region45: #{l1_plus_perceptual_forward.5} parent=35 // pred_check
          %p2787 = pneg %p123
        $region46: #{l1_plus_perceptual_forward.5} parent=35 // pred_check_branch
          %2789 = sbr.rel (%p2787) target = $region48
        $region47: #{l1_plus_perceptual_forward.5} parent=35 // pred_region
          %2790 = dma.done [#allocation3], 16
        $region48: #{l1_plus_perceptual_forward.5} parent=35 // pred_fallthru
          _
      $region36: #{l1_plus_perceptual_forward.5} parent=5 // pred_fallthru
        _
      %p2791 = scmp.le.s32.totalorder 2, %s11
      // Predicated region
      $region49: #{l1_plus_perceptual_forward.5} parent=5 // pred_check
        %p2792 = pneg %p2791
      $region50: #{l1_plus_perceptual_forward.5} parent=5 // pred_check_branch
        %2794 = sbr.rel (%p2792) target = $region52
      $region51: #{l1_plus_perceptual_forward.5} parent=5 // pred_region
        %s2795 = ssub.s32 %s11, 2
      $region52: #{l1_plus_perceptual_forward.5} parent=5 // pred_fallthru
        _
    $region6: #{l1_plus_perceptual_forward.5} parent=1 // loop_footer
      %s15 = sadd.s32 1, %s11
    $region7: #{l1_plus_perceptual_forward.5} parent=1 // loop_footer_branch
      %10 = sbr.rel target = $region3
    $region8: #{l1_plus_perceptual_forward.5} parent=1 // loop_exit
      _
    %2796 = vsyncpa [#allocation3], 1
    %s2797 = scalar_lea.sflag [#allocation3], 1
    %2798 = vsyncpa %s2797, 1

</llo_original>
